<compile_context>
chip_gen: v7x
topology: tpu7x:2x2x1
jax: 0.10.0
libtpu: 0.0.40
codegen_flags: <defaults>
</compile_context>

<pallas_src>
import jax
import jax.numpy as jnp
from jax.experimental import pallas as pl
from jax.experimental.pallas import tpu as pltpu


# ----------------------------------------------------------------------------
# Kernel factory (B, T, H baked in as static Python ints).
# ----------------------------------------------------------------------------
def _make_kernel(B, T, H):
    D = 2 * H          # fused bidirectional state width (lane-dense: 128)
    G8 = 8 * H         # fused (both-direction) gate width
    f32 = jnp.float32

    def kernel(x_ref,
               wih0_ref, whh0_ref, bias0_ref,
               wih1_ref, whh1_ref, bias1_ref,
               watt_ref, batt_ref,
               fw1_ref, fb1_ref, fw2_ref, fb2_ref, fw3_ref, fb3_ref,
               out_ref):
        # Lane masks (hoisted once, reused by both layers).
        col8 = jax.lax.broadcasted_iota(jnp.int32, (B, G8), 1)
        fwd_gate_mask = (col8 % D) < H           # forward-direction gate columns
        col2 = jax.lax.broadcasted_iota(jnp.int32, (B, D), 1)
        fwd_half_mask = col2 < H                 # forward half of the fused state

        def run_layer(proj, whh):
            """proj: (T*B, 8H) time-major hoisted input projection (b_ih+b_hh folded),
            gate columns interleaved per direction; whh: (2H, 8H) block-diagonal.
            Returns a list of T (B, 2H) outputs in NATURAL time order [h_f(t)|h_b(t)]."""
            h = jnp.zeros((B, D), f32)           # [h_fwd | h_bwd]
            c = jnp.zeros((B, D), f32)
            hs = []                              # fused-step order
            for s in range(T):                   # fully unrolled (T static, small)
                tf, tb = s, T - 1 - s
                # fwd half consumes time tf, bwd half consumes time tb (VPU select,
                # independent of the recurrence -> off the serial chain).
                p = jnp.where(fwd_gate_mask,
                              proj[tf * B:(tf + 1) * B, :],
                              proj[tb * B:(tb + 1) * B, :])
                gates = p + jnp.dot(h, whh, preferred_element_type=f32)   # (B, 8H)
                sig = jax.nn.sigmoid(gates[:, :3 * D])    # i | f | o (each 128 lanes)
                g = jnp.tanh(gates[:, 3 * D:])            # g
                c = sig[:, D:2 * D] * c + sig[:, :D] * g
                h = sig[:, 2 * D:3 * D] * jnp.tanh(c)
                hs.append(h)
            # Re-assemble natural-time outputs (off the chain): at fused step s the
            # fwd half is t=s and the bwd half is t=T-1-s.
            return [jnp.where(fwd_half_mask, hs[t], hs[T - 1 - t]) for t in range(T)]

        # ---------------- layer 0 ----------------
        x = x_ref[...]                                                       # (T*B, Din)
        proj0 = (jnp.dot(x, wih0_ref[...], preferred_element_type=f32)
                 + bias0_ref[...])                                           # (T*B, 8H)
        seq0 = run_layer(proj0, whh0_ref[...])

        # ---------------- layer 1 ----------------
        # TODO(synk): nn.LSTM inter-layer dropout (p=0.2) is identity at inference; omitted.
        seq0_mat = jnp.concatenate(seq0, axis=0)                             # (T*B, 2H)
        proj1 = (jnp.dot(seq0_mat, wih1_ref[...], preferred_element_type=f32)
                 + bias1_ref[...])
        seq1 = run_layer(proj1, whh1_ref[...])

        # ------------- attention pooling (VPU mul + lane reduce, no N=1 matmul) -------
        watt = watt_ref[...]                                                 # (1, 2H)
        batt = batt_ref[...]                                                 # (1, 1)
        logits = [jnp.sum(seq1[t] * watt, axis=-1, keepdims=True) + batt
                  for t in range(T)]                                         # each (B, 1)
        m = logits[0]
        for t in range(1, T):
            m = jnp.maximum(m, logits[t])
        es = [jnp.exp(l - m) for l in logits]
        den = es[0]
        for t in range(1, T):
            den = den + es[t]
        inv = pl.reciprocal(den, approx=True)                                # EUP slot
        context = (es[0] * inv) * seq1[0]
        for t in range(1, T):
            context = context + (es[t] * inv) * seq1[t]                      # (B, 2H)

        # ------------- MLP head (intermediates padded to 128 lanes) ----------------
        def leaky_relu(v):
            return jnp.where(v > 0, v, 0.01 * v)

        h1 = leaky_relu(jnp.dot(context, fw1_ref[...], preferred_element_type=f32)
                        + fb1_ref[...])
        # nn.Dropout is identity at inference time.
        h2 = leaky_relu(jnp.dot(h1, fw2_ref[...], preferred_element_type=f32)
                        + fb2_ref[...])
        h3 = jnp.dot(h2, fw3_ref[...], preferred_element_type=f32) + fb3_ref[...]  # (B,3)
        mm = jnp.max(h3, axis=-1, keepdims=True)
        ee = jnp.exp(h3 - mm)
        out_ref[...] = ee / jnp.sum(ee, axis=-1, keepdims=True)             # exact softmax

    return kernel


# ----------------------------------------------------------------------------
# pallas_call wrapper
# ----------------------------------------------------------------------------
def fused_forward(x, p):
    B, _, T, Din = x.shape
    D = p["whh0"].shape[0]            # 2H
    H = D // 2
    G8 = 8 * H
    fp = p["w1"].shape[-1]            # padded head width (128)
    n_cls = p["w3"].shape[-1]

    # Time-major flattened input for the hoisted projection (tiny; done by XLA outside
    # the kernel, off any critical path).
    x_tm = jnp.transpose(x.reshape(B, T, Din), (1, 0, 2)).reshape(T * B, Din)

    def full_spec(shape):
        zeros = (0,) * len(shape)
        return pl.BlockSpec(shape, lambda i, zeros=zeros: zeros)

    kernel = _make_kernel(B, T, H)
    return pl.pallas_call(
        kernel,
        out_shape=jax.ShapeDtypeStruct((B, n_cls), jnp.float32),
        grid=(1,),
        in_specs=[
            full_spec((T * B, Din)),      # x (time-major)
            full_spec((Din, G8)),         # layer-0 W_ih (both dirs, gate-interleaved)
            full_spec((D, G8)),           # layer-0 block-diagonal W_hh
            full_spec((1, G8)),           # layer-0 b_ih + b_hh
            full_spec((D, G8)),           # layer-1 W_ih
            full_spec((D, G8)),           # layer-1 block-diagonal W_hh
            full_spec((1, G8)),           # layer-1 bias
            full_spec((1, D)),            # attention weight (row vector)
            full_spec((1, 1)),            # attention bias
            full_spec((D, fp)),           # fc1 weight (cols zero-padded to 128)
            full_spec((1, fp)),
            full_spec((fp, fp)),          # fc2 weight (padded)
            full_spec((1, fp)),
            full_spec((fp, n_cls)),       # fc_out weight (rows zero-padded)
            full_spec((1, n_cls)),
        ],
        out_specs=full_spec((B, n_cls)),
        compiler_params=pltpu.CompilerParams(
            dimension_semantics=("arbitrary",)),
    )(x_tm, p["wih0"], p["whh0"], p["bias0"], p["wih1"], p["whh1"], p["bias1"],
      p["w_att"], p["b_att"], p["w1"], p["b1"], p["w2"], p["b2"], p["w3"], p["b3"])


@jax.jit
def forward(x, params):
    """x: (B, 1, T, input_size) exactly as the PyTorch module; returns (B, 3) probs."""
    return fused_forward(x, params)


# ----------------------------------------------------------------------------
# Parameter init (PyTorch-style uniform(-1/sqrt(fan), 1/sqrt(fan))) with:
#  * gate blocks reordered (i,f,g,o) -> (i,f,o,g),
#  * both directions' W_ih / biases concatenated with per-gate interleaved columns,
#  * W_hh assembled into a block-diagonal (2H, 8H) matrix,
#  * head weights zero-padded to 128 lanes.
# ----------------------------------------------------------------------------
def _reorder_gates(w):
    # PyTorch gate block order along the 4H axis is (i, f, g, o) -> (i, f, o, g)
    i, f, g, o = jnp.split(w, 4, axis=0)
    return jnp.concatenate([i, f, o, g], axis=0)


def _interleave_dirs(wf, wb, H):
    # wf, wb: (rows, 4H) with gate column order (i,f,o,g) ->
    # (rows, 8H) with columns [i_f i_b | f_f f_b | o_f o_b | g_f g_b].
    blocks = []
    for gi in range(4):
        blocks.append(wf[:, gi * H:(gi + 1) * H])
        blocks.append(wb[:, gi * H:(gi + 1) * H])
    return jnp.concatenate(blocks, axis=1)


def _block_diag_whh(whh_f, whh_b, H):
    # whh_f, whh_b: (H, 4H) -> (2H, 8H) block-diagonal so one (B,2H)@(2H,8H) matmul
    # updates both directions at once (fwd h feeds only fwd columns, bwd only bwd).
    bd = jnp.zeros((2 * H, 8 * H), jnp.float32)
    for gi in range(4):
        bd = bd.at[:H, (2 * gi) * H:(2 * gi + 1) * H].set(whh_f[:, gi * H:(gi + 1) * H])
        bd = bd.at[H:, (2 * gi + 1) * H:(2 * gi + 2) * H].set(whh_b[:, gi * H:(gi + 1) * H])
    return bd


def init_params(key, input_size=40, hidden=64, num_layers=2):
    assert num_layers == 2, "fused kernel is specialized for the module default (2 layers)"
    H = hidden
    D = 2 * H
    G = 4 * H
    kH = 1.0 / (H ** 0.5)

    def uni(k, shape, bound):
        return jax.random.uniform(k, shape, jnp.float32, -bound, bound)

    keys = iter(jax.random.split(key, 32))
    params = {}
    for layer in range(num_layers):
        din = input_size if layer == 0 else D
        wih_t, whh_t, bias = [], [], []
        for _direction in range(2):                           # forward, backward
            wih = uni(next(keys), (G, din), kH)               # PyTorch weight_ih (4H, Din)
            whh = uni(next(keys), (G, H), kH)                 # weight_hh (4H, H)
            bih = uni(next(keys), (G,), kH)
            bhh = uni(next(keys), (G,), kH)
            wih_t.append(jnp.transpose(_reorder_gates(wih)))          # (Din, 4H)
            whh_t.append(jnp.transpose(_reorder_gates(whh)))          # (H, 4H)
            bias.append(_reorder_gates(bih + bhh).reshape(1, G))      # (1, 4H)
        params[f"wih{layer}"] = _interleave_dirs(wih_t[0], wih_t[1], H)   # (din, 8H)
        params[f"whh{layer}"] = _block_diag_whh(whh_t[0], whh_t[1], H)    # (2H, 8H)
        params[f"bias{layer}"] = _interleave_dirs(bias[0], bias[1], H)    # (1, 8H)

    PAD = 128                                                 # lane-dense head width
    kD, k64, k32 = 1.0 / (D ** 0.5), 1.0 / (64 ** 0.5), 1.0 / (32 ** 0.5)
    params["w_att"] = uni(next(keys), (1, D), kD)             # (1, 2H) row vector
    params["b_att"] = uni(next(keys), (1, 1), kD)

    w1 = jnp.transpose(uni(next(keys), (64, D), kD))                  # (D, 64)
    b1 = uni(next(keys), (1, 64), kD)
    params["w1"] = jnp.zeros((D, PAD), jnp.float32).at[:, :64].set(w1)
    params["b1"] = jnp.zeros((1, PAD), jnp.float32).at[:, :64].set(b1)

    w2 = jnp.transpose(uni(next(keys), (32, 64), k64))                # (64, 32)
    b2 = uni(next(keys), (1, 32), k64)
    params["w2"] = jnp.zeros((PAD, PAD), jnp.float32).at[:64, :32].set(w2)
    params["b2"] = jnp.zeros((1, PAD), jnp.float32).at[:, :32].set(b2)

    w3 = jnp.transpose(uni(next(keys), (3, 32), k32))                 # (32, 3)
    params["w3"] = jnp.zeros((PAD, 3), jnp.float32).at[:32, :].set(w3)
    params["b3"] = uni(next(keys), (1, 3), k32)
    return params


if __name__ == "__main__":
    B, T = 2, 8
    input_size, hidden, num_layers = 40, 64, 2

    root = jax.random.PRNGKey(0)
    k_param, k_x = jax.random.split(root)
    params = init_params(k_param, input_size, hidden, num_layers)
    x = jax.random.normal(k_x, (B, 1, T, input_size), jnp.float32)

    out = jax.block_until_ready(forward(x, params))

    assert out.shape == (B, 3)
    assert bool(jnp.all(jnp.isfinite(out)))
    assert bool(jnp.allclose(jnp.sum(out, axis=1), 1.0, atol=1e-5))
    print("KERNEL_OK")
</pallas_src>

<mosaic_0001>
module attributes {stable_mosaic.version = 11 : i64} {
  func.func @kernel(%arg0: i32, %arg1: memref<16x40xf32, #tpu.memory_space<vmem>>, %arg2: memref<40x512xf32, #tpu.memory_space<vmem>>, %arg3: memref<128x512xf32, #tpu.memory_space<vmem>>, %arg4: memref<1x512xf32, #tpu.memory_space<vmem>>, %arg5: memref<128x512xf32, #tpu.memory_space<vmem>>, %arg6: memref<128x512xf32, #tpu.memory_space<vmem>>, %arg7: memref<1x512xf32, #tpu.memory_space<vmem>>, %arg8: memref<1x128xf32, #tpu.memory_space<vmem>>, %arg9: memref<1x1xf32, #tpu.memory_space<vmem>>, %arg10: memref<128x128xf32, #tpu.memory_space<vmem>>, %arg11: memref<1x128xf32, #tpu.memory_space<vmem>>, %arg12: memref<128x128xf32, #tpu.memory_space<vmem>>, %arg13: memref<1x128xf32, #tpu.memory_space<vmem>>, %arg14: memref<128x3xf32, #tpu.memory_space<vmem>>, %arg15: memref<1x3xf32, #tpu.memory_space<vmem>>, %arg16: memref<2x3xf32, #tpu.memory_space<vmem>>) attributes {dimension_semantics = [#tpu.dimension_semantics<arbitrary>], iteration_bounds = array<i64: 1>, scalar_prefetch = 0 : i64, scratch_operands = 0 : i64, tpu.core_type = #tpu.core_type<tc>, window_params = [{pipeline_mode = #tpu.pipeline_mode<synchronous>, transform_indices = @transform_0, window_bounds = array<i64: 16, 40>}, {pipeline_mode = #tpu.pipeline_mode<synchronous>, transform_indices = @transform_1, window_bounds = array<i64: 40, 512>}, {pipeline_mode = #tpu.pipeline_mode<synchronous>, transform_indices = @transform_2, window_bounds = array<i64: 128, 512>}, {pipeline_mode = #tpu.pipeline_mode<synchronous>, transform_indices = @transform_3, window_bounds = array<i64: 1, 512>}, {pipeline_mode = #tpu.pipeline_mode<synchronous>, transform_indices = @transform_4, window_bounds = array<i64: 128, 512>}, {pipeline_mode = #tpu.pipeline_mode<synchronous>, transform_indices = @transform_5, window_bounds = array<i64: 128, 512>}, {pipeline_mode = #tpu.pipeline_mode<synchronous>, transform_indices = @transform_6, window_bounds = array<i64: 1, 512>}, {pipeline_mode = #tpu.pipeline_mode<synchronous>, transform_indices = @transform_7, window_bounds = array<i64: 1, 128>}, {pipeline_mode = #tpu.pipeline_mode<synchronous>, transform_indices = @transform_8, window_bounds = array<i64: 1, 1>}, {pipeline_mode = #tpu.pipeline_mode<synchronous>, transform_indices = @transform_9, window_bounds = array<i64: 128, 128>}, {pipeline_mode = #tpu.pipeline_mode<synchronous>, transform_indices = @transform_10, window_bounds = array<i64: 1, 128>}, {pipeline_mode = #tpu.pipeline_mode<synchronous>, transform_indices = @transform_11, window_bounds = array<i64: 128, 128>}, {pipeline_mode = #tpu.pipeline_mode<synchronous>, transform_indices = @transform_12, window_bounds = array<i64: 1, 128>}, {pipeline_mode = #tpu.pipeline_mode<synchronous>, transform_indices = @transform_13, window_bounds = array<i64: 128, 3>}, {pipeline_mode = #tpu.pipeline_mode<synchronous>, transform_indices = @transform_14, window_bounds = array<i64: 1, 3>}, {pipeline_mode = #tpu.pipeline_mode<synchronous>, transform_indices = @transform_15, window_bounds = array<i64: 2, 3>}]} {
    %0 = tpu.iota {dimensions = array<i32: 1>} : vector<2x512xi32>
    %c128_i32 = arith.constant 128 : i32
    %c0_i32 = arith.constant 0 : i32
    %1 = arith.cmpi eq, %c128_i32, %c0_i32 : i32
    %c1_i32 = arith.constant 1 : i32
    %2 = arith.select %1, %c1_i32, %c128_i32 : i32
    %3 = vector.broadcast %2 : i32 to vector<2x512xi32>
    %4 = arith.remsi %0, %3 : vector<2x512xi32>
    %c0_i32_0 = arith.constant 0 : i32
    %5 = vector.broadcast %c0_i32_0 : i32 to vector<2x512xi32>
    %6 = arith.cmpi ne, %4, %5 : vector<2x512xi32>
    %c0_i32_1 = arith.constant 0 : i32
    %7 = vector.broadcast %c0_i32_1 : i32 to vector<2x512xi32>
    %8 = arith.cmpi slt, %4, %7 : vector<2x512xi32>
    %c0_i32_2 = arith.constant 0 : i32
    %9 = arith.cmpi slt, %2, %c0_i32_2 : i32
    %10 = vector.broadcast %9 : i1 to vector<2x512xi1>
    %11 = vector.broadcast %10 : vector<2x512xi1> to vector<2x512xi1>
    %12 = arith.xori %8, %11 : vector<2x512xi1>
    %13 = arith.andi %12, %6 : vector<2x512xi1>
    %14 = vector.broadcast %2 : i32 to vector<2x512xi32>
    %15 = arith.addi %4, %14 : vector<2x512xi32>
    %16 = arith.select %13, %15, %4 : vector<2x512xi1>, vector<2x512xi32>
    %c64_i32 = arith.constant 64 : i32
    %17 = vector.broadcast %c64_i32 : i32 to vector<2x512xi32>
    %18 = arith.cmpi slt, %16, %17 : vector<2x512xi32>
    %19 = tpu.iota {dimensions = array<i32: 1>} : vector<2x128xi32>
    %c64_i32_3 = arith.constant 64 : i32
    %20 = vector.broadcast %c64_i32_3 : i32 to vector<2x128xi32>
    %21 = arith.cmpi slt, %19, %20 : vector<2x128xi32>
    %c0 = arith.constant 0 : index
    %c0_4 = arith.constant 0 : index
    %22 = vector.load %arg1[%c0, %c0_4] : memref<16x40xf32, #tpu.memory_space<vmem>>, vector<16x40xf32>
    %c0_5 = arith.constant 0 : index
    %c0_6 = arith.constant 0 : index
    %23 = vector.load %arg2[%c0_5, %c0_6] : memref<40x512xf32, #tpu.memory_space<vmem>>, vector<40x512xf32>
    %cst = arith.constant dense<0.000000e+00> : vector<16x512xf32>
    %24 = tpu.matmul %22, %23, %cst {dimension_numbers = #tpu.dot_dimension_numbers<[1], [0], [0], [1], [0, 0, 1, 1], [], []>} : vector<16x40xf32>, vector<40x512xf32>, vector<16x512xf32> -> vector<16x512xf32>
    %c0_7 = arith.constant 0 : index
    %c0_8 = arith.constant 0 : index
    %25 = vector.load %arg4[%c0_7, %c0_8] : memref<1x512xf32, #tpu.memory_space<vmem>>, vector<1x512xf32>
    %26 = vector.broadcast %25 : vector<1x512xf32> to vector<16x512xf32>
    %27 = arith.addf %24, %26 : vector<16x512xf32>
    %c0_9 = arith.constant 0 : index
    %c0_10 = arith.constant 0 : index
    %28 = vector.load %arg3[%c0_9, %c0_10] : memref<128x512xf32, #tpu.memory_space<vmem>>, vector<128x512xf32>
    %cst_11 = arith.constant 0.000000e+00 : f32
    %29 = vector.broadcast %cst_11 : f32 to vector<2x128xf32>
    %cst_12 = arith.constant 0.000000e+00 : f32
    %30 = vector.broadcast %cst_12 : f32 to vector<2x128xf32>
    %31 = vector.extract_strided_slice %27 {offsets = [0, 0], sizes = [2, 512], strides = [1, 1]} : vector<16x512xf32> to vector<2x512xf32>
    %32 = vector.extract_strided_slice %27 {offsets = [14, 0], sizes = [2, 512], strides = [1, 1]} : vector<16x512xf32> to vector<2x512xf32>
    %33 = arith.select %18, %31, %32 : vector<2x512xi1>, vector<2x512xf32>
    %cst_13 = arith.constant dense<0.000000e+00> : vector<2x512xf32>
    %34 = tpu.matmul %29, %28, %cst_13 {dimension_numbers = #tpu.dot_dimension_numbers<[1], [0], [0], [1], [0, 0, 1, 1], [], []>} : vector<2x128xf32>, vector<128x512xf32>, vector<2x512xf32> -> vector<2x512xf32>
    %35 = arith.addf %33, %34 : vector<2x512xf32>
    %36 = vector.extract_strided_slice %35 {offsets = [0, 0], sizes = [2, 384], strides = [1, 1]} : vector<2x512xf32> to vector<2x384xf32>
    %37 = arith.negf %36 : vector<2x384xf32>
    %38 = math.exp %37 : vector<2x384xf32>
    %cst_14 = arith.constant 1.000000e+00 : f32
    %39 = vector.broadcast %cst_14 : f32 to vector<2x384xf32>
    %40 = arith.addf %39, %38 : vector<2x384xf32>
    %41 = arith.divf %39, %40 : vector<2x384xf32>
    %42 = vector.extract_strided_slice %35 {offsets = [0, 384], sizes = [2, 128], strides = [1, 1]} : vector<2x512xf32> to vector<2x128xf32>
    %43 = math.tanh %42 : vector<2x128xf32>
    %44 = vector.extract_strided_slice %41 {offsets = [0, 128], sizes = [2, 128], strides = [1, 1]} : vector<2x384xf32> to vector<2x128xf32>
    %45 = arith.mulf %44, %30 : vector<2x128xf32>
    %46 = vector.extract_strided_slice %41 {offsets = [0, 0], sizes = [2, 128], strides = [1, 1]} : vector<2x384xf32> to vector<2x128xf32>
    %47 = arith.mulf %46, %43 : vector<2x128xf32>
    %48 = arith.addf %45, %47 : vector<2x128xf32>
    %49 = vector.extract_strided_slice %41 {offsets = [0, 256], sizes = [2, 128], strides = [1, 1]} : vector<2x384xf32> to vector<2x128xf32>
    %50 = math.tanh %48 : vector<2x128xf32>
    %51 = arith.mulf %49, %50 : vector<2x128xf32>
    %52 = vector.extract_strided_slice %27 {offsets = [2, 0], sizes = [2, 512], strides = [1, 1]} : vector<16x512xf32> to vector<2x512xf32>
    %53 = vector.extract_strided_slice %27 {offsets = [12, 0], sizes = [2, 512], strides = [1, 1]} : vector<16x512xf32> to vector<2x512xf32>
    %54 = arith.select %18, %52, %53 : vector<2x512xi1>, vector<2x512xf32>
    %cst_15 = arith.constant dense<0.000000e+00> : vector<2x512xf32>
    %55 = tpu.matmul %51, %28, %cst_15 {dimension_numbers = #tpu.dot_dimension_numbers<[1], [0], [0], [1], [0, 0, 1, 1], [], []>} : vector<2x128xf32>, vector<128x512xf32>, vector<2x512xf32> -> vector<2x512xf32>
    %56 = arith.addf %54, %55 : vector<2x512xf32>
    %57 = vector.extract_strided_slice %56 {offsets = [0, 0], sizes = [2, 384], strides = [1, 1]} : vector<2x512xf32> to vector<2x384xf32>
    %58 = arith.negf %57 : vector<2x384xf32>
    %59 = math.exp %58 : vector<2x384xf32>
    %cst_16 = arith.constant 1.000000e+00 : f32
    %60 = vector.broadcast %cst_16 : f32 to vector<2x384xf32>
    %61 = arith.addf %60, %59 : vector<2x384xf32>
    %62 = arith.divf %60, %61 : vector<2x384xf32>
    %63 = vector.extract_strided_slice %56 {offsets = [0, 384], sizes = [2, 128], strides = [1, 1]} : vector<2x512xf32> to vector<2x128xf32>
    %64 = math.tanh %63 : vector<2x128xf32>
    %65 = vector.extract_strided_slice %62 {offsets = [0, 128], sizes = [2, 128], strides = [1, 1]} : vector<2x384xf32> to vector<2x128xf32>
    %66 = arith.mulf %65, %48 : vector<2x128xf32>
    %67 = vector.extract_strided_slice %62 {offsets = [0, 0], sizes = [2, 128], strides = [1, 1]} : vector<2x384xf32> to vector<2x128xf32>
    %68 = arith.mulf %67, %64 : vector<2x128xf32>
    %69 = arith.addf %66, %68 : vector<2x128xf32>
    %70 = vector.extract_strided_slice %62 {offsets = [0, 256], sizes = [2, 128], strides = [1, 1]} : vector<2x384xf32> to vector<2x128xf32>
    %71 = math.tanh %69 : vector<2x128xf32>
    %72 = arith.mulf %70, %71 : vector<2x128xf32>
    %73 = vector.extract_strided_slice %27 {offsets = [4, 0], sizes = [2, 512], strides = [1, 1]} : vector<16x512xf32> to vector<2x512xf32>
    %74 = vector.extract_strided_slice %27 {offsets = [10, 0], sizes = [2, 512], strides = [1, 1]} : vector<16x512xf32> to vector<2x512xf32>
    %75 = arith.select %18, %73, %74 : vector<2x512xi1>, vector<2x512xf32>
    %cst_17 = arith.constant dense<0.000000e+00> : vector<2x512xf32>
    %76 = tpu.matmul %72, %28, %cst_17 {dimension_numbers = #tpu.dot_dimension_numbers<[1], [0], [0], [1], [0, 0, 1, 1], [], []>} : vector<2x128xf32>, vector<128x512xf32>, vector<2x512xf32> -> vector<2x512xf32>
    %77 = arith.addf %75, %76 : vector<2x512xf32>
    %78 = vector.extract_strided_slice %77 {offsets = [0, 0], sizes = [2, 384], strides = [1, 1]} : vector<2x512xf32> to vector<2x384xf32>
    %79 = arith.negf %78 : vector<2x384xf32>
    %80 = math.exp %79 : vector<2x384xf32>
    %cst_18 = arith.constant 1.000000e+00 : f32
    %81 = vector.broadcast %cst_18 : f32 to vector<2x384xf32>
    %82 = arith.addf %81, %80 : vector<2x384xf32>
    %83 = arith.divf %81, %82 : vector<2x384xf32>
    %84 = vector.extract_strided_slice %77 {offsets = [0, 384], sizes = [2, 128], strides = [1, 1]} : vector<2x512xf32> to vector<2x128xf32>
    %85 = math.tanh %84 : vector<2x128xf32>
    %86 = vector.extract_strided_slice %83 {offsets = [0, 128], sizes = [2, 128], strides = [1, 1]} : vector<2x384xf32> to vector<2x128xf32>
    %87 = arith.mulf %86, %69 : vector<2x128xf32>
    %88 = vector.extract_strided_slice %83 {offsets = [0, 0], sizes = [2, 128], strides = [1, 1]} : vector<2x384xf32> to vector<2x128xf32>
    %89 = arith.mulf %88, %85 : vector<2x128xf32>
    %90 = arith.addf %87, %89 : vector<2x128xf32>
    %91 = vector.extract_strided_slice %83 {offsets = [0, 256], sizes = [2, 128], strides = [1, 1]} : vector<2x384xf32> to vector<2x128xf32>
    %92 = math.tanh %90 : vector<2x128xf32>
    %93 = arith.mulf %91, %92 : vector<2x128xf32>
    %94 = vector.extract_strided_slice %27 {offsets = [6, 0], sizes = [2, 512], strides = [1, 1]} : vector<16x512xf32> to vector<2x512xf32>
    %95 = vector.extract_strided_slice %27 {offsets = [8, 0], sizes = [2, 512], strides = [1, 1]} : vector<16x512xf32> to vector<2x512xf32>
    %96 = arith.select %18, %94, %95 : vector<2x512xi1>, vector<2x512xf32>
    %cst_19 = arith.constant dense<0.000000e+00> : vector<2x512xf32>
    %97 = tpu.matmul %93, %28, %cst_19 {dimension_numbers = #tpu.dot_dimension_numbers<[1], [0], [0], [1], [0, 0, 1, 1], [], []>} : vector<2x128xf32>, vector<128x512xf32>, vector<2x512xf32> -> vector<2x512xf32>
    %98 = arith.addf %96, %97 : vector<2x512xf32>
    %99 = vector.extract_strided_slice %98 {offsets = [0, 0], sizes = [2, 384], strides = [1, 1]} : vector<2x512xf32> to vector<2x384xf32>
    %100 = arith.negf %99 : vector<2x384xf32>
    %101 = math.exp %100 : vector<2x384xf32>
    %cst_20 = arith.constant 1.000000e+00 : f32
    %102 = vector.broadcast %cst_20 : f32 to vector<2x384xf32>
    %103 = arith.addf %102, %101 : vector<2x384xf32>
    %104 = arith.divf %102, %103 : vector<2x384xf32>
    %105 = vector.extract_strided_slice %98 {offsets = [0, 384], sizes = [2, 128], strides = [1, 1]} : vector<2x512xf32> to vector<2x128xf32>
    %106 = math.tanh %105 : vector<2x128xf32>
    %107 = vector.extract_strided_slice %104 {offsets = [0, 128], sizes = [2, 128], strides = [1, 1]} : vector<2x384xf32> to vector<2x128xf32>
    %108 = arith.mulf %107, %90 : vector<2x128xf32>
    %109 = vector.extract_strided_slice %104 {offsets = [0, 0], sizes = [2, 128], strides = [1, 1]} : vector<2x384xf32> to vector<2x128xf32>
    %110 = arith.mulf %109, %106 : vector<2x128xf32>
    %111 = arith.addf %108, %110 : vector<2x128xf32>
    %112 = vector.extract_strided_slice %104 {offsets = [0, 256], sizes = [2, 128], strides = [1, 1]} : vector<2x384xf32> to vector<2x128xf32>
    %113 = math.tanh %111 : vector<2x128xf32>
    %114 = arith.mulf %112, %113 : vector<2x128xf32>
    %115 = vector.extract_strided_slice %27 {offsets = [8, 0], sizes = [2, 512], strides = [1, 1]} : vector<16x512xf32> to vector<2x512xf32>
    %116 = vector.extract_strided_slice %27 {offsets = [6, 0], sizes = [2, 512], strides = [1, 1]} : vector<16x512xf32> to vector<2x512xf32>
    %117 = arith.select %18, %115, %116 : vector<2x512xi1>, vector<2x512xf32>
    %cst_21 = arith.constant dense<0.000000e+00> : vector<2x512xf32>
    %118 = tpu.matmul %114, %28, %cst_21 {dimension_numbers = #tpu.dot_dimension_numbers<[1], [0], [0], [1], [0, 0, 1, 1], [], []>} : vector<2x128xf32>, vector<128x512xf32>, vector<2x512xf32> -> vector<2x512xf32>
    %119 = arith.addf %117, %118 : vector<2x512xf32>
    %120 = vector.extract_strided_slice %119 {offsets = [0, 0], sizes = [2, 384], strides = [1, 1]} : vector<2x512xf32> to vector<2x384xf32>
    %121 = arith.negf %120 : vector<2x384xf32>
    %122 = math.exp %121 : vector<2x384xf32>
    %cst_22 = arith.constant 1.000000e+00 : f32
    %123 = vector.broadcast %cst_22 : f32 to vector<2x384xf32>
    %124 = arith.addf %123, %122 : vector<2x384xf32>
    %125 = arith.divf %123, %124 : vector<2x384xf32>
    %126 = vector.extract_strided_slice %119 {offsets = [0, 384], sizes = [2, 128], strides = [1, 1]} : vector<2x512xf32> to vector<2x128xf32>
    %127 = math.tanh %126 : vector<2x128xf32>
    %128 = vector.extract_strided_slice %125 {offsets = [0, 128], sizes = [2, 128], strides = [1, 1]} : vector<2x384xf32> to vector<2x128xf32>
    %129 = arith.mulf %128, %111 : vector<2x128xf32>
    %130 = vector.extract_strided_slice %125 {offsets = [0, 0], sizes = [2, 128], strides = [1, 1]} : vector<2x384xf32> to vector<2x128xf32>
    %131 = arith.mulf %130, %127 : vector<2x128xf32>
    %132 = arith.addf %129, %131 : vector<2x128xf32>
    %133 = vector.extract_strided_slice %125 {offsets = [0, 256], sizes = [2, 128], strides = [1, 1]} : vector<2x384xf32> to vector<2x128xf32>
    %134 = math.tanh %132 : vector<2x128xf32>
    %135 = arith.mulf %133, %134 : vector<2x128xf32>
    %136 = vector.extract_strided_slice %27 {offsets = [10, 0], sizes = [2, 512], strides = [1, 1]} : vector<16x512xf32> to vector<2x512xf32>
    %137 = vector.extract_strided_slice %27 {offsets = [4, 0], sizes = [2, 512], strides = [1, 1]} : vector<16x512xf32> to vector<2x512xf32>
    %138 = arith.select %18, %136, %137 : vector<2x512xi1>, vector<2x512xf32>
    %cst_23 = arith.constant dense<0.000000e+00> : vector<2x512xf32>
    %139 = tpu.matmul %135, %28, %cst_23 {dimension_numbers = #tpu.dot_dimension_numbers<[1], [0], [0], [1], [0, 0, 1, 1], [], []>} : vector<2x128xf32>, vector<128x512xf32>, vector<2x512xf32> -> vector<2x512xf32>
    %140 = arith.addf %138, %139 : vector<2x512xf32>
    %141 = vector.extract_strided_slice %140 {offsets = [0, 0], sizes = [2, 384], strides = [1, 1]} : vector<2x512xf32> to vector<2x384xf32>
    %142 = arith.negf %141 : vector<2x384xf32>
    %143 = math.exp %142 : vector<2x384xf32>
    %cst_24 = arith.constant 1.000000e+00 : f32
    %144 = vector.broadcast %cst_24 : f32 to vector<2x384xf32>
    %145 = arith.addf %144, %143 : vector<2x384xf32>
    %146 = arith.divf %144, %145 : vector<2x384xf32>
    %147 = vector.extract_strided_slice %140 {offsets = [0, 384], sizes = [2, 128], strides = [1, 1]} : vector<2x512xf32> to vector<2x128xf32>
    %148 = math.tanh %147 : vector<2x128xf32>
    %149 = vector.extract_strided_slice %146 {offsets = [0, 128], sizes = [2, 128], strides = [1, 1]} : vector<2x384xf32> to vector<2x128xf32>
    %150 = arith.mulf %149, %132 : vector<2x128xf32>
    %151 = vector.extract_strided_slice %146 {offsets = [0, 0], sizes = [2, 128], strides = [1, 1]} : vector<2x384xf32> to vector<2x128xf32>
    %152 = arith.mulf %151, %148 : vector<2x128xf32>
    %153 = arith.addf %150, %152 : vector<2x128xf32>
    %154 = vector.extract_strided_slice %146 {offsets = [0, 256], sizes = [2, 128], strides = [1, 1]} : vector<2x384xf32> to vector<2x128xf32>
    %155 = math.tanh %153 : vector<2x128xf32>
    %156 = arith.mulf %154, %155 : vector<2x128xf32>
    %157 = vector.extract_strided_slice %27 {offsets = [12, 0], sizes = [2, 512], strides = [1, 1]} : vector<16x512xf32> to vector<2x512xf32>
    %158 = vector.extract_strided_slice %27 {offsets = [2, 0], sizes = [2, 512], strides = [1, 1]} : vector<16x512xf32> to vector<2x512xf32>
    %159 = arith.select %18, %157, %158 : vector<2x512xi1>, vector<2x512xf32>
    %cst_25 = arith.constant dense<0.000000e+00> : vector<2x512xf32>
    %160 = tpu.matmul %156, %28, %cst_25 {dimension_numbers = #tpu.dot_dimension_numbers<[1], [0], [0], [1], [0, 0, 1, 1], [], []>} : vector<2x128xf32>, vector<128x512xf32>, vector<2x512xf32> -> vector<2x512xf32>
    %161 = arith.addf %159, %160 : vector<2x512xf32>
    %162 = vector.extract_strided_slice %161 {offsets = [0, 0], sizes = [2, 384], strides = [1, 1]} : vector<2x512xf32> to vector<2x384xf32>
    %163 = arith.negf %162 : vector<2x384xf32>
    %164 = math.exp %163 : vector<2x384xf32>
    %cst_26 = arith.constant 1.000000e+00 : f32
    %165 = vector.broadcast %cst_26 : f32 to vector<2x384xf32>
    %166 = arith.addf %165, %164 : vector<2x384xf32>
    %167 = arith.divf %165, %166 : vector<2x384xf32>
    %168 = vector.extract_strided_slice %161 {offsets = [0, 384], sizes = [2, 128], strides = [1, 1]} : vector<2x512xf32> to vector<2x128xf32>
    %169 = math.tanh %168 : vector<2x128xf32>
    %170 = vector.extract_strided_slice %167 {offsets = [0, 128], sizes = [2, 128], strides = [1, 1]} : vector<2x384xf32> to vector<2x128xf32>
    %171 = arith.mulf %170, %153 : vector<2x128xf32>
    %172 = vector.extract_strided_slice %167 {offsets = [0, 0], sizes = [2, 128], strides = [1, 1]} : vector<2x384xf32> to vector<2x128xf32>
    %173 = arith.mulf %172, %169 : vector<2x128xf32>
    %174 = arith.addf %171, %173 : vector<2x128xf32>
    %175 = vector.extract_strided_slice %167 {offsets = [0, 256], sizes = [2, 128], strides = [1, 1]} : vector<2x384xf32> to vector<2x128xf32>
    %176 = math.tanh %174 : vector<2x128xf32>
    %177 = arith.mulf %175, %176 : vector<2x128xf32>
    %178 = vector.extract_strided_slice %27 {offsets = [14, 0], sizes = [2, 512], strides = [1, 1]} : vector<16x512xf32> to vector<2x512xf32>
    %179 = vector.extract_strided_slice %27 {offsets = [0, 0], sizes = [2, 512], strides = [1, 1]} : vector<16x512xf32> to vector<2x512xf32>
    %180 = arith.select %18, %178, %179 : vector<2x512xi1>, vector<2x512xf32>
    %cst_27 = arith.constant dense<0.000000e+00> : vector<2x512xf32>
    %181 = tpu.matmul %177, %28, %cst_27 {dimension_numbers = #tpu.dot_dimension_numbers<[1], [0], [0], [1], [0, 0, 1, 1], [], []>} : vector<2x128xf32>, vector<128x512xf32>, vector<2x512xf32> -> vector<2x512xf32>
    %182 = arith.addf %180, %181 : vector<2x512xf32>
    %183 = vector.extract_strided_slice %182 {offsets = [0, 0], sizes = [2, 384], strides = [1, 1]} : vector<2x512xf32> to vector<2x384xf32>
    %184 = arith.negf %183 : vector<2x384xf32>
    %185 = math.exp %184 : vector<2x384xf32>
    %cst_28 = arith.constant 1.000000e+00 : f32
    %186 = vector.broadcast %cst_28 : f32 to vector<2x384xf32>
    %187 = arith.addf %186, %185 : vector<2x384xf32>
    %188 = arith.divf %186, %187 : vector<2x384xf32>
    %189 = vector.extract_strided_slice %182 {offsets = [0, 384], sizes = [2, 128], strides = [1, 1]} : vector<2x512xf32> to vector<2x128xf32>
    %190 = math.tanh %189 : vector<2x128xf32>
    %191 = vector.extract_strided_slice %188 {offsets = [0, 128], sizes = [2, 128], strides = [1, 1]} : vector<2x384xf32> to vector<2x128xf32>
    %192 = arith.mulf %191, %174 : vector<2x128xf32>
    %193 = vector.extract_strided_slice %188 {offsets = [0, 0], sizes = [2, 128], strides = [1, 1]} : vector<2x384xf32> to vector<2x128xf32>
    %194 = arith.mulf %193, %190 : vector<2x128xf32>
    %195 = arith.addf %192, %194 : vector<2x128xf32>
    %196 = vector.extract_strided_slice %188 {offsets = [0, 256], sizes = [2, 128], strides = [1, 1]} : vector<2x384xf32> to vector<2x128xf32>
    %197 = math.tanh %195 : vector<2x128xf32>
    %198 = arith.mulf %196, %197 : vector<2x128xf32>
    %199 = arith.select %21, %51, %198 : vector<2x128xi1>, vector<2x128xf32>
    %200 = arith.select %21, %72, %177 : vector<2x128xi1>, vector<2x128xf32>
    %201 = arith.select %21, %93, %156 : vector<2x128xi1>, vector<2x128xf32>
    %202 = arith.select %21, %114, %135 : vector<2x128xi1>, vector<2x128xf32>
    %203 = arith.select %21, %135, %114 : vector<2x128xi1>, vector<2x128xf32>
    %204 = arith.select %21, %156, %93 : vector<2x128xi1>, vector<2x128xf32>
    %205 = arith.select %21, %177, %72 : vector<2x128xi1>, vector<2x128xf32>
    %206 = arith.select %21, %198, %51 : vector<2x128xi1>, vector<2x128xf32>
    %207 = tpu.concatenate %199, %200, %201, %202, %203, %204, %205, %206 in 0 : vector<2x128xf32>, vector<2x128xf32>, vector<2x128xf32>, vector<2x128xf32>, vector<2x128xf32>, vector<2x128xf32>, vector<2x128xf32>, vector<2x128xf32> -> vector<16x128xf32>
    %c0_29 = arith.constant 0 : index
    %c0_30 = arith.constant 0 : index
    %208 = vector.load %arg5[%c0_29, %c0_30] : memref<128x512xf32, #tpu.memory_space<vmem>>, vector<128x512xf32>
    %cst_31 = arith.constant dense<0.000000e+00> : vector<16x512xf32>
    %209 = tpu.matmul %207, %208, %cst_31 {dimension_numbers = #tpu.dot_dimension_numbers<[1], [0], [0], [1], [0, 0, 1, 1], [], []>} : vector<16x128xf32>, vector<128x512xf32>, vector<16x512xf32> -> vector<16x512xf32>
    %c0_32 = arith.constant 0 : index
    %c0_33 = arith.constant 0 : index
    %210 = vector.load %arg7[%c0_32, %c0_33] : memref<1x512xf32, #tpu.memory_space<vmem>>, vector<1x512xf32>
    %211 = vector.broadcast %210 : vector<1x512xf32> to vector<16x512xf32>
    %212 = arith.addf %209, %211 : vector<16x512xf32>
    %c0_34 = arith.constant 0 : index
    %c0_35 = arith.constant 0 : index
    %213 = vector.load %arg6[%c0_34, %c0_35] : memref<128x512xf32, #tpu.memory_space<vmem>>, vector<128x512xf32>
    %cst_36 = arith.constant 0.000000e+00 : f32
    %214 = vector.broadcast %cst_36 : f32 to vector<2x128xf32>
    %cst_37 = arith.constant 0.000000e+00 : f32
    %215 = vector.broadcast %cst_37 : f32 to vector<2x128xf32>
    %216 = vector.extract_strided_slice %212 {offsets = [0, 0], sizes = [2, 512], strides = [1, 1]} : vector<16x512xf32> to vector<2x512xf32>
    %217 = vector.extract_strided_slice %212 {offsets = [14, 0], sizes = [2, 512], strides = [1, 1]} : vector<16x512xf32> to vector<2x512xf32>
    %218 = arith.select %18, %216, %217 : vector<2x512xi1>, vector<2x512xf32>
    %cst_38 = arith.constant dense<0.000000e+00> : vector<2x512xf32>
    %219 = tpu.matmul %214, %213, %cst_38 {dimension_numbers = #tpu.dot_dimension_numbers<[1], [0], [0], [1], [0, 0, 1, 1], [], []>} : vector<2x128xf32>, vector<128x512xf32>, vector<2x512xf32> -> vector<2x512xf32>
    %220 = arith.addf %218, %219 : vector<2x512xf32>
    %221 = vector.extract_strided_slice %220 {offsets = [0, 0], sizes = [2, 384], strides = [1, 1]} : vector<2x512xf32> to vector<2x384xf32>
    %222 = arith.negf %221 : vector<2x384xf32>
    %223 = math.exp %222 : vector<2x384xf32>
    %cst_39 = arith.constant 1.000000e+00 : f32
    %224 = vector.broadcast %cst_39 : f32 to vector<2x384xf32>
    %225 = arith.addf %224, %223 : vector<2x384xf32>
    %226 = arith.divf %224, %225 : vector<2x384xf32>
    %227 = vector.extract_strided_slice %220 {offsets = [0, 384], sizes = [2, 128], strides = [1, 1]} : vector<2x512xf32> to vector<2x128xf32>
    %228 = math.tanh %227 : vector<2x128xf32>
    %229 = vector.extract_strided_slice %226 {offsets = [0, 128], sizes = [2, 128], strides = [1, 1]} : vector<2x384xf32> to vector<2x128xf32>
    %230 = arith.mulf %229, %215 : vector<2x128xf32>
    %231 = vector.extract_strided_slice %226 {offsets = [0, 0], sizes = [2, 128], strides = [1, 1]} : vector<2x384xf32> to vector<2x128xf32>
    %232 = arith.mulf %231, %228 : vector<2x128xf32>
    %233 = arith.addf %230, %232 : vector<2x128xf32>
    %234 = vector.extract_strided_slice %226 {offsets = [0, 256], sizes = [2, 128], strides = [1, 1]} : vector<2x384xf32> to vector<2x128xf32>
    %235 = math.tanh %233 : vector<2x128xf32>
    %236 = arith.mulf %234, %235 : vector<2x128xf32>
    %237 = vector.extract_strided_slice %212 {offsets = [2, 0], sizes = [2, 512], strides = [1, 1]} : vector<16x512xf32> to vector<2x512xf32>
    %238 = vector.extract_strided_slice %212 {offsets = [12, 0], sizes = [2, 512], strides = [1, 1]} : vector<16x512xf32> to vector<2x512xf32>
    %239 = arith.select %18, %237, %238 : vector<2x512xi1>, vector<2x512xf32>
    %cst_40 = arith.constant dense<0.000000e+00> : vector<2x512xf32>
    %240 = tpu.matmul %236, %213, %cst_40 {dimension_numbers = #tpu.dot_dimension_numbers<[1], [0], [0], [1], [0, 0, 1, 1], [], []>} : vector<2x128xf32>, vector<128x512xf32>, vector<2x512xf32> -> vector<2x512xf32>
    %241 = arith.addf %239, %240 : vector<2x512xf32>
    %242 = vector.extract_strided_slice %241 {offsets = [0, 0], sizes = [2, 384], strides = [1, 1]} : vector<2x512xf32> to vector<2x384xf32>
    %243 = arith.negf %242 : vector<2x384xf32>
    %244 = math.exp %243 : vector<2x384xf32>
    %cst_41 = arith.constant 1.000000e+00 : f32
    %245 = vector.broadcast %cst_41 : f32 to vector<2x384xf32>
    %246 = arith.addf %245, %244 : vector<2x384xf32>
    %247 = arith.divf %245, %246 : vector<2x384xf32>
    %248 = vector.extract_strided_slice %241 {offsets = [0, 384], sizes = [2, 128], strides = [1, 1]} : vector<2x512xf32> to vector<2x128xf32>
    %249 = math.tanh %248 : vector<2x128xf32>
    %250 = vector.extract_strided_slice %247 {offsets = [0, 128], sizes = [2, 128], strides = [1, 1]} : vector<2x384xf32> to vector<2x128xf32>
    %251 = arith.mulf %250, %233 : vector<2x128xf32>
    %252 = vector.extract_strided_slice %247 {offsets = [0, 0], sizes = [2, 128], strides = [1, 1]} : vector<2x384xf32> to vector<2x128xf32>
    %253 = arith.mulf %252, %249 : vector<2x128xf32>
    %254 = arith.addf %251, %253 : vector<2x128xf32>
    %255 = vector.extract_strided_slice %247 {offsets = [0, 256], sizes = [2, 128], strides = [1, 1]} : vector<2x384xf32> to vector<2x128xf32>
    %256 = math.tanh %254 : vector<2x128xf32>
    %257 = arith.mulf %255, %256 : vector<2x128xf32>
    %258 = vector.extract_strided_slice %212 {offsets = [4, 0], sizes = [2, 512], strides = [1, 1]} : vector<16x512xf32> to vector<2x512xf32>
    %259 = vector.extract_strided_slice %212 {offsets = [10, 0], sizes = [2, 512], strides = [1, 1]} : vector<16x512xf32> to vector<2x512xf32>
    %260 = arith.select %18, %258, %259 : vector<2x512xi1>, vector<2x512xf32>
    %cst_42 = arith.constant dense<0.000000e+00> : vector<2x512xf32>
    %261 = tpu.matmul %257, %213, %cst_42 {dimension_numbers = #tpu.dot_dimension_numbers<[1], [0], [0], [1], [0, 0, 1, 1], [], []>} : vector<2x128xf32>, vector<128x512xf32>, vector<2x512xf32> -> vector<2x512xf32>
    %262 = arith.addf %260, %261 : vector<2x512xf32>
    %263 = vector.extract_strided_slice %262 {offsets = [0, 0], sizes = [2, 384], strides = [1, 1]} : vector<2x512xf32> to vector<2x384xf32>
    %264 = arith.negf %263 : vector<2x384xf32>
    %265 = math.exp %264 : vector<2x384xf32>
    %cst_43 = arith.constant 1.000000e+00 : f32
    %266 = vector.broadcast %cst_43 : f32 to vector<2x384xf32>
    %267 = arith.addf %266, %265 : vector<2x384xf32>
    %268 = arith.divf %266, %267 : vector<2x384xf32>
    %269 = vector.extract_strided_slice %262 {offsets = [0, 384], sizes = [2, 128], strides = [1, 1]} : vector<2x512xf32> to vector<2x128xf32>
    %270 = math.tanh %269 : vector<2x128xf32>
    %271 = vector.extract_strided_slice %268 {offsets = [0, 128], sizes = [2, 128], strides = [1, 1]} : vector<2x384xf32> to vector<2x128xf32>
    %272 = arith.mulf %271, %254 : vector<2x128xf32>
    %273 = vector.extract_strided_slice %268 {offsets = [0, 0], sizes = [2, 128], strides = [1, 1]} : vector<2x384xf32> to vector<2x128xf32>
    %274 = arith.mulf %273, %270 : vector<2x128xf32>
    %275 = arith.addf %272, %274 : vector<2x128xf32>
    %276 = vector.extract_strided_slice %268 {offsets = [0, 256], sizes = [2, 128], strides = [1, 1]} : vector<2x384xf32> to vector<2x128xf32>
    %277 = math.tanh %275 : vector<2x128xf32>
    %278 = arith.mulf %276, %277 : vector<2x128xf32>
    %279 = vector.extract_strided_slice %212 {offsets = [6, 0], sizes = [2, 512], strides = [1, 1]} : vector<16x512xf32> to vector<2x512xf32>
    %280 = vector.extract_strided_slice %212 {offsets = [8, 0], sizes = [2, 512], strides = [1, 1]} : vector<16x512xf32> to vector<2x512xf32>
    %281 = arith.select %18, %279, %280 : vector<2x512xi1>, vector<2x512xf32>
    %cst_44 = arith.constant dense<0.000000e+00> : vector<2x512xf32>
    %282 = tpu.matmul %278, %213, %cst_44 {dimension_numbers = #tpu.dot_dimension_numbers<[1], [0], [0], [1], [0, 0, 1, 1], [], []>} : vector<2x128xf32>, vector<128x512xf32>, vector<2x512xf32> -> vector<2x512xf32>
    %283 = arith.addf %281, %282 : vector<2x512xf32>
    %284 = vector.extract_strided_slice %283 {offsets = [0, 0], sizes = [2, 384], strides = [1, 1]} : vector<2x512xf32> to vector<2x384xf32>
    %285 = arith.negf %284 : vector<2x384xf32>
    %286 = math.exp %285 : vector<2x384xf32>
    %cst_45 = arith.constant 1.000000e+00 : f32
    %287 = vector.broadcast %cst_45 : f32 to vector<2x384xf32>
    %288 = arith.addf %287, %286 : vector<2x384xf32>
    %289 = arith.divf %287, %288 : vector<2x384xf32>
    %290 = vector.extract_strided_slice %283 {offsets = [0, 384], sizes = [2, 128], strides = [1, 1]} : vector<2x512xf32> to vector<2x128xf32>
    %291 = math.tanh %290 : vector<2x128xf32>
    %292 = vector.extract_strided_slice %289 {offsets = [0, 128], sizes = [2, 128], strides = [1, 1]} : vector<2x384xf32> to vector<2x128xf32>
    %293 = arith.mulf %292, %275 : vector<2x128xf32>
    %294 = vector.extract_strided_slice %289 {offsets = [0, 0], sizes = [2, 128], strides = [1, 1]} : vector<2x384xf32> to vector<2x128xf32>
    %295 = arith.mulf %294, %291 : vector<2x128xf32>
    %296 = arith.addf %293, %295 : vector<2x128xf32>
    %297 = vector.extract_strided_slice %289 {offsets = [0, 256], sizes = [2, 128], strides = [1, 1]} : vector<2x384xf32> to vector<2x128xf32>
    %298 = math.tanh %296 : vector<2x128xf32>
    %299 = arith.mulf %297, %298 : vector<2x128xf32>
    %300 = vector.extract_strided_slice %212 {offsets = [8, 0], sizes = [2, 512], strides = [1, 1]} : vector<16x512xf32> to vector<2x512xf32>
    %301 = vector.extract_strided_slice %212 {offsets = [6, 0], sizes = [2, 512], strides = [1, 1]} : vector<16x512xf32> to vector<2x512xf32>
    %302 = arith.select %18, %300, %301 : vector<2x512xi1>, vector<2x512xf32>
    %cst_46 = arith.constant dense<0.000000e+00> : vector<2x512xf32>
    %303 = tpu.matmul %299, %213, %cst_46 {dimension_numbers = #tpu.dot_dimension_numbers<[1], [0], [0], [1], [0, 0, 1, 1], [], []>} : vector<2x128xf32>, vector<128x512xf32>, vector<2x512xf32> -> vector<2x512xf32>
    %304 = arith.addf %302, %303 : vector<2x512xf32>
    %305 = vector.extract_strided_slice %304 {offsets = [0, 0], sizes = [2, 384], strides = [1, 1]} : vector<2x512xf32> to vector<2x384xf32>
    %306 = arith.negf %305 : vector<2x384xf32>
    %307 = math.exp %306 : vector<2x384xf32>
    %cst_47 = arith.constant 1.000000e+00 : f32
    %308 = vector.broadcast %cst_47 : f32 to vector<2x384xf32>
    %309 = arith.addf %308, %307 : vector<2x384xf32>
    %310 = arith.divf %308, %309 : vector<2x384xf32>
    %311 = vector.extract_strided_slice %304 {offsets = [0, 384], sizes = [2, 128], strides = [1, 1]} : vector<2x512xf32> to vector<2x128xf32>
    %312 = math.tanh %311 : vector<2x128xf32>
    %313 = vector.extract_strided_slice %310 {offsets = [0, 128], sizes = [2, 128], strides = [1, 1]} : vector<2x384xf32> to vector<2x128xf32>
    %314 = arith.mulf %313, %296 : vector<2x128xf32>
    %315 = vector.extract_strided_slice %310 {offsets = [0, 0], sizes = [2, 128], strides = [1, 1]} : vector<2x384xf32> to vector<2x128xf32>
    %316 = arith.mulf %315, %312 : vector<2x128xf32>
    %317 = arith.addf %314, %316 : vector<2x128xf32>
    %318 = vector.extract_strided_slice %310 {offsets = [0, 256], sizes = [2, 128], strides = [1, 1]} : vector<2x384xf32> to vector<2x128xf32>
    %319 = math.tanh %317 : vector<2x128xf32>
    %320 = arith.mulf %318, %319 : vector<2x128xf32>
    %321 = vector.extract_strided_slice %212 {offsets = [10, 0], sizes = [2, 512], strides = [1, 1]} : vector<16x512xf32> to vector<2x512xf32>
    %322 = vector.extract_strided_slice %212 {offsets = [4, 0], sizes = [2, 512], strides = [1, 1]} : vector<16x512xf32> to vector<2x512xf32>
    %323 = arith.select %18, %321, %322 : vector<2x512xi1>, vector<2x512xf32>
    %cst_48 = arith.constant dense<0.000000e+00> : vector<2x512xf32>
    %324 = tpu.matmul %320, %213, %cst_48 {dimension_numbers = #tpu.dot_dimension_numbers<[1], [0], [0], [1], [0, 0, 1, 1], [], []>} : vector<2x128xf32>, vector<128x512xf32>, vector<2x512xf32> -> vector<2x512xf32>
    %325 = arith.addf %323, %324 : vector<2x512xf32>
    %326 = vector.extract_strided_slice %325 {offsets = [0, 0], sizes = [2, 384], strides = [1, 1]} : vector<2x512xf32> to vector<2x384xf32>
    %327 = arith.negf %326 : vector<2x384xf32>
    %328 = math.exp %327 : vector<2x384xf32>
    %cst_49 = arith.constant 1.000000e+00 : f32
    %329 = vector.broadcast %cst_49 : f32 to vector<2x384xf32>
    %330 = arith.addf %329, %328 : vector<2x384xf32>
    %331 = arith.divf %329, %330 : vector<2x384xf32>
    %332 = vector.extract_strided_slice %325 {offsets = [0, 384], sizes = [2, 128], strides = [1, 1]} : vector<2x512xf32> to vector<2x128xf32>
    %333 = math.tanh %332 : vector<2x128xf32>
    %334 = vector.extract_strided_slice %331 {offsets = [0, 128], sizes = [2, 128], strides = [1, 1]} : vector<2x384xf32> to vector<2x128xf32>
    %335 = arith.mulf %334, %317 : vector<2x128xf32>
    %336 = vector.extract_strided_slice %331 {offsets = [0, 0], sizes = [2, 128], strides = [1, 1]} : vector<2x384xf32> to vector<2x128xf32>
    %337 = arith.mulf %336, %333 : vector<2x128xf32>
    %338 = arith.addf %335, %337 : vector<2x128xf32>
    %339 = vector.extract_strided_slice %331 {offsets = [0, 256], sizes = [2, 128], strides = [1, 1]} : vector<2x384xf32> to vector<2x128xf32>
    %340 = math.tanh %338 : vector<2x128xf32>
    %341 = arith.mulf %339, %340 : vector<2x128xf32>
    %342 = vector.extract_strided_slice %212 {offsets = [12, 0], sizes = [2, 512], strides = [1, 1]} : vector<16x512xf32> to vector<2x512xf32>
    %343 = vector.extract_strided_slice %212 {offsets = [2, 0], sizes = [2, 512], strides = [1, 1]} : vector<16x512xf32> to vector<2x512xf32>
    %344 = arith.select %18, %342, %343 : vector<2x512xi1>, vector<2x512xf32>
    %cst_50 = arith.constant dense<0.000000e+00> : vector<2x512xf32>
    %345 = tpu.matmul %341, %213, %cst_50 {dimension_numbers = #tpu.dot_dimension_numbers<[1], [0], [0], [1], [0, 0, 1, 1], [], []>} : vector<2x128xf32>, vector<128x512xf32>, vector<2x512xf32> -> vector<2x512xf32>
    %346 = arith.addf %344, %345 : vector<2x512xf32>
    %347 = vector.extract_strided_slice %346 {offsets = [0, 0], sizes = [2, 384], strides = [1, 1]} : vector<2x512xf32> to vector<2x384xf32>
    %348 = arith.negf %347 : vector<2x384xf32>
    %349 = math.exp %348 : vector<2x384xf32>
    %cst_51 = arith.constant 1.000000e+00 : f32
    %350 = vector.broadcast %cst_51 : f32 to vector<2x384xf32>
    %351 = arith.addf %350, %349 : vector<2x384xf32>
    %352 = arith.divf %350, %351 : vector<2x384xf32>
    %353 = vector.extract_strided_slice %346 {offsets = [0, 384], sizes = [2, 128], strides = [1, 1]} : vector<2x512xf32> to vector<2x128xf32>
    %354 = math.tanh %353 : vector<2x128xf32>
    %355 = vector.extract_strided_slice %352 {offsets = [0, 128], sizes = [2, 128], strides = [1, 1]} : vector<2x384xf32> to vector<2x128xf32>
    %356 = arith.mulf %355, %338 : vector<2x128xf32>
    %357 = vector.extract_strided_slice %352 {offsets = [0, 0], sizes = [2, 128], strides = [1, 1]} : vector<2x384xf32> to vector<2x128xf32>
    %358 = arith.mulf %357, %354 : vector<2x128xf32>
    %359 = arith.addf %356, %358 : vector<2x128xf32>
    %360 = vector.extract_strided_slice %352 {offsets = [0, 256], sizes = [2, 128], strides = [1, 1]} : vector<2x384xf32> to vector<2x128xf32>
    %361 = math.tanh %359 : vector<2x128xf32>
    %362 = arith.mulf %360, %361 : vector<2x128xf32>
    %363 = vector.extract_strided_slice %212 {offsets = [14, 0], sizes = [2, 512], strides = [1, 1]} : vector<16x512xf32> to vector<2x512xf32>
    %364 = vector.extract_strided_slice %212 {offsets = [0, 0], sizes = [2, 512], strides = [1, 1]} : vector<16x512xf32> to vector<2x512xf32>
    %365 = arith.select %18, %363, %364 : vector<2x512xi1>, vector<2x512xf32>
    %cst_52 = arith.constant dense<0.000000e+00> : vector<2x512xf32>
    %366 = tpu.matmul %362, %213, %cst_52 {dimension_numbers = #tpu.dot_dimension_numbers<[1], [0], [0], [1], [0, 0, 1, 1], [], []>} : vector<2x128xf32>, vector<128x512xf32>, vector<2x512xf32> -> vector<2x512xf32>
    %367 = arith.addf %365, %366 : vector<2x512xf32>
    %368 = vector.extract_strided_slice %367 {offsets = [0, 0], sizes = [2, 384], strides = [1, 1]} : vector<2x512xf32> to vector<2x384xf32>
    %369 = arith.negf %368 : vector<2x384xf32>
    %370 = math.exp %369 : vector<2x384xf32>
    %cst_53 = arith.constant 1.000000e+00 : f32
    %371 = vector.broadcast %cst_53 : f32 to vector<2x384xf32>
    %372 = arith.addf %371, %370 : vector<2x384xf32>
    %373 = arith.divf %371, %372 : vector<2x384xf32>
    %374 = vector.extract_strided_slice %367 {offsets = [0, 384], sizes = [2, 128], strides = [1, 1]} : vector<2x512xf32> to vector<2x128xf32>
    %375 = math.tanh %374 : vector<2x128xf32>
    %376 = vector.extract_strided_slice %373 {offsets = [0, 128], sizes = [2, 128], strides = [1, 1]} : vector<2x384xf32> to vector<2x128xf32>
    %377 = arith.mulf %376, %359 : vector<2x128xf32>
    %378 = vector.extract_strided_slice %373 {offsets = [0, 0], sizes = [2, 128], strides = [1, 1]} : vector<2x384xf32> to vector<2x128xf32>
    %379 = arith.mulf %378, %375 : vector<2x128xf32>
    %380 = arith.addf %377, %379 : vector<2x128xf32>
    %381 = vector.extract_strided_slice %373 {offsets = [0, 256], sizes = [2, 128], strides = [1, 1]} : vector<2x384xf32> to vector<2x128xf32>
    %382 = math.tanh %380 : vector<2x128xf32>
    %383 = arith.mulf %381, %382 : vector<2x128xf32>
    %384 = arith.select %21, %236, %383 : vector<2x128xi1>, vector<2x128xf32>
    %385 = arith.select %21, %257, %362 : vector<2x128xi1>, vector<2x128xf32>
    %386 = arith.select %21, %278, %341 : vector<2x128xi1>, vector<2x128xf32>
    %387 = arith.select %21, %299, %320 : vector<2x128xi1>, vector<2x128xf32>
    %388 = arith.select %21, %320, %299 : vector<2x128xi1>, vector<2x128xf32>
    %389 = arith.select %21, %341, %278 : vector<2x128xi1>, vector<2x128xf32>
    %390 = arith.select %21, %362, %257 : vector<2x128xi1>, vector<2x128xf32>
    %391 = arith.select %21, %383, %236 : vector<2x128xi1>, vector<2x128xf32>
    %c0_54 = arith.constant 0 : index
    %c0_55 = arith.constant 0 : index
    %392 = vector.load %arg8[%c0_54, %c0_55] : memref<1x128xf32, #tpu.memory_space<vmem>>, vector<1x128xf32>
    %c0_56 = arith.constant 0 : index
    %c0_57 = arith.constant 0 : index
    %393 = vector.load %arg9[%c0_56, %c0_57] : memref<1x1xf32, #tpu.memory_space<vmem>>, vector<1x1xf32>
    %394 = vector.broadcast %392 : vector<1x128xf32> to vector<2x128xf32>
    %395 = arith.mulf %384, %394 : vector<2x128xf32>
    %cst_58 = arith.constant dense<0.000000e+00> : vector<2xf32>
    %396 = vector.multi_reduction <add>, %395, %cst_58 [1] : vector<2x128xf32> to vector<2xf32>
    %397 = vector.shape_cast %396 : vector<2xf32> to vector<2x1xf32>
    %398 = vector.broadcast %393 : vector<1x1xf32> to vector<2x1xf32>
    %399 = arith.addf %397, %398 : vector<2x1xf32>
    %400 = vector.broadcast %392 : vector<1x128xf32> to vector<2x128xf32>
    %401 = arith.mulf %385, %400 : vector<2x128xf32>
    %cst_59 = arith.constant dense<0.000000e+00> : vector<2xf32>
    %402 = vector.multi_reduction <add>, %401, %cst_59 [1] : vector<2x128xf32> to vector<2xf32>
    %403 = vector.shape_cast %402 : vector<2xf32> to vector<2x1xf32>
    %404 = vector.broadcast %393 : vector<1x1xf32> to vector<2x1xf32>
    %405 = arith.addf %403, %404 : vector<2x1xf32>
    %406 = vector.broadcast %392 : vector<1x128xf32> to vector<2x128xf32>
    %407 = arith.mulf %386, %406 : vector<2x128xf32>
    %cst_60 = arith.constant dense<0.000000e+00> : vector<2xf32>
    %408 = vector.multi_reduction <add>, %407, %cst_60 [1] : vector<2x128xf32> to vector<2xf32>
    %409 = vector.shape_cast %408 : vector<2xf32> to vector<2x1xf32>
    %410 = vector.broadcast %393 : vector<1x1xf32> to vector<2x1xf32>
    %411 = arith.addf %409, %410 : vector<2x1xf32>
    %412 = vector.broadcast %392 : vector<1x128xf32> to vector<2x128xf32>
    %413 = arith.mulf %387, %412 : vector<2x128xf32>
    %cst_61 = arith.constant dense<0.000000e+00> : vector<2xf32>
    %414 = vector.multi_reduction <add>, %413, %cst_61 [1] : vector<2x128xf32> to vector<2xf32>
    %415 = vector.shape_cast %414 : vector<2xf32> to vector<2x1xf32>
    %416 = vector.broadcast %393 : vector<1x1xf32> to vector<2x1xf32>
    %417 = arith.addf %415, %416 : vector<2x1xf32>
    %418 = vector.broadcast %392 : vector<1x128xf32> to vector<2x128xf32>
    %419 = arith.mulf %388, %418 : vector<2x128xf32>
    %cst_62 = arith.constant dense<0.000000e+00> : vector<2xf32>
    %420 = vector.multi_reduction <add>, %419, %cst_62 [1] : vector<2x128xf32> to vector<2xf32>
    %421 = vector.shape_cast %420 : vector<2xf32> to vector<2x1xf32>
    %422 = vector.broadcast %393 : vector<1x1xf32> to vector<2x1xf32>
    %423 = arith.addf %421, %422 : vector<2x1xf32>
    %424 = vector.broadcast %392 : vector<1x128xf32> to vector<2x128xf32>
    %425 = arith.mulf %389, %424 : vector<2x128xf32>
    %cst_63 = arith.constant dense<0.000000e+00> : vector<2xf32>
    %426 = vector.multi_reduction <add>, %425, %cst_63 [1] : vector<2x128xf32> to vector<2xf32>
    %427 = vector.shape_cast %426 : vector<2xf32> to vector<2x1xf32>
    %428 = vector.broadcast %393 : vector<1x1xf32> to vector<2x1xf32>
    %429 = arith.addf %427, %428 : vector<2x1xf32>
    %430 = vector.broadcast %392 : vector<1x128xf32> to vector<2x128xf32>
    %431 = arith.mulf %390, %430 : vector<2x128xf32>
    %cst_64 = arith.constant dense<0.000000e+00> : vector<2xf32>
    %432 = vector.multi_reduction <add>, %431, %cst_64 [1] : vector<2x128xf32> to vector<2xf32>
    %433 = vector.shape_cast %432 : vector<2xf32> to vector<2x1xf32>
    %434 = vector.broadcast %393 : vector<1x1xf32> to vector<2x1xf32>
    %435 = arith.addf %433, %434 : vector<2x1xf32>
    %436 = vector.broadcast %392 : vector<1x128xf32> to vector<2x128xf32>
    %437 = arith.mulf %391, %436 : vector<2x128xf32>
    %cst_65 = arith.constant dense<0.000000e+00> : vector<2xf32>
    %438 = vector.multi_reduction <add>, %437, %cst_65 [1] : vector<2x128xf32> to vector<2xf32>
    %439 = vector.shape_cast %438 : vector<2xf32> to vector<2x1xf32>
    %440 = vector.broadcast %393 : vector<1x1xf32> to vector<2x1xf32>
    %441 = arith.addf %439, %440 : vector<2x1xf32>
    %442 = arith.maximumf %399, %405 : vector<2x1xf32>
    %443 = arith.maximumf %442, %411 : vector<2x1xf32>
    %444 = arith.maximumf %443, %417 : vector<2x1xf32>
    %445 = arith.maximumf %444, %423 : vector<2x1xf32>
    %446 = arith.maximumf %445, %429 : vector<2x1xf32>
    %447 = arith.maximumf %446, %435 : vector<2x1xf32>
    %448 = arith.maximumf %447, %441 : vector<2x1xf32>
    %449 = arith.subf %399, %448 : vector<2x1xf32>
    %450 = math.exp %449 : vector<2x1xf32>
    %451 = arith.subf %405, %448 : vector<2x1xf32>
    %452 = math.exp %451 : vector<2x1xf32>
    %453 = arith.subf %411, %448 : vector<2x1xf32>
    %454 = math.exp %453 : vector<2x1xf32>
    %455 = arith.subf %417, %448 : vector<2x1xf32>
    %456 = math.exp %455 : vector<2x1xf32>
    %457 = arith.subf %423, %448 : vector<2x1xf32>
    %458 = math.exp %457 : vector<2x1xf32>
    %459 = arith.subf %429, %448 : vector<2x1xf32>
    %460 = math.exp %459 : vector<2x1xf32>
    %461 = arith.subf %435, %448 : vector<2x1xf32>
    %462 = math.exp %461 : vector<2x1xf32>
    %463 = arith.subf %441, %448 : vector<2x1xf32>
    %464 = math.exp %463 : vector<2x1xf32>
    %465 = arith.addf %450, %452 : vector<2x1xf32>
    %466 = arith.addf %465, %454 : vector<2x1xf32>
    %467 = arith.addf %466, %456 : vector<2x1xf32>
    %468 = arith.addf %467, %458 : vector<2x1xf32>
    %469 = arith.addf %468, %460 : vector<2x1xf32>
    %470 = arith.addf %469, %462 : vector<2x1xf32>
    %471 = arith.addf %470, %464 : vector<2x1xf32>
    %472 = tpu.reciprocal %471 {approx = true} : vector<2x1xf32> -> vector<2x1xf32>
    %473 = arith.mulf %450, %472 : vector<2x1xf32>
    %474 = vector.broadcast %473 : vector<2x1xf32> to vector<2x128xf32>
    %475 = arith.mulf %474, %384 : vector<2x128xf32>
    %476 = arith.mulf %452, %472 : vector<2x1xf32>
    %477 = vector.broadcast %476 : vector<2x1xf32> to vector<2x128xf32>
    %478 = arith.mulf %477, %385 : vector<2x128xf32>
    %479 = arith.addf %475, %478 : vector<2x128xf32>
    %480 = arith.mulf %454, %472 : vector<2x1xf32>
    %481 = vector.broadcast %480 : vector<2x1xf32> to vector<2x128xf32>
    %482 = arith.mulf %481, %386 : vector<2x128xf32>
    %483 = arith.addf %479, %482 : vector<2x128xf32>
    %484 = arith.mulf %456, %472 : vector<2x1xf32>
    %485 = vector.broadcast %484 : vector<2x1xf32> to vector<2x128xf32>
    %486 = arith.mulf %485, %387 : vector<2x128xf32>
    %487 = arith.addf %483, %486 : vector<2x128xf32>
    %488 = arith.mulf %458, %472 : vector<2x1xf32>
    %489 = vector.broadcast %488 : vector<2x1xf32> to vector<2x128xf32>
    %490 = arith.mulf %489, %388 : vector<2x128xf32>
    %491 = arith.addf %487, %490 : vector<2x128xf32>
    %492 = arith.mulf %460, %472 : vector<2x1xf32>
    %493 = vector.broadcast %492 : vector<2x1xf32> to vector<2x128xf32>
    %494 = arith.mulf %493, %389 : vector<2x128xf32>
    %495 = arith.addf %491, %494 : vector<2x128xf32>
    %496 = arith.mulf %462, %472 : vector<2x1xf32>
    %497 = vector.broadcast %496 : vector<2x1xf32> to vector<2x128xf32>
    %498 = arith.mulf %497, %390 : vector<2x128xf32>
    %499 = arith.addf %495, %498 : vector<2x128xf32>
    %500 = arith.mulf %464, %472 : vector<2x1xf32>
    %501 = vector.broadcast %500 : vector<2x1xf32> to vector<2x128xf32>
    %502 = arith.mulf %501, %391 : vector<2x128xf32>
    %503 = arith.addf %499, %502 : vector<2x128xf32>
    %c0_66 = arith.constant 0 : index
    %c0_67 = arith.constant 0 : index
    %504 = vector.load %arg10[%c0_66, %c0_67] : memref<128x128xf32, #tpu.memory_space<vmem>>, vector<128x128xf32>
    %cst_68 = arith.constant dense<0.000000e+00> : vector<2x128xf32>
    %505 = tpu.matmul %503, %504, %cst_68 {dimension_numbers = #tpu.dot_dimension_numbers<[1], [0], [0], [1], [0, 0, 1, 1], [], []>} : vector<2x128xf32>, vector<128x128xf32>, vector<2x128xf32> -> vector<2x128xf32>
    %c0_69 = arith.constant 0 : index
    %c0_70 = arith.constant 0 : index
    %506 = vector.load %arg11[%c0_69, %c0_70] : memref<1x128xf32, #tpu.memory_space<vmem>>, vector<1x128xf32>
    %507 = vector.broadcast %506 : vector<1x128xf32> to vector<2x128xf32>
    %508 = arith.addf %505, %507 : vector<2x128xf32>
    %cst_71 = arith.constant 0.000000e+00 : f32
    %509 = vector.broadcast %cst_71 : f32 to vector<2x128xf32>
    %510 = arith.cmpf ogt, %508, %509 : vector<2x128xf32>
    %cst_72 = arith.constant 0.00999999977 : f32
    %511 = vector.broadcast %cst_72 : f32 to vector<2x128xf32>
    %512 = arith.mulf %511, %508 : vector<2x128xf32>
    %513 = arith.select %510, %508, %512 : vector<2x128xi1>, vector<2x128xf32>
    %c0_73 = arith.constant 0 : index
    %c0_74 = arith.constant 0 : index
    %514 = vector.load %arg12[%c0_73, %c0_74] : memref<128x128xf32, #tpu.memory_space<vmem>>, vector<128x128xf32>
    %cst_75 = arith.constant dense<0.000000e+00> : vector<2x128xf32>
    %515 = tpu.matmul %513, %514, %cst_75 {dimension_numbers = #tpu.dot_dimension_numbers<[1], [0], [0], [1], [0, 0, 1, 1], [], []>} : vector<2x128xf32>, vector<128x128xf32>, vector<2x128xf32> -> vector<2x128xf32>
    %c0_76 = arith.constant 0 : index
    %c0_77 = arith.constant 0 : index
    %516 = vector.load %arg13[%c0_76, %c0_77] : memref<1x128xf32, #tpu.memory_space<vmem>>, vector<1x128xf32>
    %517 = vector.broadcast %516 : vector<1x128xf32> to vector<2x128xf32>
    %518 = arith.addf %515, %517 : vector<2x128xf32>
    %cst_78 = arith.constant 0.000000e+00 : f32
    %519 = vector.broadcast %cst_78 : f32 to vector<2x128xf32>
    %520 = arith.cmpf ogt, %518, %519 : vector<2x128xf32>
    %cst_79 = arith.constant 0.00999999977 : f32
    %521 = vector.broadcast %cst_79 : f32 to vector<2x128xf32>
    %522 = arith.mulf %521, %518 : vector<2x128xf32>
    %523 = arith.select %520, %518, %522 : vector<2x128xi1>, vector<2x128xf32>
    %c0_80 = arith.constant 0 : index
    %c0_81 = arith.constant 0 : index
    %524 = vector.load %arg14[%c0_80, %c0_81] : memref<128x3xf32, #tpu.memory_space<vmem>>, vector<128x3xf32>
    %cst_82 = arith.constant dense<0.000000e+00> : vector<2x3xf32>
    %525 = tpu.matmul %523, %524, %cst_82 {dimension_numbers = #tpu.dot_dimension_numbers<[1], [0], [0], [1], [0, 0, 1, 1], [], []>} : vector<2x128xf32>, vector<128x3xf32>, vector<2x3xf32> -> vector<2x3xf32>
    %c0_83 = arith.constant 0 : index
    %c0_84 = arith.constant 0 : index
    %526 = vector.load %arg15[%c0_83, %c0_84] : memref<1x3xf32, #tpu.memory_space<vmem>>, vector<1x3xf32>
    %527 = vector.broadcast %526 : vector<1x3xf32> to vector<2x3xf32>
    %528 = arith.addf %525, %527 : vector<2x3xf32>
    %cst_85 = arith.constant dense<0xFF800000> : vector<2xf32>
    %529 = vector.multi_reduction <maximumf>, %528, %cst_85 [1] : vector<2x3xf32> to vector<2xf32>
    %530 = vector.shape_cast %529 : vector<2xf32> to vector<2x1xf32>
    %531 = vector.broadcast %530 : vector<2x1xf32> to vector<2x3xf32>
    %532 = arith.subf %528, %531 : vector<2x3xf32>
    %533 = math.exp %532 : vector<2x3xf32>
    %cst_86 = arith.constant dense<0.000000e+00> : vector<2xf32>
    %534 = vector.multi_reduction <add>, %533, %cst_86 [1] : vector<2x3xf32> to vector<2xf32>
    %535 = vector.shape_cast %534 : vector<2xf32> to vector<2x1xf32>
    %536 = vector.broadcast %535 : vector<2x1xf32> to vector<2x3xf32>
    %537 = arith.divf %533, %536 : vector<2x3xf32>
    %c0_87 = arith.constant 0 : index
    %c0_88 = arith.constant 0 : index
    %538 = vector.load %arg16[%c0_87, %c0_88] : memref<2x3xf32, #tpu.memory_space<vmem>>, vector<2x3xf32>
    tpu.vector_store %arg16[%c0_87, %c0_88], %537 {strides = array<i32>} : memref<2x3xf32, #tpu.memory_space<vmem>>, vector<2x3xf32>,
    return
  }
  func.func @transform_0(%arg0: i32) -> (i32, i32) {
    %c0_i32 = arith.constant 0 : i32
    %c0_i32_0 = arith.constant 0 : i32
    %c0_i32_1 = arith.constant 0 : i32
    return %c0_i32, %c0_i32_0 : i32, i32
  }
  func.func @transform_1(%arg0: i32) -> (i32, i32) {
    %c0_i32 = arith.constant 0 : i32
    %c0_i32_0 = arith.constant 0 : i32
    %c0_i32_1 = arith.constant 0 : i32
    return %c0_i32, %c0_i32_0 : i32, i32
  }
  func.func @transform_2(%arg0: i32) -> (i32, i32) {
    %c0_i32 = arith.constant 0 : i32
    %c0_i32_0 = arith.constant 0 : i32
    %c0_i32_1 = arith.constant 0 : i32
    return %c0_i32, %c0_i32_0 : i32, i32
  }
  func.func @transform_3(%arg0: i32) -> (i32, i32) {
    %c0_i32 = arith.constant 0 : i32
    %c0_i32_0 = arith.constant 0 : i32
    %c0_i32_1 = arith.constant 0 : i32
    return %c0_i32, %c0_i32_0 : i32, i32
  }
  func.func @transform_4(%arg0: i32) -> (i32, i32) {
    %c0_i32 = arith.constant 0 : i32
    %c0_i32_0 = arith.constant 0 : i32
    %c0_i32_1 = arith.constant 0 : i32
    return %c0_i32, %c0_i32_0 : i32, i32
  }
  func.func @transform_5(%arg0: i32) -> (i32, i32) {
    %c0_i32 = arith.constant 0 : i32
    %c0_i32_0 = arith.constant 0 : i32
    %c0_i32_1 = arith.constant 0 : i32
    return %c0_i32, %c0_i32_0 : i32, i32
  }
  func.func @transform_6(%arg0: i32) -> (i32, i32) {
    %c0_i32 = arith.constant 0 : i32
    %c0_i32_0 = arith.constant 0 : i32
    %c0_i32_1 = arith.constant 0 : i32
    return %c0_i32, %c0_i32_0 : i32, i32
  }
  func.func @transform_7(%arg0: i32) -> (i32, i32) {
    %c0_i32 = arith.constant 0 : i32
    %c0_i32_0 = arith.constant 0 : i32
    %c0_i32_1 = arith.constant 0 : i32
    return %c0_i32, %c0_i32_0 : i32, i32
  }
  func.func @transform_8(%arg0: i32) -> (i32, i32) {
    %c0_i32 = arith.constant 0 : i32
    %c0_i32_0 = arith.constant 0 : i32
    %c0_i32_1 = arith.constant 0 : i32
    return %c0_i32, %c0_i32_0 : i32, i32
  }
  func.func @transform_9(%arg0: i32) -> (i32, i32) {
    %c0_i32 = arith.constant 0 : i32
    %c0_i32_0 = arith.constant 0 : i32
    %c0_i32_1 = arith.constant 0 : i32
    return %c0_i32, %c0_i32_0 : i32, i32
  }
  func.func @transform_10(%arg0: i32) -> (i32, i32) {
    %c0_i32 = arith.constant 0 : i32
    %c0_i32_0 = arith.constant 0 : i32
    %c0_i32_1 = arith.constant 0 : i32
    return %c0_i32, %c0_i32_0 : i32, i32
  }
  func.func @transform_11(%arg0: i32) -> (i32, i32) {
    %c0_i32 = arith.constant 0 : i32
    %c0_i32_0 = arith.constant 0 : i32
    %c0_i32_1 = arith.constant 0 : i32
    return %c0_i32, %c0_i32_0 : i32, i32
  }
  func.func @transform_12(%arg0: i32) -> (i32, i32) {
    %c0_i32 = arith.constant 0 : i32
    %c0_i32_0 = arith.constant 0 : i32
    %c0_i32_1 = arith.constant 0 : i32
    return %c0_i32, %c0_i32_0 : i32, i32
  }
  func.func @transform_13(%arg0: i32) -> (i32, i32) {
    %c0_i32 = arith.constant 0 : i32
    %c0_i32_0 = arith.constant 0 : i32
    %c0_i32_1 = arith.constant 0 : i32
    return %c0_i32, %c0_i32_0 : i32, i32
  }
  func.func @transform_14(%arg0: i32) -> (i32, i32) {
    %c0_i32 = arith.constant 0 : i32
    %c0_i32_0 = arith.constant 0 : i32
    %c0_i32_1 = arith.constant 0 : i32
    return %c0_i32, %c0_i32_0 : i32, i32
  }
  func.func @transform_15(%arg0: i32) -> (i32, i32) {
    %c0_i32 = arith.constant 0 : i32
    %c0_i32_0 = arith.constant 0 : i32
    %c0_i32_1 = arith.constant 0 : i32
    return %c0_i32, %c0_i32_0 : i32, i32
  }
}

</mosaic_0001>

<llo_original>
// kernel: forward.1
$region0: #{forward.1}
  #allocation0 [shape = 'u32[]', space=smem, size = 0x4, offset = 0x4, fixed_abs, tag = 'smem constant byte address 0x4 - core index']
  #allocation1 [shape = 'u32[144,128]{1,0:T(1,128)}', space=vmem, size = 0x12000, scoped, tag = 'internal scratch']
  #allocation2 [shape = 'f32[1,1]{1,0:T(1,128)S(1)}', space=vmem, size = 0x200, scoped, tag = 'scoped memory for forward.1']
  %s0 = inlined_call_operand.vmem [shape: f32[16,40], index: 0, kind: input, shape index: {}]
  %s1 = inlined_call_operand.vmem [shape: f32[40,512], index: 1, kind: input, shape index: {}]
  %s2 = inlined_call_operand.hbm [shape: f32[128,512], index: 2, kind: input, shape index: {}]
  %s3 = inlined_call_operand.vmem [shape: f32[1,512], index: 3, kind: input, shape index: {}]
  %s4 = inlined_call_operand.hbm [shape: f32[128,512], index: 4, kind: input, shape index: {}]
  %s5 = inlined_call_operand.hbm [shape: f32[128,512], index: 5, kind: input, shape index: {}]
  %s6 = inlined_call_operand.vmem [shape: f32[1,512], index: 6, kind: input, shape index: {}]
  %s7 = inlined_call_operand.vmem [shape: f32[1,128], index: 7, kind: input, shape index: {}]
  %s8 = inlined_call_operand.<no memory space> [shape: f32[1,1], index: 8, kind: input, shape index: {}]
  %s9 = inlined_call_operand.hbm [shape: f32[128,128], index: 9, kind: input, shape index: {}]
  %s10 = inlined_call_operand.vmem [shape: f32[1,128], index: 10, kind: input, shape index: {}]
  %s11 = inlined_call_operand.hbm [shape: f32[128,128], index: 11, kind: input, shape index: {}]
  %s12 = inlined_call_operand.vmem [shape: f32[1,128], index: 12, kind: input, shape index: {}]
  %s13 = inlined_call_operand.vmem [shape: f32[128,3], index: 13, kind: input, shape index: {}]
  %s14 = inlined_call_operand.vmem [shape: f32[1,3], index: 14, kind: input, shape index: {}]
  %s15 = inlined_call_operand.hbm [shape: f32[2,3], index: 15, kind: output, shape index: {}]
  %s16 = sld [smem:[#allocation0]]
  $region90: #{forward.1} parent=0
    _
  %s18 = ssub.s32 1, %s16
  %s19 = scalar_select 0, %s18, %s16
  %v20 = vstv %s8
  %21 = vst [vmem:[#allocation2] sm:$0x1] %v20
  $region1: #{forward.1} parent=0
    #allocation3 [shape = 'u8[262144]{0}', space=vmem, size = 0x40000, scoped, tag = 'input window, operand 2, single buffered']
    #allocation4 [shape = 's32[1]{0}', space=sflag, size = 0x4, scoped, tag = 'scoped memory for forward.1']
    #allocation5 [shape = 's32[1]{0}', space=sflag, size = 0x4, scoped, tag = 'scoped memory for forward.1']
    #allocation6 [shape = 'u8[262144]{0}', space=vmem, size = 0x40000, scoped, tag = 'input window, operand 4, single buffered']
    #allocation7 [shape = 's32[1]{0}', space=sflag, size = 0x4, scoped, tag = 'scoped memory for forward.1']
    #allocation8 [shape = 'u8[262144]{0}', space=vmem, size = 0x40000, scoped, tag = 'input window, operand 5, single buffered']
    #allocation9 [shape = 'u8[65536]{0}', space=vmem, size = 0x10000, scoped, tag = 'input window, operand 9, single buffered']
    #allocation10 [shape = 's32[1]{0}', space=sflag, size = 0x4, scoped, tag = 'scoped memory for forward.1']
    #allocation11 [shape = 'u8[65536]{0}', space=vmem, size = 0x10000, scoped, tag = 'input window, operand 11, single buffered']
    #allocation12 [shape = 'u8[1024]{0}', space=vmem, size = 0x400, scoped, tag = 'output window, operand 0, single buffered']
    %22 = vsyncpa [#allocation4], 0
    %23 = vsyncpa [#allocation7], 0
    %24 = vsyncpa [#allocation10], 0
    %25 = vsyncpa [#allocation5], 0
    // Predicated region
    $region2: #{forward.1} parent=1 // pred_check
      _
    $region3: #{forward.1} parent=1 // pred_check_branch
      %27 = sbr.rel (0) target = $region5
    $region4: #{forward.1} parent=1 // pred_region
      _
    $region5: #{forward.1} parent=1 // pred_fallthru
      _
    // Predicated region
    $region6: #{forward.1} parent=1 // pred_check
      _
    $region7: #{forward.1} parent=1 // pred_check_branch
      %29 = sbr.rel (0) target = $region9
    $region8: #{forward.1} parent=1 // pred_region
      _
    $region9: #{forward.1} parent=1 // pred_fallthru
      _
    // Predicated region
    $region10: #{forward.1} parent=1 // pred_check
      _
    $region11: #{forward.1} parent=1 // pred_check_branch
      %31 = sbr.rel (0) target = $region13
    $region12: #{forward.1} parent=1 // pred_region
      %s33 = ssub.s32 8192, 8192
      %34 = vsyncadd [#allocation4], %s33
      %s35 = sshll.u32 [#allocation3], 4
      %s36 = int_to_ptr.vmem [resolvable:$true] %s35
      %41 = dma.hbm_to_vmem [thread:$0]  %s2, 8192, %s36, [#allocation4], 512, 512, 32
    $region13: #{forward.1} parent=1 // pred_fallthru
      _
    // Predicated region
    $region14: #{forward.1} parent=1 // pred_check
      _
    $region15: #{forward.1} parent=1 // pred_check_branch
      %43 = sbr.rel (0) target = $region17
    $region16: #{forward.1} parent=1 // pred_region
      _
    $region17: #{forward.1} parent=1 // pred_fallthru
      _
    // Predicated region
    $region18: #{forward.1} parent=1 // pred_check
      _
    $region19: #{forward.1} parent=1 // pred_check_branch
      %45 = sbr.rel (0) target = $region21
    $region20: #{forward.1} parent=1 // pred_region
      %s47 = ssub.s32 8192, 8192
      %48 = vsyncadd [#allocation7], %s47
      %s49 = sshll.u32 [#allocation6], 4
      %s50 = int_to_ptr.vmem [resolvable:$true] %s49
      %55 = dma.hbm_to_vmem [thread:$0]  %s4, 8192, %s50, [#allocation7], 512, 512, 32
    $region21: #{forward.1} parent=1 // pred_fallthru
      _
    // Predicated region
    $region22: #{forward.1} parent=1 // pred_check
      _
    $region23: #{forward.1} parent=1 // pred_check_branch
      %57 = sbr.rel (0) target = $region25
    $region24: #{forward.1} parent=1 // pred_region
      %s59 = ssub.s32 8192, 8192
      %60 = vsyncadd [#allocation7], %s59
      %s61 = sshll.u32 [#allocation8], 4
      %s62 = int_to_ptr.vmem [resolvable:$true] %s61
      %67 = dma.hbm_to_vmem [thread:$0]  %s5, 8192, %s62, [#allocation7], 512, 512, 32
    $region25: #{forward.1} parent=1 // pred_fallthru
      _
    // Predicated region
    $region26: #{forward.1} parent=1 // pred_check
      _
    $region27: #{forward.1} parent=1 // pred_check_branch
      %69 = sbr.rel (0) target = $region29
    $region28: #{forward.1} parent=1 // pred_region
      _
    $region29: #{forward.1} parent=1 // pred_fallthru
      _
    // Predicated region
    $region30: #{forward.1} parent=1 // pred_check
      _
    $region31: #{forward.1} parent=1 // pred_check_branch
      %71 = sbr.rel (0) target = $region33
    $region32: #{forward.1} parent=1 // pred_region
      _
    $region33: #{forward.1} parent=1 // pred_fallthru
      _
    // Predicated region
    $region34: #{forward.1} parent=1 // pred_check
      _
    $region35: #{forward.1} parent=1 // pred_check_branch
      %73 = sbr.rel (0) target = $region37
    $region36: #{forward.1} parent=1 // pred_region
      _
    $region37: #{forward.1} parent=1 // pred_fallthru
      _
    // Predicated region
    $region38: #{forward.1} parent=1 // pred_check
      _
    $region39: #{forward.1} parent=1 // pred_check_branch
      %75 = sbr.rel (0) target = $region41
    $region40: #{forward.1} parent=1 // pred_region
      %s77 = ssub.s32 2048, 2048
      %78 = vsyncadd [#allocation10], %s77
      %s79 = sshll.u32 [#allocation9], 4
      %s80 = int_to_ptr.vmem [resolvable:$true] %s79
      %85 = dma.hbm_to_vmem [thread:$0]  %s9, 2048, %s80, [#allocation10], 128, 128, 8
    $region41: #{forward.1} parent=1 // pred_fallthru
      _
    // Predicated region
    $region42: #{forward.1} parent=1 // pred_check
      _
    $region43: #{forward.1} parent=1 // pred_check_branch
      %87 = sbr.rel (0) target = $region45
    $region44: #{forward.1} parent=1 // pred_region
      _
    $region45: #{forward.1} parent=1 // pred_fallthru
      _
    // Predicated region
    $region46: #{forward.1} parent=1 // pred_check
      _
    $region47: #{forward.1} parent=1 // pred_check_branch
      %89 = sbr.rel (0) target = $region49
    $region48: #{forward.1} parent=1 // pred_region
      %s91 = ssub.s32 2048, 2048
      %92 = vsyncadd [#allocation10], %s91
      %s93 = sshll.u32 [#allocation11], 4
      %s94 = int_to_ptr.vmem [resolvable:$true] %s93
      %99 = dma.hbm_to_vmem [thread:$0]  %s11, 2048, %s94, [#allocation10], 128, 128, 8
    $region49: #{forward.1} parent=1 // pred_fallthru
      _
    // Predicated region
    $region50: #{forward.1} parent=1 // pred_check
      _
    $region51: #{forward.1} parent=1 // pred_check_branch
      %101 = sbr.rel (0) target = $region53
    $region52: #{forward.1} parent=1 // pred_region
      _
    $region53: #{forward.1} parent=1 // pred_fallthru
      _
    // Predicated region
    $region54: #{forward.1} parent=1 // pred_check
      _
    $region55: #{forward.1} parent=1 // pred_check_branch
      %103 = sbr.rel (0) target = $region57
    $region56: #{forward.1} parent=1 // pred_region
      _
    $region57: #{forward.1} parent=1 // pred_fallthru
      _
    // Predicated region
    $region58: #{forward.1} parent=1 // pred_check
      _
    $region59: #{forward.1} parent=1 // pred_check_branch
      %105 = sbr.rel (0) target = $region61
    $region60: #{forward.1} parent=1 // pred_region
      _
    $region61: #{forward.1} parent=1 // pred_fallthru
      _
    // Predicated region
    $region62: #{forward.1} parent=1 // pred_check
      _
    $region63: #{forward.1} parent=1 // pred_check_branch
      %107 = sbr.rel (0) target = $region65
    $region64: #{forward.1} parent=1 // pred_region
      %108 = dma.done [#allocation4], 8192
    $region65: #{forward.1} parent=1 // pred_fallthru
      _
    // Predicated region
    $region66: #{forward.1} parent=1 // pred_check
      _
    $region67: #{forward.1} parent=1 // pred_check_branch
      %110 = sbr.rel (0) target = $region69
    $region68: #{forward.1} parent=1 // pred_region
      %111 = dma.done [#allocation7], 8192
    $region69: #{forward.1} parent=1 // pred_fallthru
      _
    // Predicated region
    $region70: #{forward.1} parent=1 // pred_check
      _
    $region71: #{forward.1} parent=1 // pred_check_branch
      %113 = sbr.rel (0) target = $region73
    $region72: #{forward.1} parent=1 // pred_region
      %114 = dma.done [#allocation7], 8192
    $region73: #{forward.1} parent=1 // pred_fallthru
      _
    // Predicated region
    $region74: #{forward.1} parent=1 // pred_check
      _
    $region75: #{forward.1} parent=1 // pred_check_branch
      %116 = sbr.rel (0) target = $region77
    $region76: #{forward.1} parent=1 // pred_region
      %117 = dma.done [#allocation10], 2048
    $region77: #{forward.1} parent=1 // pred_fallthru
      _
    // Predicated region
    $region78: #{forward.1} parent=1 // pred_check
      _
    $region79: #{forward.1} parent=1 // pred_check_branch
      %119 = sbr.rel (0) target = $region81
    $region80: #{forward.1} parent=1 // pred_region
      %120 = dma.done [#allocation10], 2048
    $region81: #{forward.1} parent=1 // pred_fallthru
      _
    %v121 = vlaneseq
    %v122 = vand.u32 %v121, 127
    %v123 = vadd.s32 %v122, 128
    %v124 = vadd.s32 %v122, 256
    %v125 = vadd.s32 %v122, 384
    %vm126 = vcmp.lt.s32.totalorder %v122, 0
    %v127 = vsub.s32 0, %v122
    %v128 = vsel %vm126, %v127, %v122
    %v129 = vshrl.u32 %v128, 7
    %v130 = vand.u32 %v128, 127
    %v131 = vsub.s32 0, %v130
    %v132 = vsel %vm126, %v131, %v130
    %vm133 = vcmp.lt.s32.totalorder %v123, 0
    %v134 = vsub.s32 0, %v123
    %v135 = vsel %vm133, %v134, %v123
    %v136 = vshrl.u32 %v135, 7
    %v137 = vand.u32 %v135, 127
    %v138 = vsub.s32 0, %v137
    %v139 = vsel %vm133, %v138, %v137
    %vm140 = vcmp.lt.s32.totalorder %v124, 0
    %v141 = vsub.s32 0, %v124
    %v142 = vsel %vm140, %v141, %v124
    %v143 = vshrl.u32 %v142, 7
    %v144 = vand.u32 %v142, 127
    %v145 = vsub.s32 0, %v144
    %v146 = vsel %vm140, %v145, %v144
    %vm147 = vcmp.lt.s32.totalorder %v125, 0
    %v148 = vsub.s32 0, %v125
    %v149 = vsel %vm147, %v148, %v125
    %v150 = vshrl.u32 %v149, 7
    %v151 = vand.u32 %v149, 127
    %v152 = vsub.s32 0, %v151
    %v153 = vsel %vm147, %v152, %v151
    %vm154 = vcmp.ne.s32.totalorder %v132, 0
    %vm155 = vcmp.ne.s32.totalorder %v139, 0
    %vm156 = vcmp.ne.s32.totalorder %v146, 0
    %vm157 = vcmp.ne.s32.totalorder %v153, 0
    %vm158 = vcmp.lt.s32.totalorder %v132, 0
    %vm159 = vcmp.lt.s32.totalorder %v139, 0
    %vm160 = vcmp.lt.s32.totalorder %v146, 0
    %vm161 = vcmp.lt.s32.totalorder %v153, 0
    %vm162 = vmand %vm158, %vm154
    %vm163 = vmand %vm159, %vm155
    %vm164 = vmand %vm160, %vm156
    %vm165 = vmand %vm161, %vm157
    %v166 = vadd.s32 %v132, 128
    %v167 = vadd.s32 %v139, 128
    %v168 = vadd.s32 %v146, 128
    %v169 = vadd.s32 %v153, 128
    %v170 = vsel %vm162, %v166, %v132
    %v171 = vsel %vm163, %v167, %v139
    %v172 = vsel %vm164, %v168, %v146
    %v173 = vsel %vm165, %v169, %v153
    %vm174 = vcmp.lt.s32.totalorder %v170, 64
    %vm175 = vcmp.lt.s32.totalorder %v171, 64
    %vm176 = vcmp.lt.s32.totalorder %v172, 64
    %vm177 = vcmp.lt.s32.totalorder %v173, 64
    %vm178 = vcmp.lt.s32.totalorder %v122, 64
    %v179 = vld [vmem:[%s0] sm:$0xff]
    %v180 = vld [vmem:[%s0 + $0x8] sm:$0xff]
    %v181 = vld [vmem:[%s1] sm:$0xff]
    %v182 = vld [vmem:[%s1 + $0x8] sm:$0xff]
    %v183 = vld [vmem:[%s1 + $0x10] sm:$0xff]
    %v184 = vld [vmem:[%s1 + $0x18] sm:$0xff]
    %v185 = vld [vmem:[%s1 + $0x20] sm:$0xff]
    %v186 = vld [vmem:[%s1 + $0x28] sm:$0xff]
    %v187 = vld [vmem:[%s1 + $0x30] sm:$0xff]
    %v188 = vld [vmem:[%s1 + $0x38] sm:$0xff]
    %v189 = vld [vmem:[%s1 + $0x40] sm:$0xff]
    %v190 = vld [vmem:[%s1 + $0x48] sm:$0xff]
    %v191 = vld [vmem:[%s1 + $0x50] sm:$0xff]
    %v192 = vld [vmem:[%s1 + $0x58] sm:$0xff]
    %v193 = vld [vmem:[%s1 + $0x60] sm:$0xff]
    %v194 = vld [vmem:[%s1 + $0x68] sm:$0xff]
    %v195 = vld [vmem:[%s1 + $0x70] sm:$0xff]
    %v196 = vld [vmem:[%s1 + $0x78] sm:$0xff]
    %v197 = vld [vmem:[%s1 + $0x80] sm:$0xff]
    %v198 = vld [vmem:[%s1 + $0x88] sm:$0xff]
    %v199 = vld [vmem:[%s1 + $0x90] sm:$0xff]
    %v200 = vld [vmem:[%s1 + $0x98] sm:$0xff]
    %v201 = vld [vmem:[%s3] sm:$0xf]
    %v203 = vlaneseq
    %v204 = vshrl.u32 %v203, 7
    %v205 = vsub.s32 0, %v204
    %v206 = vrot.slane %v201, %v205
    %v207 = vlaneseq
    %v208 = vshrl.u32 %v207, 7
    %v209 = vsub.s32 1, %v208
    %v210 = vrot.slane %v201, %v209
    %v211 = vlaneseq
    %v212 = vshrl.u32 %v211, 7
    %v213 = vsub.s32 2, %v212
    %v214 = vrot.slane %v201, %v213
    %v215 = vlaneseq
    %v216 = vshrl.u32 %v215, 7
    %v217 = vsub.s32 3, %v216
    %v218 = vrot.slane %v201, %v217
    %vm223 = vcmask 326656
    %v225 = vsel %vm223, %v179, 0
    %v228 = vsel %vm223, %v180, 0
    %230 = vmatprep.subr.mxu0 %v182
    %231 = vmatpush1.msra.mxu0 %v181
    %232 = vmatprep.subr.mxu0 %v186
    %233 = vmatpush1.msra.mxu0 %v185
    %234 = vmatprep.subr.mxu0 %v190
    %235 = vmatpush1.msra.mxu0 %v189
    %236 = vmatprep.subr.mxu0 %v194
    %237 = vmatpush1.msra.mxu0 %v193
    %238 = vmatprep.subr.mxu0 %v198
    %239 = vmatpush1.msra.mxu0 %v197
    %240 = vmatprep.subr.mxu0 0.0
    %241 = vmatpush1.msra.mxu0 0.0
    %242 = vmatprep.subr.mxu0 0.0
    %243 = vmatpush1.msra.mxu0 0.0
    %244 = vmatprep.subr.mxu0 0.0
    %245 = vmatpush1.msra.mxu0 0.0
    %246 = vmatprep.subr.mxu0 0.0
    %247 = vmatpush1.msra.mxu0 0.0
    %248 = vmatprep.subr.mxu0 0.0
    %249 = vmatpush1.msra.mxu0 0.0
    %250 = vmatprep.subr.mxu0 0.0
    %251 = vmatpush1.msra.mxu0 0.0
    %252 = vmatprep.subr.mxu0 0.0
    %253 = vmatpush1.msra.mxu0 0.0
    %254 = vmatprep.subr.mxu0 0.0
    %255 = vmatpush1.msra.mxu0 0.0
    %256 = vmatprep.subr.mxu0 0.0
    %257 = vmatpush1.msra.mxu0 0.0
    %258 = vmatprep.subr.mxu0 0.0
    %259 = vmatpush1.msra.mxu0 0.0
    %260 = vmatprep.subr.mxu0 0.0
    %261 = vmatpush1.msra.mxu0 0.0
    %262 = vmatprep.subr.mxu0 0.0
    %263 = vmatpush1.msra.mxu0 0.0
    %264 = vmatprep.subr.mxu0 0.0
    %265 = vmatpush1.msra.mxu0 0.0
    %266 = vmatprep.subr.mxu0 0.0
    %267 = vmatpush1.msra.mxu0 0.0
    %268 = vmatprep.subr.mxu0 0.0
    %269 = vmatpush1.msra.mxu0 0.0
    %270 = vmatprep.subr.mxu0 0.0
    %271 = vmatpush1.msra.mxu0 0.0
    %272 = vmatprep.subr.mxu0 0.0
    %273 = vmatpush1.msra.mxu0 0.0
    %274 = vmatprep.subr.mxu0 0.0
    %275 = vmatpush1.msra.mxu0 0.0
    %276 = vmatprep.subr.mxu0 0.0
    %277 = vmatpush1.msra.mxu0 0.0
    %278 = vmatprep.subr.mxu0 0.0
    %279 = vmatpush1.msra.mxu0 0.0
    %280 = vmatprep.subr.mxu0 0.0
    %281 = vmatpush1.msra.mxu0 0.0
    %282 = vmatprep.subr.mxu0 0.0
    %283 = vmatpush1.msra.mxu0 0.0
    %284 = vmatprep.subr.mxu0 0.0
    %285 = vmatpush1.msra.mxu0 0.0
    %286 = vmatprep.subr.mxu0 0.0
    %287 = vmatpush1.msra.mxu0 0.0
    %288 = vmatprep.subr.mxu0 0.0
    %289 = vmatpush1.msra.mxu0 0.0
    %290 = vmatprep.subr.mxu0 0.0
    %291 = vmatpush1.msra.mxu0 0.0
    %292 = vmatprep.subr.mxu0 0.0
    %293 = vmatpush1.msra.mxu0 0.0
    %294 = vmatprep.mubr.f32.mxu0 0.0
    %295 = vmatmul.mubr.f32.gmra.mrb[0].mxu0 %v225
    %v296 = vpop.f32.mrb[0].mxu0
    %v297 = vadd.f32 %v206, %v296
    %v298 = vpop.f32.mrb[0].mxu0
    %v299 = vadd.f32 %v210, %v298
    %300 = vmatprep.mubr.f32.mxu0 0.0
    %301 = vmatmul.mubr.f32.gmra.mrb[0].mxu0 %v228
    %v302 = vpop.f32.mrb[0].mxu0
    %v303 = vadd.f32 %v206, %v302
    %v304 = vpop.f32.mrb[0].mxu0
    %v305 = vadd.f32 %v210, %v304
    %306 = vdwg.mxu0
    %307 = vmatprep.subr.mxu0 %v184
    %308 = vmatpush1.msra.mxu0 %v183
    %309 = vmatprep.subr.mxu0 %v188
    %310 = vmatpush1.msra.mxu0 %v187
    %311 = vmatprep.subr.mxu0 %v192
    %312 = vmatpush1.msra.mxu0 %v191
    %313 = vmatprep.subr.mxu0 %v196
    %314 = vmatpush1.msra.mxu0 %v195
    %315 = vmatprep.subr.mxu0 %v200
    %316 = vmatpush1.msra.mxu0 %v199
    %317 = vmatprep.subr.mxu0 0.0
    %318 = vmatpush1.msra.mxu0 0.0
    %319 = vmatprep.subr.mxu0 0.0
    %320 = vmatpush1.msra.mxu0 0.0
    %321 = vmatprep.subr.mxu0 0.0
    %322 = vmatpush1.msra.mxu0 0.0
    %323 = vmatprep.subr.mxu0 0.0
    %324 = vmatpush1.msra.mxu0 0.0
    %325 = vmatprep.subr.mxu0 0.0
    %326 = vmatpush1.msra.mxu0 0.0
    %327 = vmatprep.subr.mxu0 0.0
    %328 = vmatpush1.msra.mxu0 0.0
    %329 = vmatprep.subr.mxu0 0.0
    %330 = vmatpush1.msra.mxu0 0.0
    %331 = vmatprep.subr.mxu0 0.0
    %332 = vmatpush1.msra.mxu0 0.0
    %333 = vmatprep.subr.mxu0 0.0
    %334 = vmatpush1.msra.mxu0 0.0
    %335 = vmatprep.subr.mxu0 0.0
    %336 = vmatpush1.msra.mxu0 0.0
    %337 = vmatprep.subr.mxu0 0.0
    %338 = vmatpush1.msra.mxu0 0.0
    %339 = vmatprep.subr.mxu0 0.0
    %340 = vmatpush1.msra.mxu0 0.0
    %341 = vmatprep.subr.mxu0 0.0
    %342 = vmatpush1.msra.mxu0 0.0
    %343 = vmatprep.subr.mxu0 0.0
    %344 = vmatpush1.msra.mxu0 0.0
    %345 = vmatprep.subr.mxu0 0.0
    %346 = vmatpush1.msra.mxu0 0.0
    %347 = vmatprep.subr.mxu0 0.0
    %348 = vmatpush1.msra.mxu0 0.0
    %349 = vmatprep.subr.mxu0 0.0
    %350 = vmatpush1.msra.mxu0 0.0
    %351 = vmatprep.subr.mxu0 0.0
    %352 = vmatpush1.msra.mxu0 0.0
    %353 = vmatprep.subr.mxu0 0.0
    %354 = vmatpush1.msra.mxu0 0.0
    %355 = vmatprep.subr.mxu0 0.0
    %356 = vmatpush1.msra.mxu0 0.0
    %357 = vmatprep.subr.mxu0 0.0
    %358 = vmatpush1.msra.mxu0 0.0
    %359 = vmatprep.subr.mxu0 0.0
    %360 = vmatpush1.msra.mxu0 0.0
    %361 = vmatprep.subr.mxu0 0.0
    %362 = vmatpush1.msra.mxu0 0.0
    %363 = vmatprep.subr.mxu0 0.0
    %364 = vmatpush1.msra.mxu0 0.0
    %365 = vmatprep.subr.mxu0 0.0
    %366 = vmatpush1.msra.mxu0 0.0
    %367 = vmatprep.subr.mxu0 0.0
    %368 = vmatpush1.msra.mxu0 0.0
    %369 = vmatprep.subr.mxu0 0.0
    %370 = vmatpush1.msra.mxu0 0.0
    %371 = vmatprep.mubr.f32.mxu0 0.0
    %372 = vmatmul.mubr.f32.gmra.mrb[0].mxu0 %v225
    %v373 = vpop.f32.mrb[0].mxu0
    %v374 = vadd.f32 %v214, %v373
    %v375 = vpop.f32.mrb[0].mxu0
    %v376 = vadd.f32 %v218, %v375
    %377 = vmatprep.mubr.f32.mxu0 0.0
    %378 = vmatmul.mubr.f32.gmra.mrb[0].mxu0 %v228
    %v379 = vpop.f32.mrb[0].mxu0
    %v380 = vadd.f32 %v214, %v379
    %v381 = vpop.f32.mrb[0].mxu0
    %v382 = vadd.f32 %v218, %v381
    %383 = vdwg.mxu0
    %v384 = vld [vmem:[#allocation3] sm:$0xff]
    %v385 = vld [vmem:[#allocation3 + $0x8] sm:$0xff]
    %v386 = vld [vmem:[#allocation3 + $0x10] sm:$0xff]
    %v387 = vld [vmem:[#allocation3 + $0x18] sm:$0xff]
    %v388 = vld [vmem:[#allocation3 + $0x20] sm:$0xff]
    %v389 = vld [vmem:[#allocation3 + $0x28] sm:$0xff]
    %v390 = vld [vmem:[#allocation3 + $0x30] sm:$0xff]
    %v391 = vld [vmem:[#allocation3 + $0x38] sm:$0xff]
    %v392 = vld [vmem:[#allocation3 + $0x40] sm:$0xff]
    %v393 = vld [vmem:[#allocation3 + $0x48] sm:$0xff]
    %v394 = vld [vmem:[#allocation3 + $0x50] sm:$0xff]
    %v395 = vld [vmem:[#allocation3 + $0x58] sm:$0xff]
    %v396 = vld [vmem:[#allocation3 + $0x60] sm:$0xff]
    %v397 = vld [vmem:[#allocation3 + $0x68] sm:$0xff]
    %v398 = vld [vmem:[#allocation3 + $0x70] sm:$0xff]
    %v399 = vld [vmem:[#allocation3 + $0x78] sm:$0xff]
    %v400 = vld [vmem:[#allocation3 + $0x80] sm:$0xff]
    %v401 = vld [vmem:[#allocation3 + $0x88] sm:$0xff]
    %v402 = vld [vmem:[#allocation3 + $0x90] sm:$0xff]
    %v403 = vld [vmem:[#allocation3 + $0x98] sm:$0xff]
    %v404 = vld [vmem:[#allocation3 + $0xa0] sm:$0xff]
    %v405 = vld [vmem:[#allocation3 + $0xa8] sm:$0xff]
    %v406 = vld [vmem:[#allocation3 + $0xb0] sm:$0xff]
    %v407 = vld [vmem:[#allocation3 + $0xb8] sm:$0xff]
    %v408 = vld [vmem:[#allocation3 + $0xc0] sm:$0xff]
    %v409 = vld [vmem:[#allocation3 + $0xc8] sm:$0xff]
    %v410 = vld [vmem:[#allocation3 + $0xd0] sm:$0xff]
    %v411 = vld [vmem:[#allocation3 + $0xd8] sm:$0xff]
    %v412 = vld [vmem:[#allocation3 + $0xe0] sm:$0xff]
    %v413 = vld [vmem:[#allocation3 + $0xe8] sm:$0xff]
    %v414 = vld [vmem:[#allocation3 + $0xf0] sm:$0xff]
    %v415 = vld [vmem:[#allocation3 + $0xf8] sm:$0xff]
    %v416 = vld [vmem:[#allocation3 + $0x100] sm:$0xff]
    %v417 = vld [vmem:[#allocation3 + $0x108] sm:$0xff]
    %v418 = vld [vmem:[#allocation3 + $0x110] sm:$0xff]
    %v419 = vld [vmem:[#allocation3 + $0x118] sm:$0xff]
    %v420 = vld [vmem:[#allocation3 + $0x120] sm:$0xff]
    %v421 = vld [vmem:[#allocation3 + $0x128] sm:$0xff]
    %v422 = vld [vmem:[#allocation3 + $0x130] sm:$0xff]
    %v423 = vld [vmem:[#allocation3 + $0x138] sm:$0xff]
    %v424 = vld [vmem:[#allocation3 + $0x140] sm:$0xff]
    %v425 = vld [vmem:[#allocation3 + $0x148] sm:$0xff]
    %v426 = vld [vmem:[#allocation3 + $0x150] sm:$0xff]
    %v427 = vld [vmem:[#allocation3 + $0x158] sm:$0xff]
    %v428 = vld [vmem:[#allocation3 + $0x160] sm:$0xff]
    %v429 = vld [vmem:[#allocation3 + $0x168] sm:$0xff]
    %v430 = vld [vmem:[#allocation3 + $0x170] sm:$0xff]
    %v431 = vld [vmem:[#allocation3 + $0x178] sm:$0xff]
    %v432 = vld [vmem:[#allocation3 + $0x180] sm:$0xff]
    %v433 = vld [vmem:[#allocation3 + $0x188] sm:$0xff]
    %v434 = vld [vmem:[#allocation3 + $0x190] sm:$0xff]
    %v435 = vld [vmem:[#allocation3 + $0x198] sm:$0xff]
    %v436 = vld [vmem:[#allocation3 + $0x1a0] sm:$0xff]
    %v437 = vld [vmem:[#allocation3 + $0x1a8] sm:$0xff]
    %v438 = vld [vmem:[#allocation3 + $0x1b0] sm:$0xff]
    %v439 = vld [vmem:[#allocation3 + $0x1b8] sm:$0xff]
    %v440 = vld [vmem:[#allocation3 + $0x1c0] sm:$0xff]
    %v441 = vld [vmem:[#allocation3 + $0x1c8] sm:$0xff]
    %v442 = vld [vmem:[#allocation3 + $0x1d0] sm:$0xff]
    %v443 = vld [vmem:[#allocation3 + $0x1d8] sm:$0xff]
    %v444 = vld [vmem:[#allocation3 + $0x1e0] sm:$0xff]
    %v445 = vld [vmem:[#allocation3 + $0x1e8] sm:$0xff]
    %v446 = vld [vmem:[#allocation3 + $0x1f0] sm:$0xff]
    %v447 = vld [vmem:[#allocation3 + $0x1f8] sm:$0xff]
    %v452 = vrot.slane %v303, 6
    %v453 = vrot.slane %v305, 6
    %v454 = vrot.slane %v380, 6
    %v455 = vrot.slane %v382, 6
    %v460 = vsel %vm174, %v297, %v452
    %v461 = vsel %vm175, %v299, %v453
    %v462 = vsel %vm176, %v374, %v454
    %v463 = vsel %vm177, %v376, %v455
    %464 = vmatprep.subr.mxu0 %v385
    %465 = vmatpush1.msra.mxu0 %v384
    %466 = vmatprep.subr.mxu0 %v389
    %467 = vmatpush1.msra.mxu0 %v388
    %468 = vmatprep.subr.mxu0 %v393
    %469 = vmatpush1.msra.mxu0 %v392
    %470 = vmatprep.subr.mxu0 %v397
    %471 = vmatpush1.msra.mxu0 %v396
    %472 = vmatprep.subr.mxu0 %v401
    %473 = vmatpush1.msra.mxu0 %v400
    %474 = vmatprep.subr.mxu0 %v405
    %475 = vmatpush1.msra.mxu0 %v404
    %476 = vmatprep.subr.mxu0 %v409
    %477 = vmatpush1.msra.mxu0 %v408
    %478 = vmatprep.subr.mxu0 %v413
    %479 = vmatpush1.msra.mxu0 %v412
    %480 = vmatprep.subr.mxu0 %v417
    %481 = vmatpush1.msra.mxu0 %v416
    %482 = vmatprep.subr.mxu0 %v421
    %483 = vmatpush1.msra.mxu0 %v420
    %484 = vmatprep.subr.mxu0 %v425
    %485 = vmatpush1.msra.mxu0 %v424
    %486 = vmatprep.subr.mxu0 %v429
    %487 = vmatpush1.msra.mxu0 %v428
    %488 = vmatprep.subr.mxu0 %v433
    %489 = vmatpush1.msra.mxu0 %v432
    %490 = vmatprep.subr.mxu0 %v437
    %491 = vmatpush1.msra.mxu0 %v436
    %492 = vmatprep.subr.mxu0 %v441
    %493 = vmatpush1.msra.mxu0 %v440
    %494 = vmatprep.subr.mxu0 %v445
    %495 = vmatpush1.msra.mxu0 %v444
    %496 = vmatprep.subr.mxu0 0.0
    %497 = vmatpush1.msra.mxu0 0.0
    %498 = vmatprep.subr.mxu0 0.0
    %499 = vmatpush1.msra.mxu0 0.0
    %500 = vmatprep.subr.mxu0 0.0
    %501 = vmatpush1.msra.mxu0 0.0
    %502 = vmatprep.subr.mxu0 0.0
    %503 = vmatpush1.msra.mxu0 0.0
    %504 = vmatprep.subr.mxu0 0.0
    %505 = vmatpush1.msra.mxu0 0.0
    %506 = vmatprep.subr.mxu0 0.0
    %507 = vmatpush1.msra.mxu0 0.0
    %508 = vmatprep.subr.mxu0 0.0
    %509 = vmatpush1.msra.mxu0 0.0
    %510 = vmatprep.subr.mxu0 0.0
    %511 = vmatpush1.msra.mxu0 0.0
    %512 = vmatprep.subr.mxu0 0.0
    %513 = vmatpush1.msra.mxu0 0.0
    %514 = vmatprep.subr.mxu0 0.0
    %515 = vmatpush1.msra.mxu0 0.0
    %516 = vmatprep.subr.mxu0 0.0
    %517 = vmatpush1.msra.mxu0 0.0
    %518 = vmatprep.subr.mxu0 0.0
    %519 = vmatpush1.msra.mxu0 0.0
    %520 = vmatprep.subr.mxu0 0.0
    %521 = vmatpush1.msra.mxu0 0.0
    %522 = vmatprep.subr.mxu0 0.0
    %523 = vmatpush1.msra.mxu0 0.0
    %524 = vmatprep.subr.mxu0 0.0
    %525 = vmatpush1.msra.mxu0 0.0
    %526 = vmatprep.subr.mxu0 0.0
    %527 = vmatpush1.msra.mxu0 0.0
    %528 = vmatprep.mubr.f32.mxu0 0.0
    %529 = vmatmul.mubr.f32.gmra.mrb[0].mxu0 0.0
    %v530 = vpop.f32.mrb[0].mxu0
    %v531 = vadd.f32 0.0, %v530
    %v532 = vpop.f32.mrb[0].mxu0
    %v533 = vadd.f32 0.0, %v532
    %534 = vdwg.mxu0
    %535 = vmatprep.subr.mxu0 %v387
    %536 = vmatpush1.msra.mxu0 %v386
    %537 = vmatprep.subr.mxu0 %v391
    %538 = vmatpush1.msra.mxu0 %v390
    %539 = vmatprep.subr.mxu0 %v395
    %540 = vmatpush1.msra.mxu0 %v394
    %541 = vmatprep.subr.mxu0 %v399
    %542 = vmatpush1.msra.mxu0 %v398
    %543 = vmatprep.subr.mxu0 %v403
    %544 = vmatpush1.msra.mxu0 %v402
    %545 = vmatprep.subr.mxu0 %v407
    %546 = vmatpush1.msra.mxu0 %v406
    %547 = vmatprep.subr.mxu0 %v411
    %548 = vmatpush1.msra.mxu0 %v410
    %549 = vmatprep.subr.mxu0 %v415
    %550 = vmatpush1.msra.mxu0 %v414
    %551 = vmatprep.subr.mxu0 %v419
    %552 = vmatpush1.msra.mxu0 %v418
    %553 = vmatprep.subr.mxu0 %v423
    %554 = vmatpush1.msra.mxu0 %v422
    %555 = vmatprep.subr.mxu0 %v427
    %556 = vmatpush1.msra.mxu0 %v426
    %557 = vmatprep.subr.mxu0 %v431
    %558 = vmatpush1.msra.mxu0 %v430
    %559 = vmatprep.subr.mxu0 %v435
    %560 = vmatpush1.msra.mxu0 %v434
    %561 = vmatprep.subr.mxu0 %v439
    %562 = vmatpush1.msra.mxu0 %v438
    %563 = vmatprep.subr.mxu0 %v443
    %564 = vmatpush1.msra.mxu0 %v442
    %565 = vmatprep.subr.mxu0 %v447
    %566 = vmatpush1.msra.mxu0 %v446
    %567 = vmatprep.subr.mxu0 0.0
    %568 = vmatpush1.msra.mxu0 0.0
    %569 = vmatprep.subr.mxu0 0.0
    %570 = vmatpush1.msra.mxu0 0.0
    %571 = vmatprep.subr.mxu0 0.0
    %572 = vmatpush1.msra.mxu0 0.0
    %573 = vmatprep.subr.mxu0 0.0
    %574 = vmatpush1.msra.mxu0 0.0
    %575 = vmatprep.subr.mxu0 0.0
    %576 = vmatpush1.msra.mxu0 0.0
    %577 = vmatprep.subr.mxu0 0.0
    %578 = vmatpush1.msra.mxu0 0.0
    %579 = vmatprep.subr.mxu0 0.0
    %580 = vmatpush1.msra.mxu0 0.0
    %581 = vmatprep.subr.mxu0 0.0
    %582 = vmatpush1.msra.mxu0 0.0
    %583 = vmatprep.subr.mxu0 0.0
    %584 = vmatpush1.msra.mxu0 0.0
    %585 = vmatprep.subr.mxu0 0.0
    %586 = vmatpush1.msra.mxu0 0.0
    %587 = vmatprep.subr.mxu0 0.0
    %588 = vmatpush1.msra.mxu0 0.0
    %589 = vmatprep.subr.mxu0 0.0
    %590 = vmatpush1.msra.mxu0 0.0
    %591 = vmatprep.subr.mxu0 0.0
    %592 = vmatpush1.msra.mxu0 0.0
    %593 = vmatprep.subr.mxu0 0.0
    %594 = vmatpush1.msra.mxu0 0.0
    %595 = vmatprep.subr.mxu0 0.0
    %596 = vmatpush1.msra.mxu0 0.0
    %597 = vmatprep.subr.mxu0 0.0
    %598 = vmatpush1.msra.mxu0 0.0
    %599 = vmatprep.mubr.f32.mxu0 0.0
    %600 = vmatmul.mubr.f32.gmra.mrb[0].mxu0 0.0
    %v601 = vpop.f32.mrb[0].mxu0
    %v602 = vadd.f32 0.0, %v601
    %v603 = vpop.f32.mrb[0].mxu0
    %v604 = vadd.f32 0.0, %v603
    %605 = vdwg.mxu0
    %v606 = vadd.f32 %v460, %v531
    %v607 = vadd.f32 %v461, %v533
    %v608 = vadd.f32 %v462, %v602
    %v609 = vadd.f32 %v463, %v604
    %v610 = vxor.u32 %v606, 2147483648
    %v611 = vxor.u32 %v607, 2147483648
    %v612 = vxor.u32 %v608, 2147483648
    %v613 = vmul.f32 %v610, 1.442695
    %v614 = vpow.pop %v613
    %v615 = vmul.f32 %v611, 1.442695
    %v616 = vpow.pop %v615
    %v617 = vmul.f32 %v612, 1.442695
    %v618 = vpow.pop %v617
    %v619 = vadd.f32 %v614, 1.0
    %v620 = vadd.f32 %v616, 1.0
    %v621 = vadd.f32 %v618, 1.0
    %v622 = vrcp.pop %v619
    %v623 = vmul.f32 1.0, %v622
    %v624 = vrcp.pop %v620
    %v625 = vmul.f32 1.0, %v624
    %v626 = vrcp.pop %v621
    %v627 = vmul.f32 1.0, %v626
    %v628 = vtanh.pop %v609
    %v629 = vmul.f32 %v625, 0.0
    %v630 = vmul.f32 %v623, %v628
    %v631 = vadd.f32 %v629, %v630
    %v632 = vtanh.pop %v631
    %v633 = vmul.f32 %v627, %v632
    %v634 = vrot.slane %v303, 2
    %v635 = vrot.slane %v305, 2
    %v636 = vrot.slane %v380, 2
    %v637 = vrot.slane %v382, 2
    %v642 = vsel %vm174, %v297, %v634
    %v643 = vsel %vm175, %v299, %v635
    %v644 = vsel %vm176, %v374, %v636
    %v645 = vsel %vm177, %v376, %v637
    %646 = vmatprep.subr.mxu0 %v385
    %647 = vmatpush1.msra.mxu0 %v384
    %648 = vmatprep.subr.mxu0 %v389
    %649 = vmatpush1.msra.mxu0 %v388
    %650 = vmatprep.subr.mxu0 %v393
    %651 = vmatpush1.msra.mxu0 %v392
    %652 = vmatprep.subr.mxu0 %v397
    %653 = vmatpush1.msra.mxu0 %v396
    %654 = vmatprep.subr.mxu0 %v401
    %655 = vmatpush1.msra.mxu0 %v400
    %656 = vmatprep.subr.mxu0 %v405
    %657 = vmatpush1.msra.mxu0 %v404
    %658 = vmatprep.subr.mxu0 %v409
    %659 = vmatpush1.msra.mxu0 %v408
    %660 = vmatprep.subr.mxu0 %v413
    %661 = vmatpush1.msra.mxu0 %v412
    %662 = vmatprep.subr.mxu0 %v417
    %663 = vmatpush1.msra.mxu0 %v416
    %664 = vmatprep.subr.mxu0 %v421
    %665 = vmatpush1.msra.mxu0 %v420
    %666 = vmatprep.subr.mxu0 %v425
    %667 = vmatpush1.msra.mxu0 %v424
    %668 = vmatprep.subr.mxu0 %v429
    %669 = vmatpush1.msra.mxu0 %v428
    %670 = vmatprep.subr.mxu0 %v433
    %671 = vmatpush1.msra.mxu0 %v432
    %672 = vmatprep.subr.mxu0 %v437
    %673 = vmatpush1.msra.mxu0 %v436
    %674 = vmatprep.subr.mxu0 %v441
    %675 = vmatpush1.msra.mxu0 %v440
    %676 = vmatprep.subr.mxu0 %v445
    %677 = vmatpush1.msra.mxu0 %v444
    %678 = vmatprep.subr.mxu0 0.0
    %679 = vmatpush1.msra.mxu0 0.0
    %680 = vmatprep.subr.mxu0 0.0
    %681 = vmatpush1.msra.mxu0 0.0
    %682 = vmatprep.subr.mxu0 0.0
    %683 = vmatpush1.msra.mxu0 0.0
    %684 = vmatprep.subr.mxu0 0.0
    %685 = vmatpush1.msra.mxu0 0.0
    %686 = vmatprep.subr.mxu0 0.0
    %687 = vmatpush1.msra.mxu0 0.0
    %688 = vmatprep.subr.mxu0 0.0
    %689 = vmatpush1.msra.mxu0 0.0
    %690 = vmatprep.subr.mxu0 0.0
    %691 = vmatpush1.msra.mxu0 0.0
    %692 = vmatprep.subr.mxu0 0.0
    %693 = vmatpush1.msra.mxu0 0.0
    %694 = vmatprep.subr.mxu0 0.0
    %695 = vmatpush1.msra.mxu0 0.0
    %696 = vmatprep.subr.mxu0 0.0
    %697 = vmatpush1.msra.mxu0 0.0
    %698 = vmatprep.subr.mxu0 0.0
    %699 = vmatpush1.msra.mxu0 0.0
    %700 = vmatprep.subr.mxu0 0.0
    %701 = vmatpush1.msra.mxu0 0.0
    %702 = vmatprep.subr.mxu0 0.0
    %703 = vmatpush1.msra.mxu0 0.0
    %704 = vmatprep.subr.mxu0 0.0
    %705 = vmatpush1.msra.mxu0 0.0
    %706 = vmatprep.subr.mxu0 0.0
    %707 = vmatpush1.msra.mxu0 0.0
    %708 = vmatprep.subr.mxu0 0.0
    %709 = vmatpush1.msra.mxu0 0.0
    %710 = vmatprep.mubr.f32.mxu0 0.0
    %711 = vmatmul.mubr.f32.gmra.mrb[0].mxu0 %v633
    %v712 = vpop.f32.mrb[0].mxu0
    %v713 = vadd.f32 0.0, %v712
    %v714 = vpop.f32.mrb[0].mxu0
    %v715 = vadd.f32 0.0, %v714
    %716 = vdwg.mxu0
    %717 = vmatprep.subr.mxu0 %v387
    %718 = vmatpush1.msra.mxu0 %v386
    %719 = vmatprep.subr.mxu0 %v391
    %720 = vmatpush1.msra.mxu0 %v390
    %721 = vmatprep.subr.mxu0 %v395
    %722 = vmatpush1.msra.mxu0 %v394
    %723 = vmatprep.subr.mxu0 %v399
    %724 = vmatpush1.msra.mxu0 %v398
    %725 = vmatprep.subr.mxu0 %v403
    %726 = vmatpush1.msra.mxu0 %v402
    %727 = vmatprep.subr.mxu0 %v407
    %728 = vmatpush1.msra.mxu0 %v406
    %729 = vmatprep.subr.mxu0 %v411
    %730 = vmatpush1.msra.mxu0 %v410
    %731 = vmatprep.subr.mxu0 %v415
    %732 = vmatpush1.msra.mxu0 %v414
    %733 = vmatprep.subr.mxu0 %v419
    %734 = vmatpush1.msra.mxu0 %v418
    %735 = vmatprep.subr.mxu0 %v423
    %736 = vmatpush1.msra.mxu0 %v422
    %737 = vmatprep.subr.mxu0 %v427
    %738 = vmatpush1.msra.mxu0 %v426
    %739 = vmatprep.subr.mxu0 %v431
    %740 = vmatpush1.msra.mxu0 %v430
    %741 = vmatprep.subr.mxu0 %v435
    %742 = vmatpush1.msra.mxu0 %v434
    %743 = vmatprep.subr.mxu0 %v439
    %744 = vmatpush1.msra.mxu0 %v438
    %745 = vmatprep.subr.mxu0 %v443
    %746 = vmatpush1.msra.mxu0 %v442
    %747 = vmatprep.subr.mxu0 %v447
    %748 = vmatpush1.msra.mxu0 %v446
    %749 = vmatprep.subr.mxu0 0.0
    %750 = vmatpush1.msra.mxu0 0.0
    %751 = vmatprep.subr.mxu0 0.0
    %752 = vmatpush1.msra.mxu0 0.0
    %753 = vmatprep.subr.mxu0 0.0
    %754 = vmatpush1.msra.mxu0 0.0
    %755 = vmatprep.subr.mxu0 0.0
    %756 = vmatpush1.msra.mxu0 0.0
    %757 = vmatprep.subr.mxu0 0.0
    %758 = vmatpush1.msra.mxu0 0.0
    %759 = vmatprep.subr.mxu0 0.0
    %760 = vmatpush1.msra.mxu0 0.0
    %761 = vmatprep.subr.mxu0 0.0
    %762 = vmatpush1.msra.mxu0 0.0
    %763 = vmatprep.subr.mxu0 0.0
    %764 = vmatpush1.msra.mxu0 0.0
    %765 = vmatprep.subr.mxu0 0.0
    %766 = vmatpush1.msra.mxu0 0.0
    %767 = vmatprep.subr.mxu0 0.0
    %768 = vmatpush1.msra.mxu0 0.0
    %769 = vmatprep.subr.mxu0 0.0
    %770 = vmatpush1.msra.mxu0 0.0
    %771 = vmatprep.subr.mxu0 0.0
    %772 = vmatpush1.msra.mxu0 0.0
    %773 = vmatprep.subr.mxu0 0.0
    %774 = vmatpush1.msra.mxu0 0.0
    %775 = vmatprep.subr.mxu0 0.0
    %776 = vmatpush1.msra.mxu0 0.0
    %777 = vmatprep.subr.mxu0 0.0
    %778 = vmatpush1.msra.mxu0 0.0
    %779 = vmatprep.subr.mxu0 0.0
    %780 = vmatpush1.msra.mxu0 0.0
    %781 = vmatprep.mubr.f32.mxu0 0.0
    %782 = vmatmul.mubr.f32.gmra.mrb[0].mxu0 %v633
    %v783 = vpop.f32.mrb[0].mxu0
    %v784 = vadd.f32 0.0, %v783
    %v785 = vpop.f32.mrb[0].mxu0
    %v786 = vadd.f32 0.0, %v785
    %787 = vdwg.mxu0
    %v792 = vrot.slane %v713, 6
    %v793 = vrot.slane %v715, 6
    %v794 = vrot.slane %v784, 6
    %v795 = vrot.slane %v786, 6
    %v800 = vadd.f32 %v642, %v792
    %v801 = vadd.f32 %v643, %v793
    %v802 = vadd.f32 %v644, %v794
    %v803 = vadd.f32 %v645, %v795
    %v804 = vxor.u32 %v800, 2147483648
    %v805 = vxor.u32 %v801, 2147483648
    %v806 = vxor.u32 %v802, 2147483648
    %v807 = vmul.f32 %v804, 1.442695
    %v808 = vpow.pop %v807
    %v809 = vmul.f32 %v805, 1.442695
    %v810 = vpow.pop %v809
    %v811 = vmul.f32 %v806, 1.442695
    %v812 = vpow.pop %v811
    %v813 = vadd.f32 %v808, 1.0
    %v814 = vadd.f32 %v810, 1.0
    %v815 = vadd.f32 %v812, 1.0
    %v816 = vrcp.pop %v813
    %v817 = vmul.f32 1.0, %v816
    %v818 = vrcp.pop %v814
    %v819 = vmul.f32 1.0, %v818
    %v820 = vrcp.pop %v815
    %v821 = vmul.f32 1.0, %v820
    %v822 = vtanh.pop %v803
    %v824 = vrot.slane %v631, 6
    %v826 = vmul.f32 %v819, %v824
    %v827 = vmul.f32 %v817, %v822
    %v828 = vadd.f32 %v826, %v827
    %v829 = vtanh.pop %v828
    %v830 = vmul.f32 %v821, %v829
    %v832 = vrot.slane %v830, 2
    %834 = vmatprep.subr.mxu0 %v385
    %835 = vmatpush1.msra.mxu0 %v384
    %836 = vmatprep.subr.mxu0 %v389
    %837 = vmatpush1.msra.mxu0 %v388
    %838 = vmatprep.subr.mxu0 %v393
    %839 = vmatpush1.msra.mxu0 %v392
    %840 = vmatprep.subr.mxu0 %v397
    %841 = vmatpush1.msra.mxu0 %v396
    %842 = vmatprep.subr.mxu0 %v401
    %843 = vmatpush1.msra.mxu0 %v400
    %844 = vmatprep.subr.mxu0 %v405
    %845 = vmatpush1.msra.mxu0 %v404
    %846 = vmatprep.subr.mxu0 %v409
    %847 = vmatpush1.msra.mxu0 %v408
    %848 = vmatprep.subr.mxu0 %v413
    %849 = vmatpush1.msra.mxu0 %v412
    %850 = vmatprep.subr.mxu0 %v417
    %851 = vmatpush1.msra.mxu0 %v416
    %852 = vmatprep.subr.mxu0 %v421
    %853 = vmatpush1.msra.mxu0 %v420
    %854 = vmatprep.subr.mxu0 %v425
    %855 = vmatpush1.msra.mxu0 %v424
    %856 = vmatprep.subr.mxu0 %v429
    %857 = vmatpush1.msra.mxu0 %v428
    %858 = vmatprep.subr.mxu0 %v433
    %859 = vmatpush1.msra.mxu0 %v432
    %860 = vmatprep.subr.mxu0 %v437
    %861 = vmatpush1.msra.mxu0 %v436
    %862 = vmatprep.subr.mxu0 %v441
    %863 = vmatpush1.msra.mxu0 %v440
    %864 = vmatprep.subr.mxu0 %v445
    %865 = vmatpush1.msra.mxu0 %v444
    %866 = vmatprep.subr.mxu0 0.0
    %867 = vmatpush1.msra.mxu0 0.0
    %868 = vmatprep.subr.mxu0 0.0
    %869 = vmatpush1.msra.mxu0 0.0
    %870 = vmatprep.subr.mxu0 0.0
    %871 = vmatpush1.msra.mxu0 0.0
    %872 = vmatprep.subr.mxu0 0.0
    %873 = vmatpush1.msra.mxu0 0.0
    %874 = vmatprep.subr.mxu0 0.0
    %875 = vmatpush1.msra.mxu0 0.0
    %876 = vmatprep.subr.mxu0 0.0
    %877 = vmatpush1.msra.mxu0 0.0
    %878 = vmatprep.subr.mxu0 0.0
    %879 = vmatpush1.msra.mxu0 0.0
    %880 = vmatprep.subr.mxu0 0.0
    %881 = vmatpush1.msra.mxu0 0.0
    %882 = vmatprep.subr.mxu0 0.0
    %883 = vmatpush1.msra.mxu0 0.0
    %884 = vmatprep.subr.mxu0 0.0
    %885 = vmatpush1.msra.mxu0 0.0
    %886 = vmatprep.subr.mxu0 0.0
    %887 = vmatpush1.msra.mxu0 0.0
    %888 = vmatprep.subr.mxu0 0.0
    %889 = vmatpush1.msra.mxu0 0.0
    %890 = vmatprep.subr.mxu0 0.0
    %891 = vmatpush1.msra.mxu0 0.0
    %892 = vmatprep.subr.mxu0 0.0
    %893 = vmatpush1.msra.mxu0 0.0
    %894 = vmatprep.subr.mxu0 0.0
    %895 = vmatpush1.msra.mxu0 0.0
    %896 = vmatprep.subr.mxu0 0.0
    %897 = vmatpush1.msra.mxu0 0.0
    %898 = vmatprep.mubr.f32.mxu0 0.0
    %899 = vmatmul.mubr.f32.gmra.mrb[0].mxu0 %v832
    %v900 = vpop.f32.mrb[0].mxu0
    %v901 = vadd.f32 0.0, %v900
    %v902 = vpop.f32.mrb[0].mxu0
    %v903 = vadd.f32 0.0, %v902
    %904 = vdwg.mxu0
    %905 = vmatprep.subr.mxu0 %v387
    %906 = vmatpush1.msra.mxu0 %v386
    %907 = vmatprep.subr.mxu0 %v391
    %908 = vmatpush1.msra.mxu0 %v390
    %909 = vmatprep.subr.mxu0 %v395
    %910 = vmatpush1.msra.mxu0 %v394
    %911 = vmatprep.subr.mxu0 %v399
    %912 = vmatpush1.msra.mxu0 %v398
    %913 = vmatprep.subr.mxu0 %v403
    %914 = vmatpush1.msra.mxu0 %v402
    %915 = vmatprep.subr.mxu0 %v407
    %916 = vmatpush1.msra.mxu0 %v406
    %917 = vmatprep.subr.mxu0 %v411
    %918 = vmatpush1.msra.mxu0 %v410
    %919 = vmatprep.subr.mxu0 %v415
    %920 = vmatpush1.msra.mxu0 %v414
    %921 = vmatprep.subr.mxu0 %v419
    %922 = vmatpush1.msra.mxu0 %v418
    %923 = vmatprep.subr.mxu0 %v423
    %924 = vmatpush1.msra.mxu0 %v422
    %925 = vmatprep.subr.mxu0 %v427
    %926 = vmatpush1.msra.mxu0 %v426
    %927 = vmatprep.subr.mxu0 %v431
    %928 = vmatpush1.msra.mxu0 %v430
    %929 = vmatprep.subr.mxu0 %v435
    %930 = vmatpush1.msra.mxu0 %v434
    %931 = vmatprep.subr.mxu0 %v439
    %932 = vmatpush1.msra.mxu0 %v438
    %933 = vmatprep.subr.mxu0 %v443
    %934 = vmatpush1.msra.mxu0 %v442
    %935 = vmatprep.subr.mxu0 %v447
    %936 = vmatpush1.msra.mxu0 %v446
    %937 = vmatprep.subr.mxu0 0.0
    %938 = vmatpush1.msra.mxu0 0.0
    %939 = vmatprep.subr.mxu0 0.0
    %940 = vmatpush1.msra.mxu0 0.0
    %941 = vmatprep.subr.mxu0 0.0
    %942 = vmatpush1.msra.mxu0 0.0
    %943 = vmatprep.subr.mxu0 0.0
    %944 = vmatpush1.msra.mxu0 0.0
    %945 = vmatprep.subr.mxu0 0.0
    %946 = vmatpush1.msra.mxu0 0.0
    %947 = vmatprep.subr.mxu0 0.0
    %948 = vmatpush1.msra.mxu0 0.0
    %949 = vmatprep.subr.mxu0 0.0
    %950 = vmatpush1.msra.mxu0 0.0
    %951 = vmatprep.subr.mxu0 0.0
    %952 = vmatpush1.msra.mxu0 0.0
    %953 = vmatprep.subr.mxu0 0.0
    %954 = vmatpush1.msra.mxu0 0.0
    %955 = vmatprep.subr.mxu0 0.0
    %956 = vmatpush1.msra.mxu0 0.0
    %957 = vmatprep.subr.mxu0 0.0
    %958 = vmatpush1.msra.mxu0 0.0
    %959 = vmatprep.subr.mxu0 0.0
    %960 = vmatpush1.msra.mxu0 0.0
    %961 = vmatprep.subr.mxu0 0.0
    %962 = vmatpush1.msra.mxu0 0.0
    %963 = vmatprep.subr.mxu0 0.0
    %964 = vmatpush1.msra.mxu0 0.0
    %965 = vmatprep.subr.mxu0 0.0
    %966 = vmatpush1.msra.mxu0 0.0
    %967 = vmatprep.subr.mxu0 0.0
    %968 = vmatpush1.msra.mxu0 0.0
    %969 = vmatprep.mubr.f32.mxu0 0.0
    %970 = vmatmul.mubr.f32.gmra.mrb[0].mxu0 %v832
    %v971 = vpop.f32.mrb[0].mxu0
    %v972 = vadd.f32 0.0, %v971
    %v973 = vpop.f32.mrb[0].mxu0
    %v974 = vadd.f32 0.0, %v973
    %975 = vdwg.mxu0
    %v980 = vrot.slane %v901, 4
    %v981 = vrot.slane %v903, 4
    %v982 = vrot.slane %v972, 4
    %v983 = vrot.slane %v974, 4
    %v988 = vadd.f32 %v460, %v980
    %v989 = vadd.f32 %v461, %v981
    %v990 = vadd.f32 %v462, %v982
    %v991 = vadd.f32 %v463, %v983
    %v992 = vxor.u32 %v988, 2147483648
    %v993 = vxor.u32 %v989, 2147483648
    %v994 = vxor.u32 %v990, 2147483648
    %v995 = vmul.f32 %v992, 1.442695
    %v996 = vpow.pop %v995
    %v997 = vmul.f32 %v993, 1.442695
    %v998 = vpow.pop %v997
    %v999 = vmul.f32 %v994, 1.442695
    %v1000 = vpow.pop %v999
    %v1001 = vadd.f32 %v996, 1.0
    %v1002 = vadd.f32 %v998, 1.0
    %v1003 = vadd.f32 %v1000, 1.0
    %v1004 = vrcp.pop %v1001
    %v1005 = vmul.f32 1.0, %v1004
    %v1006 = vrcp.pop %v1002
    %v1007 = vmul.f32 1.0, %v1006
    %v1008 = vrcp.pop %v1003
    %v1009 = vmul.f32 1.0, %v1008
    %v1010 = vtanh.pop %v991
    %v1012 = vrot.slane %v828, 6
    %v1014 = vmul.f32 %v1007, %v1012
    %v1015 = vmul.f32 %v1005, %v1010
    %v1016 = vadd.f32 %v1014, %v1015
    %v1017 = vtanh.pop %v1016
    %v1018 = vmul.f32 %v1009, %v1017
    %v1020 = vrot.slane %v1018, 4
    %1022 = vmatprep.subr.mxu0 %v385
    %1023 = vmatpush1.msra.mxu0 %v384
    %1024 = vmatprep.subr.mxu0 %v389
    %1025 = vmatpush1.msra.mxu0 %v388
    %1026 = vmatprep.subr.mxu0 %v393
    %1027 = vmatpush1.msra.mxu0 %v392
    %1028 = vmatprep.subr.mxu0 %v397
    %1029 = vmatpush1.msra.mxu0 %v396
    %1030 = vmatprep.subr.mxu0 %v401
    %1031 = vmatpush1.msra.mxu0 %v400
    %1032 = vmatprep.subr.mxu0 %v405
    %1033 = vmatpush1.msra.mxu0 %v404
    %1034 = vmatprep.subr.mxu0 %v409
    %1035 = vmatpush1.msra.mxu0 %v408
    %1036 = vmatprep.subr.mxu0 %v413
    %1037 = vmatpush1.msra.mxu0 %v412
    %1038 = vmatprep.subr.mxu0 %v417
    %1039 = vmatpush1.msra.mxu0 %v416
    %1040 = vmatprep.subr.mxu0 %v421
    %1041 = vmatpush1.msra.mxu0 %v420
    %1042 = vmatprep.subr.mxu0 %v425
    %1043 = vmatpush1.msra.mxu0 %v424
    %1044 = vmatprep.subr.mxu0 %v429
    %1045 = vmatpush1.msra.mxu0 %v428
    %1046 = vmatprep.subr.mxu0 %v433
    %1047 = vmatpush1.msra.mxu0 %v432
    %1048 = vmatprep.subr.mxu0 %v437
    %1049 = vmatpush1.msra.mxu0 %v436
    %1050 = vmatprep.subr.mxu0 %v441
    %1051 = vmatpush1.msra.mxu0 %v440
    %1052 = vmatprep.subr.mxu0 %v445
    %1053 = vmatpush1.msra.mxu0 %v444
    %1054 = vmatprep.subr.mxu0 0.0
    %1055 = vmatpush1.msra.mxu0 0.0
    %1056 = vmatprep.subr.mxu0 0.0
    %1057 = vmatpush1.msra.mxu0 0.0
    %1058 = vmatprep.subr.mxu0 0.0
    %1059 = vmatpush1.msra.mxu0 0.0
    %1060 = vmatprep.subr.mxu0 0.0
    %1061 = vmatpush1.msra.mxu0 0.0
    %1062 = vmatprep.subr.mxu0 0.0
    %1063 = vmatpush1.msra.mxu0 0.0
    %1064 = vmatprep.subr.mxu0 0.0
    %1065 = vmatpush1.msra.mxu0 0.0
    %1066 = vmatprep.subr.mxu0 0.0
    %1067 = vmatpush1.msra.mxu0 0.0
    %1068 = vmatprep.subr.mxu0 0.0
    %1069 = vmatpush1.msra.mxu0 0.0
    %1070 = vmatprep.subr.mxu0 0.0
    %1071 = vmatpush1.msra.mxu0 0.0
    %1072 = vmatprep.subr.mxu0 0.0
    %1073 = vmatpush1.msra.mxu0 0.0
    %1074 = vmatprep.subr.mxu0 0.0
    %1075 = vmatpush1.msra.mxu0 0.0
    %1076 = vmatprep.subr.mxu0 0.0
    %1077 = vmatpush1.msra.mxu0 0.0
    %1078 = vmatprep.subr.mxu0 0.0
    %1079 = vmatpush1.msra.mxu0 0.0
    %1080 = vmatprep.subr.mxu0 0.0
    %1081 = vmatpush1.msra.mxu0 0.0
    %1082 = vmatprep.subr.mxu0 0.0
    %1083 = vmatpush1.msra.mxu0 0.0
    %1084 = vmatprep.subr.mxu0 0.0
    %1085 = vmatpush1.msra.mxu0 0.0
    %1086 = vmatprep.mubr.f32.mxu0 0.0
    %1087 = vmatmul.mubr.f32.gmra.mrb[0].mxu0 %v1020
    %v1088 = vpop.f32.mrb[0].mxu0
    %v1089 = vadd.f32 0.0, %v1088
    %v1090 = vpop.f32.mrb[0].mxu0
    %v1091 = vadd.f32 0.0, %v1090
    %1092 = vdwg.mxu0
    %1093 = vmatprep.subr.mxu0 %v387
    %1094 = vmatpush1.msra.mxu0 %v386
    %1095 = vmatprep.subr.mxu0 %v391
    %1096 = vmatpush1.msra.mxu0 %v390
    %1097 = vmatprep.subr.mxu0 %v395
    %1098 = vmatpush1.msra.mxu0 %v394
    %1099 = vmatprep.subr.mxu0 %v399
    %1100 = vmatpush1.msra.mxu0 %v398
    %1101 = vmatprep.subr.mxu0 %v403
    %1102 = vmatpush1.msra.mxu0 %v402
    %1103 = vmatprep.subr.mxu0 %v407
    %1104 = vmatpush1.msra.mxu0 %v406
    %1105 = vmatprep.subr.mxu0 %v411
    %1106 = vmatpush1.msra.mxu0 %v410
    %1107 = vmatprep.subr.mxu0 %v415
    %1108 = vmatpush1.msra.mxu0 %v414
    %1109 = vmatprep.subr.mxu0 %v419
    %1110 = vmatpush1.msra.mxu0 %v418
    %1111 = vmatprep.subr.mxu0 %v423
    %1112 = vmatpush1.msra.mxu0 %v422
    %1113 = vmatprep.subr.mxu0 %v427
    %1114 = vmatpush1.msra.mxu0 %v426
    %1115 = vmatprep.subr.mxu0 %v431
    %1116 = vmatpush1.msra.mxu0 %v430
    %1117 = vmatprep.subr.mxu0 %v435
    %1118 = vmatpush1.msra.mxu0 %v434
    %1119 = vmatprep.subr.mxu0 %v439
    %1120 = vmatpush1.msra.mxu0 %v438
    %1121 = vmatprep.subr.mxu0 %v443
    %1122 = vmatpush1.msra.mxu0 %v442
    %1123 = vmatprep.subr.mxu0 %v447
    %1124 = vmatpush1.msra.mxu0 %v446
    %1125 = vmatprep.subr.mxu0 0.0
    %1126 = vmatpush1.msra.mxu0 0.0
    %1127 = vmatprep.subr.mxu0 0.0
    %1128 = vmatpush1.msra.mxu0 0.0
    %1129 = vmatprep.subr.mxu0 0.0
    %1130 = vmatpush1.msra.mxu0 0.0
    %1131 = vmatprep.subr.mxu0 0.0
    %1132 = vmatpush1.msra.mxu0 0.0
    %1133 = vmatprep.subr.mxu0 0.0
    %1134 = vmatpush1.msra.mxu0 0.0
    %1135 = vmatprep.subr.mxu0 0.0
    %1136 = vmatpush1.msra.mxu0 0.0
    %1137 = vmatprep.subr.mxu0 0.0
    %1138 = vmatpush1.msra.mxu0 0.0
    %1139 = vmatprep.subr.mxu0 0.0
    %1140 = vmatpush1.msra.mxu0 0.0
    %1141 = vmatprep.subr.mxu0 0.0
    %1142 = vmatpush1.msra.mxu0 0.0
    %1143 = vmatprep.subr.mxu0 0.0
    %1144 = vmatpush1.msra.mxu0 0.0
    %1145 = vmatprep.subr.mxu0 0.0
    %1146 = vmatpush1.msra.mxu0 0.0
    %1147 = vmatprep.subr.mxu0 0.0
    %1148 = vmatpush1.msra.mxu0 0.0
    %1149 = vmatprep.subr.mxu0 0.0
    %1150 = vmatpush1.msra.mxu0 0.0
    %1151 = vmatprep.subr.mxu0 0.0
    %1152 = vmatpush1.msra.mxu0 0.0
    %1153 = vmatprep.subr.mxu0 0.0
    %1154 = vmatpush1.msra.mxu0 0.0
    %1155 = vmatprep.subr.mxu0 0.0
    %1156 = vmatpush1.msra.mxu0 0.0
    %1157 = vmatprep.mubr.f32.mxu0 0.0
    %1158 = vmatmul.mubr.f32.gmra.mrb[0].mxu0 %v1020
    %v1159 = vpop.f32.mrb[0].mxu0
    %v1160 = vadd.f32 0.0, %v1159
    %v1161 = vpop.f32.mrb[0].mxu0
    %v1162 = vadd.f32 0.0, %v1161
    %1163 = vdwg.mxu0
    %v1168 = vrot.slane %v1089, 2
    %v1169 = vrot.slane %v1091, 2
    %v1170 = vrot.slane %v1160, 2
    %v1171 = vrot.slane %v1162, 2
    %v1176 = vadd.f32 %v642, %v1168
    %v1177 = vadd.f32 %v643, %v1169
    %v1178 = vadd.f32 %v644, %v1170
    %v1179 = vadd.f32 %v645, %v1171
    %v1180 = vxor.u32 %v1176, 2147483648
    %v1181 = vxor.u32 %v1177, 2147483648
    %v1182 = vxor.u32 %v1178, 2147483648
    %v1183 = vmul.f32 %v1180, 1.442695
    %v1184 = vpow.pop %v1183
    %v1185 = vmul.f32 %v1181, 1.442695
    %v1186 = vpow.pop %v1185
    %v1187 = vmul.f32 %v1182, 1.442695
    %v1188 = vpow.pop %v1187
    %v1189 = vadd.f32 %v1184, 1.0
    %v1190 = vadd.f32 %v1186, 1.0
    %v1191 = vadd.f32 %v1188, 1.0
    %v1192 = vrcp.pop %v1189
    %v1193 = vmul.f32 1.0, %v1192
    %v1194 = vrcp.pop %v1190
    %v1195 = vmul.f32 1.0, %v1194
    %v1196 = vrcp.pop %v1191
    %v1197 = vmul.f32 1.0, %v1196
    %v1198 = vtanh.pop %v1179
    %v1200 = vrot.slane %v1016, 6
    %v1202 = vmul.f32 %v1195, %v1200
    %v1203 = vmul.f32 %v1193, %v1198
    %v1204 = vadd.f32 %v1202, %v1203
    %v1205 = vtanh.pop %v1204
    %v1206 = vmul.f32 %v1197, %v1205
    %v1211 = vrot.slane %v297, 6
    %v1212 = vrot.slane %v299, 6
    %v1213 = vrot.slane %v374, 6
    %v1214 = vrot.slane %v376, 6
    %v1219 = vsel %vm174, %v303, %v1211
    %v1220 = vsel %vm175, %v305, %v1212
    %v1221 = vsel %vm176, %v380, %v1213
    %v1222 = vsel %vm177, %v382, %v1214
    %v1224 = vrot.slane %v1206, 6
    %1226 = vmatprep.subr.mxu0 %v385
    %1227 = vmatpush1.msra.mxu0 %v384
    %1228 = vmatprep.subr.mxu0 %v389
    %1229 = vmatpush1.msra.mxu0 %v388
    %1230 = vmatprep.subr.mxu0 %v393
    %1231 = vmatpush1.msra.mxu0 %v392
    %1232 = vmatprep.subr.mxu0 %v397
    %1233 = vmatpush1.msra.mxu0 %v396
    %1234 = vmatprep.subr.mxu0 %v401
    %1235 = vmatpush1.msra.mxu0 %v400
    %1236 = vmatprep.subr.mxu0 %v405
    %1237 = vmatpush1.msra.mxu0 %v404
    %1238 = vmatprep.subr.mxu0 %v409
    %1239 = vmatpush1.msra.mxu0 %v408
    %1240 = vmatprep.subr.mxu0 %v413
    %1241 = vmatpush1.msra.mxu0 %v412
    %1242 = vmatprep.subr.mxu0 %v417
    %1243 = vmatpush1.msra.mxu0 %v416
    %1244 = vmatprep.subr.mxu0 %v421
    %1245 = vmatpush1.msra.mxu0 %v420
    %1246 = vmatprep.subr.mxu0 %v425
    %1247 = vmatpush1.msra.mxu0 %v424
    %1248 = vmatprep.subr.mxu0 %v429
    %1249 = vmatpush1.msra.mxu0 %v428
    %1250 = vmatprep.subr.mxu0 %v433
    %1251 = vmatpush1.msra.mxu0 %v432
    %1252 = vmatprep.subr.mxu0 %v437
    %1253 = vmatpush1.msra.mxu0 %v436
    %1254 = vmatprep.subr.mxu0 %v441
    %1255 = vmatpush1.msra.mxu0 %v440
    %1256 = vmatprep.subr.mxu0 %v445
    %1257 = vmatpush1.msra.mxu0 %v444
    %1258 = vmatprep.subr.mxu0 0.0
    %1259 = vmatpush1.msra.mxu0 0.0
    %1260 = vmatprep.subr.mxu0 0.0
    %1261 = vmatpush1.msra.mxu0 0.0
    %1262 = vmatprep.subr.mxu0 0.0
    %1263 = vmatpush1.msra.mxu0 0.0
    %1264 = vmatprep.subr.mxu0 0.0
    %1265 = vmatpush1.msra.mxu0 0.0
    %1266 = vmatprep.subr.mxu0 0.0
    %1267 = vmatpush1.msra.mxu0 0.0
    %1268 = vmatprep.subr.mxu0 0.0
    %1269 = vmatpush1.msra.mxu0 0.0
    %1270 = vmatprep.subr.mxu0 0.0
    %1271 = vmatpush1.msra.mxu0 0.0
    %1272 = vmatprep.subr.mxu0 0.0
    %1273 = vmatpush1.msra.mxu0 0.0
    %1274 = vmatprep.subr.mxu0 0.0
    %1275 = vmatpush1.msra.mxu0 0.0
    %1276 = vmatprep.subr.mxu0 0.0
    %1277 = vmatpush1.msra.mxu0 0.0
    %1278 = vmatprep.subr.mxu0 0.0
    %1279 = vmatpush1.msra.mxu0 0.0
    %1280 = vmatprep.subr.mxu0 0.0
    %1281 = vmatpush1.msra.mxu0 0.0
    %1282 = vmatprep.subr.mxu0 0.0
    %1283 = vmatpush1.msra.mxu0 0.0
    %1284 = vmatprep.subr.mxu0 0.0
    %1285 = vmatpush1.msra.mxu0 0.0
    %1286 = vmatprep.subr.mxu0 0.0
    %1287 = vmatpush1.msra.mxu0 0.0
    %1288 = vmatprep.subr.mxu0 0.0
    %1289 = vmatpush1.msra.mxu0 0.0
    %1290 = vmatprep.mubr.f32.mxu0 0.0
    %1291 = vmatmul.mubr.f32.gmra.mrb[0].mxu0 %v1224
    %v1292 = vpop.f32.mrb[0].mxu0
    %v1293 = vadd.f32 0.0, %v1292
    %v1294 = vpop.f32.mrb[0].mxu0
    %v1295 = vadd.f32 0.0, %v1294
    %1296 = vdwg.mxu0
    %1297 = vmatprep.subr.mxu0 %v387
    %1298 = vmatpush1.msra.mxu0 %v386
    %1299 = vmatprep.subr.mxu0 %v391
    %1300 = vmatpush1.msra.mxu0 %v390
    %1301 = vmatprep.subr.mxu0 %v395
    %1302 = vmatpush1.msra.mxu0 %v394
    %1303 = vmatprep.subr.mxu0 %v399
    %1304 = vmatpush1.msra.mxu0 %v398
    %1305 = vmatprep.subr.mxu0 %v403
    %1306 = vmatpush1.msra.mxu0 %v402
    %1307 = vmatprep.subr.mxu0 %v407
    %1308 = vmatpush1.msra.mxu0 %v406
    %1309 = vmatprep.subr.mxu0 %v411
    %1310 = vmatpush1.msra.mxu0 %v410
    %1311 = vmatprep.subr.mxu0 %v415
    %1312 = vmatpush1.msra.mxu0 %v414
    %1313 = vmatprep.subr.mxu0 %v419
    %1314 = vmatpush1.msra.mxu0 %v418
    %1315 = vmatprep.subr.mxu0 %v423
    %1316 = vmatpush1.msra.mxu0 %v422
    %1317 = vmatprep.subr.mxu0 %v427
    %1318 = vmatpush1.msra.mxu0 %v426
    %1319 = vmatprep.subr.mxu0 %v431
    %1320 = vmatpush1.msra.mxu0 %v430
    %1321 = vmatprep.subr.mxu0 %v435
    %1322 = vmatpush1.msra.mxu0 %v434
    %1323 = vmatprep.subr.mxu0 %v439
    %1324 = vmatpush1.msra.mxu0 %v438
    %1325 = vmatprep.subr.mxu0 %v443
    %1326 = vmatpush1.msra.mxu0 %v442
    %1327 = vmatprep.subr.mxu0 %v447
    %1328 = vmatpush1.msra.mxu0 %v446
    %1329 = vmatprep.subr.mxu0 0.0
    %1330 = vmatpush1.msra.mxu0 0.0
    %1331 = vmatprep.subr.mxu0 0.0
    %1332 = vmatpush1.msra.mxu0 0.0
    %1333 = vmatprep.subr.mxu0 0.0
    %1334 = vmatpush1.msra.mxu0 0.0
    %1335 = vmatprep.subr.mxu0 0.0
    %1336 = vmatpush1.msra.mxu0 0.0
    %1337 = vmatprep.subr.mxu0 0.0
    %1338 = vmatpush1.msra.mxu0 0.0
    %1339 = vmatprep.subr.mxu0 0.0
    %1340 = vmatpush1.msra.mxu0 0.0
    %1341 = vmatprep.subr.mxu0 0.0
    %1342 = vmatpush1.msra.mxu0 0.0
    %1343 = vmatprep.subr.mxu0 0.0
    %1344 = vmatpush1.msra.mxu0 0.0
    %1345 = vmatprep.subr.mxu0 0.0
    %1346 = vmatpush1.msra.mxu0 0.0
    %1347 = vmatprep.subr.mxu0 0.0
    %1348 = vmatpush1.msra.mxu0 0.0
    %1349 = vmatprep.subr.mxu0 0.0
    %1350 = vmatpush1.msra.mxu0 0.0
    %1351 = vmatprep.subr.mxu0 0.0
    %1352 = vmatpush1.msra.mxu0 0.0
    %1353 = vmatprep.subr.mxu0 0.0
    %1354 = vmatpush1.msra.mxu0 0.0
    %1355 = vmatprep.subr.mxu0 0.0
    %1356 = vmatpush1.msra.mxu0 0.0
    %1357 = vmatprep.subr.mxu0 0.0
    %1358 = vmatpush1.msra.mxu0 0.0
    %1359 = vmatprep.subr.mxu0 0.0
    %1360 = vmatpush1.msra.mxu0 0.0
    %1361 = vmatprep.mubr.f32.mxu0 0.0
    %1362 = vmatmul.mubr.f32.gmra.mrb[0].mxu0 %v1224
    %v1363 = vpop.f32.mrb[0].mxu0
    %v1364 = vadd.f32 0.0, %v1363
    %v1365 = vpop.f32.mrb[0].mxu0
    %v1366 = vadd.f32 0.0, %v1365
    %1367 = vdwg.mxu0
    %v1368 = vadd.f32 %v1219, %v1293
    %v1369 = vadd.f32 %v1220, %v1295
    %v1370 = vadd.f32 %v1221, %v1364
    %v1371 = vadd.f32 %v1222, %v1366
    %v1372 = vxor.u32 %v1368, 2147483648
    %v1373 = vxor.u32 %v1369, 2147483648
    %v1374 = vxor.u32 %v1370, 2147483648
    %v1375 = vmul.f32 %v1372, 1.442695
    %v1376 = vpow.pop %v1375
    %v1377 = vmul.f32 %v1373, 1.442695
    %v1378 = vpow.pop %v1377
    %v1379 = vmul.f32 %v1374, 1.442695
    %v1380 = vpow.pop %v1379
    %v1381 = vadd.f32 %v1376, 1.0
    %v1382 = vadd.f32 %v1378, 1.0
    %v1383 = vadd.f32 %v1380, 1.0
    %v1384 = vrcp.pop %v1381
    %v1385 = vmul.f32 1.0, %v1384
    %v1386 = vrcp.pop %v1382
    %v1387 = vmul.f32 1.0, %v1386
    %v1388 = vrcp.pop %v1383
    %v1389 = vmul.f32 1.0, %v1388
    %v1390 = vtanh.pop %v1371
    %v1392 = vrot.slane %v1204, 6
    %v1394 = vmul.f32 %v1387, %v1392
    %v1395 = vmul.f32 %v1385, %v1390
    %v1396 = vadd.f32 %v1394, %v1395
    %v1397 = vtanh.pop %v1396
    %v1398 = vmul.f32 %v1389, %v1397
    %v1399 = vrot.slane %v297, 2
    %v1400 = vrot.slane %v299, 2
    %v1401 = vrot.slane %v374, 2
    %v1402 = vrot.slane %v376, 2
    %v1407 = vsel %vm174, %v303, %v1399
    %v1408 = vsel %vm175, %v305, %v1400
    %v1409 = vsel %vm176, %v380, %v1401
    %v1410 = vsel %vm177, %v382, %v1402
    %1411 = vmatprep.subr.mxu0 %v385
    %1412 = vmatpush1.msra.mxu0 %v384
    %1413 = vmatprep.subr.mxu0 %v389
    %1414 = vmatpush1.msra.mxu0 %v388
    %1415 = vmatprep.subr.mxu0 %v393
    %1416 = vmatpush1.msra.mxu0 %v392
    %1417 = vmatprep.subr.mxu0 %v397
    %1418 = vmatpush1.msra.mxu0 %v396
    %1419 = vmatprep.subr.mxu0 %v401
    %1420 = vmatpush1.msra.mxu0 %v400
    %1421 = vmatprep.subr.mxu0 %v405
    %1422 = vmatpush1.msra.mxu0 %v404
    %1423 = vmatprep.subr.mxu0 %v409
    %1424 = vmatpush1.msra.mxu0 %v408
    %1425 = vmatprep.subr.mxu0 %v413
    %1426 = vmatpush1.msra.mxu0 %v412
    %1427 = vmatprep.subr.mxu0 %v417
    %1428 = vmatpush1.msra.mxu0 %v416
    %1429 = vmatprep.subr.mxu0 %v421
    %1430 = vmatpush1.msra.mxu0 %v420
    %1431 = vmatprep.subr.mxu0 %v425
    %1432 = vmatpush1.msra.mxu0 %v424
    %1433 = vmatprep.subr.mxu0 %v429
    %1434 = vmatpush1.msra.mxu0 %v428
    %1435 = vmatprep.subr.mxu0 %v433
    %1436 = vmatpush1.msra.mxu0 %v432
    %1437 = vmatprep.subr.mxu0 %v437
    %1438 = vmatpush1.msra.mxu0 %v436
    %1439 = vmatprep.subr.mxu0 %v441
    %1440 = vmatpush1.msra.mxu0 %v440
    %1441 = vmatprep.subr.mxu0 %v445
    %1442 = vmatpush1.msra.mxu0 %v444
    %1443 = vmatprep.subr.mxu0 0.0
    %1444 = vmatpush1.msra.mxu0 0.0
    %1445 = vmatprep.subr.mxu0 0.0
    %1446 = vmatpush1.msra.mxu0 0.0
    %1447 = vmatprep.subr.mxu0 0.0
    %1448 = vmatpush1.msra.mxu0 0.0
    %1449 = vmatprep.subr.mxu0 0.0
    %1450 = vmatpush1.msra.mxu0 0.0
    %1451 = vmatprep.subr.mxu0 0.0
    %1452 = vmatpush1.msra.mxu0 0.0
    %1453 = vmatprep.subr.mxu0 0.0
    %1454 = vmatpush1.msra.mxu0 0.0
    %1455 = vmatprep.subr.mxu0 0.0
    %1456 = vmatpush1.msra.mxu0 0.0
    %1457 = vmatprep.subr.mxu0 0.0
    %1458 = vmatpush1.msra.mxu0 0.0
    %1459 = vmatprep.subr.mxu0 0.0
    %1460 = vmatpush1.msra.mxu0 0.0
    %1461 = vmatprep.subr.mxu0 0.0
    %1462 = vmatpush1.msra.mxu0 0.0
    %1463 = vmatprep.subr.mxu0 0.0
    %1464 = vmatpush1.msra.mxu0 0.0
    %1465 = vmatprep.subr.mxu0 0.0
    %1466 = vmatpush1.msra.mxu0 0.0
    %1467 = vmatprep.subr.mxu0 0.0
    %1468 = vmatpush1.msra.mxu0 0.0
    %1469 = vmatprep.subr.mxu0 0.0
    %1470 = vmatpush1.msra.mxu0 0.0
    %1471 = vmatprep.subr.mxu0 0.0
    %1472 = vmatpush1.msra.mxu0 0.0
    %1473 = vmatprep.subr.mxu0 0.0
    %1474 = vmatpush1.msra.mxu0 0.0
    %1475 = vmatprep.mubr.f32.mxu0 0.0
    %1476 = vmatmul.mubr.f32.gmra.mrb[0].mxu0 %v1398
    %v1477 = vpop.f32.mrb[0].mxu0
    %v1478 = vadd.f32 0.0, %v1477
    %v1479 = vpop.f32.mrb[0].mxu0
    %v1480 = vadd.f32 0.0, %v1479
    %1481 = vdwg.mxu0
    %1482 = vmatprep.subr.mxu0 %v387
    %1483 = vmatpush1.msra.mxu0 %v386
    %1484 = vmatprep.subr.mxu0 %v391
    %1485 = vmatpush1.msra.mxu0 %v390
    %1486 = vmatprep.subr.mxu0 %v395
    %1487 = vmatpush1.msra.mxu0 %v394
    %1488 = vmatprep.subr.mxu0 %v399
    %1489 = vmatpush1.msra.mxu0 %v398
    %1490 = vmatprep.subr.mxu0 %v403
    %1491 = vmatpush1.msra.mxu0 %v402
    %1492 = vmatprep.subr.mxu0 %v407
    %1493 = vmatpush1.msra.mxu0 %v406
    %1494 = vmatprep.subr.mxu0 %v411
    %1495 = vmatpush1.msra.mxu0 %v410
    %1496 = vmatprep.subr.mxu0 %v415
    %1497 = vmatpush1.msra.mxu0 %v414
    %1498 = vmatprep.subr.mxu0 %v419
    %1499 = vmatpush1.msra.mxu0 %v418
    %1500 = vmatprep.subr.mxu0 %v423
    %1501 = vmatpush1.msra.mxu0 %v422
    %1502 = vmatprep.subr.mxu0 %v427
    %1503 = vmatpush1.msra.mxu0 %v426
    %1504 = vmatprep.subr.mxu0 %v431
    %1505 = vmatpush1.msra.mxu0 %v430
    %1506 = vmatprep.subr.mxu0 %v435
    %1507 = vmatpush1.msra.mxu0 %v434
    %1508 = vmatprep.subr.mxu0 %v439
    %1509 = vmatpush1.msra.mxu0 %v438
    %1510 = vmatprep.subr.mxu0 %v443
    %1511 = vmatpush1.msra.mxu0 %v442
    %1512 = vmatprep.subr.mxu0 %v447
    %1513 = vmatpush1.msra.mxu0 %v446
    %1514 = vmatprep.subr.mxu0 0.0
    %1515 = vmatpush1.msra.mxu0 0.0
    %1516 = vmatprep.subr.mxu0 0.0
    %1517 = vmatpush1.msra.mxu0 0.0
    %1518 = vmatprep.subr.mxu0 0.0
    %1519 = vmatpush1.msra.mxu0 0.0
    %1520 = vmatprep.subr.mxu0 0.0
    %1521 = vmatpush1.msra.mxu0 0.0
    %1522 = vmatprep.subr.mxu0 0.0
    %1523 = vmatpush1.msra.mxu0 0.0
    %1524 = vmatprep.subr.mxu0 0.0
    %1525 = vmatpush1.msra.mxu0 0.0
    %1526 = vmatprep.subr.mxu0 0.0
    %1527 = vmatpush1.msra.mxu0 0.0
    %1528 = vmatprep.subr.mxu0 0.0
    %1529 = vmatpush1.msra.mxu0 0.0
    %1530 = vmatprep.subr.mxu0 0.0
    %1531 = vmatpush1.msra.mxu0 0.0
    %1532 = vmatprep.subr.mxu0 0.0
    %1533 = vmatpush1.msra.mxu0 0.0
    %1534 = vmatprep.subr.mxu0 0.0
    %1535 = vmatpush1.msra.mxu0 0.0
    %1536 = vmatprep.subr.mxu0 0.0
    %1537 = vmatpush1.msra.mxu0 0.0
    %1538 = vmatprep.subr.mxu0 0.0
    %1539 = vmatpush1.msra.mxu0 0.0
    %1540 = vmatprep.subr.mxu0 0.0
    %1541 = vmatpush1.msra.mxu0 0.0
    %1542 = vmatprep.subr.mxu0 0.0
    %1543 = vmatpush1.msra.mxu0 0.0
    %1544 = vmatprep.subr.mxu0 0.0
    %1545 = vmatpush1.msra.mxu0 0.0
    %1546 = vmatprep.mubr.f32.mxu0 0.0
    %1547 = vmatmul.mubr.f32.gmra.mrb[0].mxu0 %v1398
    %v1548 = vpop.f32.mrb[0].mxu0
    %v1549 = vadd.f32 0.0, %v1548
    %v1550 = vpop.f32.mrb[0].mxu0
    %v1551 = vadd.f32 0.0, %v1550
    %1552 = vdwg.mxu0
    %v1557 = vrot.slane %v1478, 6
    %v1558 = vrot.slane %v1480, 6
    %v1559 = vrot.slane %v1549, 6
    %v1560 = vrot.slane %v1551, 6
    %v1565 = vadd.f32 %v1407, %v1557
    %v1566 = vadd.f32 %v1408, %v1558
    %v1567 = vadd.f32 %v1409, %v1559
    %v1568 = vadd.f32 %v1410, %v1560
    %v1569 = vxor.u32 %v1565, 2147483648
    %v1570 = vxor.u32 %v1566, 2147483648
    %v1571 = vxor.u32 %v1567, 2147483648
    %v1572 = vmul.f32 %v1569, 1.442695
    %v1573 = vpow.pop %v1572
    %v1574 = vmul.f32 %v1570, 1.442695
    %v1575 = vpow.pop %v1574
    %v1576 = vmul.f32 %v1571, 1.442695
    %v1577 = vpow.pop %v1576
    %v1578 = vadd.f32 %v1573, 1.0
    %v1579 = vadd.f32 %v1575, 1.0
    %v1580 = vadd.f32 %v1577, 1.0
    %v1581 = vrcp.pop %v1578
    %v1582 = vmul.f32 1.0, %v1581
    %v1583 = vrcp.pop %v1579
    %v1584 = vmul.f32 1.0, %v1583
    %v1585 = vrcp.pop %v1580
    %v1586 = vmul.f32 1.0, %v1585
    %v1587 = vtanh.pop %v1568
    %v1589 = vrot.slane %v1396, 6
    %v1591 = vmul.f32 %v1584, %v1589
    %v1592 = vmul.f32 %v1582, %v1587
    %v1593 = vadd.f32 %v1591, %v1592
    %v1594 = vtanh.pop %v1593
    %v1595 = vmul.f32 %v1586, %v1594
    %v1597 = vrot.slane %v1595, 2
    %1599 = vmatprep.subr.mxu0 %v385
    %1600 = vmatpush1.msra.mxu0 %v384
    %1601 = vmatprep.subr.mxu0 %v389
    %1602 = vmatpush1.msra.mxu0 %v388
    %1603 = vmatprep.subr.mxu0 %v393
    %1604 = vmatpush1.msra.mxu0 %v392
    %1605 = vmatprep.subr.mxu0 %v397
    %1606 = vmatpush1.msra.mxu0 %v396
    %1607 = vmatprep.subr.mxu0 %v401
    %1608 = vmatpush1.msra.mxu0 %v400
    %1609 = vmatprep.subr.mxu0 %v405
    %1610 = vmatpush1.msra.mxu0 %v404
    %1611 = vmatprep.subr.mxu0 %v409
    %1612 = vmatpush1.msra.mxu0 %v408
    %1613 = vmatprep.subr.mxu0 %v413
    %1614 = vmatpush1.msra.mxu0 %v412
    %1615 = vmatprep.subr.mxu0 %v417
    %1616 = vmatpush1.msra.mxu0 %v416
    %1617 = vmatprep.subr.mxu0 %v421
    %1618 = vmatpush1.msra.mxu0 %v420
    %1619 = vmatprep.subr.mxu0 %v425
    %1620 = vmatpush1.msra.mxu0 %v424
    %1621 = vmatprep.subr.mxu0 %v429
    %1622 = vmatpush1.msra.mxu0 %v428
    %1623 = vmatprep.subr.mxu0 %v433
    %1624 = vmatpush1.msra.mxu0 %v432
    %1625 = vmatprep.subr.mxu0 %v437
    %1626 = vmatpush1.msra.mxu0 %v436
    %1627 = vmatprep.subr.mxu0 %v441
    %1628 = vmatpush1.msra.mxu0 %v440
    %1629 = vmatprep.subr.mxu0 %v445
    %1630 = vmatpush1.msra.mxu0 %v444
    %1631 = vmatprep.subr.mxu0 0.0
    %1632 = vmatpush1.msra.mxu0 0.0
    %1633 = vmatprep.subr.mxu0 0.0
    %1634 = vmatpush1.msra.mxu0 0.0
    %1635 = vmatprep.subr.mxu0 0.0
    %1636 = vmatpush1.msra.mxu0 0.0
    %1637 = vmatprep.subr.mxu0 0.0
    %1638 = vmatpush1.msra.mxu0 0.0
    %1639 = vmatprep.subr.mxu0 0.0
    %1640 = vmatpush1.msra.mxu0 0.0
    %1641 = vmatprep.subr.mxu0 0.0
    %1642 = vmatpush1.msra.mxu0 0.0
    %1643 = vmatprep.subr.mxu0 0.0
    %1644 = vmatpush1.msra.mxu0 0.0
    %1645 = vmatprep.subr.mxu0 0.0
    %1646 = vmatpush1.msra.mxu0 0.0
    %1647 = vmatprep.subr.mxu0 0.0
    %1648 = vmatpush1.msra.mxu0 0.0
    %1649 = vmatprep.subr.mxu0 0.0
    %1650 = vmatpush1.msra.mxu0 0.0
    %1651 = vmatprep.subr.mxu0 0.0
    %1652 = vmatpush1.msra.mxu0 0.0
    %1653 = vmatprep.subr.mxu0 0.0
    %1654 = vmatpush1.msra.mxu0 0.0
    %1655 = vmatprep.subr.mxu0 0.0
    %1656 = vmatpush1.msra.mxu0 0.0
    %1657 = vmatprep.subr.mxu0 0.0
    %1658 = vmatpush1.msra.mxu0 0.0
    %1659 = vmatprep.subr.mxu0 0.0
    %1660 = vmatpush1.msra.mxu0 0.0
    %1661 = vmatprep.subr.mxu0 0.0
    %1662 = vmatpush1.msra.mxu0 0.0
    %1663 = vmatprep.mubr.f32.mxu0 0.0
    %1664 = vmatmul.mubr.f32.gmra.mrb[0].mxu0 %v1597
    %v1665 = vpop.f32.mrb[0].mxu0
    %v1666 = vadd.f32 0.0, %v1665
    %v1667 = vpop.f32.mrb[0].mxu0
    %v1668 = vadd.f32 0.0, %v1667
    %1669 = vdwg.mxu0
    %1670 = vmatprep.subr.mxu0 %v387
    %1671 = vmatpush1.msra.mxu0 %v386
    %1672 = vmatprep.subr.mxu0 %v391
    %1673 = vmatpush1.msra.mxu0 %v390
    %1674 = vmatprep.subr.mxu0 %v395
    %1675 = vmatpush1.msra.mxu0 %v394
    %1676 = vmatprep.subr.mxu0 %v399
    %1677 = vmatpush1.msra.mxu0 %v398
    %1678 = vmatprep.subr.mxu0 %v403
    %1679 = vmatpush1.msra.mxu0 %v402
    %1680 = vmatprep.subr.mxu0 %v407
    %1681 = vmatpush1.msra.mxu0 %v406
    %1682 = vmatprep.subr.mxu0 %v411
    %1683 = vmatpush1.msra.mxu0 %v410
    %1684 = vmatprep.subr.mxu0 %v415
    %1685 = vmatpush1.msra.mxu0 %v414
    %1686 = vmatprep.subr.mxu0 %v419
    %1687 = vmatpush1.msra.mxu0 %v418
    %1688 = vmatprep.subr.mxu0 %v423
    %1689 = vmatpush1.msra.mxu0 %v422
    %1690 = vmatprep.subr.mxu0 %v427
    %1691 = vmatpush1.msra.mxu0 %v426
    %1692 = vmatprep.subr.mxu0 %v431
    %1693 = vmatpush1.msra.mxu0 %v430
    %1694 = vmatprep.subr.mxu0 %v435
    %1695 = vmatpush1.msra.mxu0 %v434
    %1696 = vmatprep.subr.mxu0 %v439
    %1697 = vmatpush1.msra.mxu0 %v438
    %1698 = vmatprep.subr.mxu0 %v443
    %1699 = vmatpush1.msra.mxu0 %v442
    %1700 = vmatprep.subr.mxu0 %v447
    %1701 = vmatpush1.msra.mxu0 %v446
    %1702 = vmatprep.subr.mxu0 0.0
    %1703 = vmatpush1.msra.mxu0 0.0
    %1704 = vmatprep.subr.mxu0 0.0
    %1705 = vmatpush1.msra.mxu0 0.0
    %1706 = vmatprep.subr.mxu0 0.0
    %1707 = vmatpush1.msra.mxu0 0.0
    %1708 = vmatprep.subr.mxu0 0.0
    %1709 = vmatpush1.msra.mxu0 0.0
    %1710 = vmatprep.subr.mxu0 0.0
    %1711 = vmatpush1.msra.mxu0 0.0
    %1712 = vmatprep.subr.mxu0 0.0
    %1713 = vmatpush1.msra.mxu0 0.0
    %1714 = vmatprep.subr.mxu0 0.0
    %1715 = vmatpush1.msra.mxu0 0.0
    %1716 = vmatprep.subr.mxu0 0.0
    %1717 = vmatpush1.msra.mxu0 0.0
    %1718 = vmatprep.subr.mxu0 0.0
    %1719 = vmatpush1.msra.mxu0 0.0
    %1720 = vmatprep.subr.mxu0 0.0
    %1721 = vmatpush1.msra.mxu0 0.0
    %1722 = vmatprep.subr.mxu0 0.0
    %1723 = vmatpush1.msra.mxu0 0.0
    %1724 = vmatprep.subr.mxu0 0.0
    %1725 = vmatpush1.msra.mxu0 0.0
    %1726 = vmatprep.subr.mxu0 0.0
    %1727 = vmatpush1.msra.mxu0 0.0
    %1728 = vmatprep.subr.mxu0 0.0
    %1729 = vmatpush1.msra.mxu0 0.0
    %1730 = vmatprep.subr.mxu0 0.0
    %1731 = vmatpush1.msra.mxu0 0.0
    %1732 = vmatprep.subr.mxu0 0.0
    %1733 = vmatpush1.msra.mxu0 0.0
    %1734 = vmatprep.mubr.f32.mxu0 0.0
    %1735 = vmatmul.mubr.f32.gmra.mrb[0].mxu0 %v1597
    %v1736 = vpop.f32.mrb[0].mxu0
    %v1737 = vadd.f32 0.0, %v1736
    %v1738 = vpop.f32.mrb[0].mxu0
    %v1739 = vadd.f32 0.0, %v1738
    %1740 = vdwg.mxu0
    %v1745 = vrot.slane %v1666, 4
    %v1746 = vrot.slane %v1668, 4
    %v1747 = vrot.slane %v1737, 4
    %v1748 = vrot.slane %v1739, 4
    %v1753 = vadd.f32 %v1219, %v1745
    %v1754 = vadd.f32 %v1220, %v1746
    %v1755 = vadd.f32 %v1221, %v1747
    %v1756 = vadd.f32 %v1222, %v1748
    %v1757 = vxor.u32 %v1753, 2147483648
    %v1758 = vxor.u32 %v1754, 2147483648
    %v1759 = vxor.u32 %v1755, 2147483648
    %v1760 = vmul.f32 %v1757, 1.442695
    %v1761 = vpow.pop %v1760
    %v1762 = vmul.f32 %v1758, 1.442695
    %v1763 = vpow.pop %v1762
    %v1764 = vmul.f32 %v1759, 1.442695
    %v1765 = vpow.pop %v1764
    %v1766 = vadd.f32 %v1761, 1.0
    %v1767 = vadd.f32 %v1763, 1.0
    %v1768 = vadd.f32 %v1765, 1.0
    %v1769 = vrcp.pop %v1766
    %v1770 = vmul.f32 1.0, %v1769
    %v1771 = vrcp.pop %v1767
    %v1772 = vmul.f32 1.0, %v1771
    %v1773 = vrcp.pop %v1768
    %v1774 = vmul.f32 1.0, %v1773
    %v1775 = vtanh.pop %v1756
    %v1777 = vrot.slane %v1593, 6
    %v1779 = vmul.f32 %v1772, %v1777
    %v1780 = vmul.f32 %v1770, %v1775
    %v1781 = vadd.f32 %v1779, %v1780
    %v1782 = vtanh.pop %v1781
    %v1783 = vmul.f32 %v1774, %v1782
    %v1785 = vrot.slane %v1783, 4
    %1787 = vmatprep.subr.mxu0 %v385
    %1788 = vmatpush1.msra.mxu0 %v384
    %1789 = vmatprep.subr.mxu0 %v389
    %1790 = vmatpush1.msra.mxu0 %v388
    %1791 = vmatprep.subr.mxu0 %v393
    %1792 = vmatpush1.msra.mxu0 %v392
    %1793 = vmatprep.subr.mxu0 %v397
    %1794 = vmatpush1.msra.mxu0 %v396
    %1795 = vmatprep.subr.mxu0 %v401
    %1796 = vmatpush1.msra.mxu0 %v400
    %1797 = vmatprep.subr.mxu0 %v405
    %1798 = vmatpush1.msra.mxu0 %v404
    %1799 = vmatprep.subr.mxu0 %v409
    %1800 = vmatpush1.msra.mxu0 %v408
    %1801 = vmatprep.subr.mxu0 %v413
    %1802 = vmatpush1.msra.mxu0 %v412
    %1803 = vmatprep.subr.mxu0 %v417
    %1804 = vmatpush1.msra.mxu0 %v416
    %1805 = vmatprep.subr.mxu0 %v421
    %1806 = vmatpush1.msra.mxu0 %v420
    %1807 = vmatprep.subr.mxu0 %v425
    %1808 = vmatpush1.msra.mxu0 %v424
    %1809 = vmatprep.subr.mxu0 %v429
    %1810 = vmatpush1.msra.mxu0 %v428
    %1811 = vmatprep.subr.mxu0 %v433
    %1812 = vmatpush1.msra.mxu0 %v432
    %1813 = vmatprep.subr.mxu0 %v437
    %1814 = vmatpush1.msra.mxu0 %v436
    %1815 = vmatprep.subr.mxu0 %v441
    %1816 = vmatpush1.msra.mxu0 %v440
    %1817 = vmatprep.subr.mxu0 %v445
    %1818 = vmatpush1.msra.mxu0 %v444
    %1819 = vmatprep.subr.mxu0 0.0
    %1820 = vmatpush1.msra.mxu0 0.0
    %1821 = vmatprep.subr.mxu0 0.0
    %1822 = vmatpush1.msra.mxu0 0.0
    %1823 = vmatprep.subr.mxu0 0.0
    %1824 = vmatpush1.msra.mxu0 0.0
    %1825 = vmatprep.subr.mxu0 0.0
    %1826 = vmatpush1.msra.mxu0 0.0
    %1827 = vmatprep.subr.mxu0 0.0
    %1828 = vmatpush1.msra.mxu0 0.0
    %1829 = vmatprep.subr.mxu0 0.0
    %1830 = vmatpush1.msra.mxu0 0.0
    %1831 = vmatprep.subr.mxu0 0.0
    %1832 = vmatpush1.msra.mxu0 0.0
    %1833 = vmatprep.subr.mxu0 0.0
    %1834 = vmatpush1.msra.mxu0 0.0
    %1835 = vmatprep.subr.mxu0 0.0
    %1836 = vmatpush1.msra.mxu0 0.0
    %1837 = vmatprep.subr.mxu0 0.0
    %1838 = vmatpush1.msra.mxu0 0.0
    %1839 = vmatprep.subr.mxu0 0.0
    %1840 = vmatpush1.msra.mxu0 0.0
    %1841 = vmatprep.subr.mxu0 0.0
    %1842 = vmatpush1.msra.mxu0 0.0
    %1843 = vmatprep.subr.mxu0 0.0
    %1844 = vmatpush1.msra.mxu0 0.0
    %1845 = vmatprep.subr.mxu0 0.0
    %1846 = vmatpush1.msra.mxu0 0.0
    %1847 = vmatprep.subr.mxu0 0.0
    %1848 = vmatpush1.msra.mxu0 0.0
    %1849 = vmatprep.subr.mxu0 0.0
    %1850 = vmatpush1.msra.mxu0 0.0
    %1851 = vmatprep.mubr.f32.mxu0 0.0
    %1852 = vmatmul.mubr.f32.gmra.mrb[0].mxu0 %v1785
    %v1853 = vpop.f32.mrb[0].mxu0
    %v1854 = vadd.f32 0.0, %v1853
    %v1855 = vpop.f32.mrb[0].mxu0
    %v1856 = vadd.f32 0.0, %v1855
    %1857 = vdwg.mxu0
    %1858 = vmatprep.subr.mxu0 %v387
    %1859 = vmatpush1.msra.mxu0 %v386
    %1860 = vmatprep.subr.mxu0 %v391
    %1861 = vmatpush1.msra.mxu0 %v390
    %1862 = vmatprep.subr.mxu0 %v395
    %1863 = vmatpush1.msra.mxu0 %v394
    %1864 = vmatprep.subr.mxu0 %v399
    %1865 = vmatpush1.msra.mxu0 %v398
    %1866 = vmatprep.subr.mxu0 %v403
    %1867 = vmatpush1.msra.mxu0 %v402
    %1868 = vmatprep.subr.mxu0 %v407
    %1869 = vmatpush1.msra.mxu0 %v406
    %1870 = vmatprep.subr.mxu0 %v411
    %1871 = vmatpush1.msra.mxu0 %v410
    %1872 = vmatprep.subr.mxu0 %v415
    %1873 = vmatpush1.msra.mxu0 %v414
    %1874 = vmatprep.subr.mxu0 %v419
    %1875 = vmatpush1.msra.mxu0 %v418
    %1876 = vmatprep.subr.mxu0 %v423
    %1877 = vmatpush1.msra.mxu0 %v422
    %1878 = vmatprep.subr.mxu0 %v427
    %1879 = vmatpush1.msra.mxu0 %v426
    %1880 = vmatprep.subr.mxu0 %v431
    %1881 = vmatpush1.msra.mxu0 %v430
    %1882 = vmatprep.subr.mxu0 %v435
    %1883 = vmatpush1.msra.mxu0 %v434
    %1884 = vmatprep.subr.mxu0 %v439
    %1885 = vmatpush1.msra.mxu0 %v438
    %1886 = vmatprep.subr.mxu0 %v443
    %1887 = vmatpush1.msra.mxu0 %v442
    %1888 = vmatprep.subr.mxu0 %v447
    %1889 = vmatpush1.msra.mxu0 %v446
    %1890 = vmatprep.subr.mxu0 0.0
    %1891 = vmatpush1.msra.mxu0 0.0
    %1892 = vmatprep.subr.mxu0 0.0
    %1893 = vmatpush1.msra.mxu0 0.0
    %1894 = vmatprep.subr.mxu0 0.0
    %1895 = vmatpush1.msra.mxu0 0.0
    %1896 = vmatprep.subr.mxu0 0.0
    %1897 = vmatpush1.msra.mxu0 0.0
    %1898 = vmatprep.subr.mxu0 0.0
    %1899 = vmatpush1.msra.mxu0 0.0
    %1900 = vmatprep.subr.mxu0 0.0
    %1901 = vmatpush1.msra.mxu0 0.0
    %1902 = vmatprep.subr.mxu0 0.0
    %1903 = vmatpush1.msra.mxu0 0.0
    %1904 = vmatprep.subr.mxu0 0.0
    %1905 = vmatpush1.msra.mxu0 0.0
    %1906 = vmatprep.subr.mxu0 0.0
    %1907 = vmatpush1.msra.mxu0 0.0
    %1908 = vmatprep.subr.mxu0 0.0
    %1909 = vmatpush1.msra.mxu0 0.0
    %1910 = vmatprep.subr.mxu0 0.0
    %1911 = vmatpush1.msra.mxu0 0.0
    %1912 = vmatprep.subr.mxu0 0.0
    %1913 = vmatpush1.msra.mxu0 0.0
    %1914 = vmatprep.subr.mxu0 0.0
    %1915 = vmatpush1.msra.mxu0 0.0
    %1916 = vmatprep.subr.mxu0 0.0
    %1917 = vmatpush1.msra.mxu0 0.0
    %1918 = vmatprep.subr.mxu0 0.0
    %1919 = vmatpush1.msra.mxu0 0.0
    %1920 = vmatprep.subr.mxu0 0.0
    %1921 = vmatpush1.msra.mxu0 0.0
    %1922 = vmatprep.mubr.f32.mxu0 0.0
    %1923 = vmatmul.mubr.f32.gmra.mrb[0].mxu0 %v1785
    %v1924 = vpop.f32.mrb[0].mxu0
    %v1925 = vadd.f32 0.0, %v1924
    %v1926 = vpop.f32.mrb[0].mxu0
    %v1927 = vadd.f32 0.0, %v1926
    %1928 = vdwg.mxu0
    %v1933 = vrot.slane %v1854, 2
    %v1934 = vrot.slane %v1856, 2
    %v1935 = vrot.slane %v1925, 2
    %v1936 = vrot.slane %v1927, 2
    %v1941 = vadd.f32 %v1407, %v1933
    %v1942 = vadd.f32 %v1408, %v1934
    %v1943 = vadd.f32 %v1409, %v1935
    %v1944 = vadd.f32 %v1410, %v1936
    %v1945 = vxor.u32 %v1941, 2147483648
    %v1946 = vxor.u32 %v1942, 2147483648
    %v1947 = vxor.u32 %v1943, 2147483648
    %v1948 = vmul.f32 %v1945, 1.442695
    %v1949 = vpow.pop %v1948
    %v1950 = vmul.f32 %v1946, 1.442695
    %v1951 = vpow.pop %v1950
    %v1952 = vmul.f32 %v1947, 1.442695
    %v1953 = vpow.pop %v1952
    %v1954 = vadd.f32 %v1949, 1.0
    %v1955 = vadd.f32 %v1951, 1.0
    %v1956 = vadd.f32 %v1953, 1.0
    %v1957 = vrcp.pop %v1954
    %v1958 = vmul.f32 1.0, %v1957
    %v1959 = vrcp.pop %v1955
    %v1960 = vmul.f32 1.0, %v1959
    %v1961 = vrcp.pop %v1956
    %v1962 = vmul.f32 1.0, %v1961
    %v1963 = vtanh.pop %v1944
    %v1965 = vrot.slane %v1781, 6
    %v1967 = vmul.f32 %v1960, %v1965
    %v1968 = vmul.f32 %v1958, %v1963
    %v1969 = vadd.f32 %v1967, %v1968
    %v1970 = vtanh.pop %v1969
    %v1971 = vmul.f32 %v1962, %v1970
    %v1973 = vrot.slane %v1971, 6
    %v1975 = vsel %vm178, %v633, %v1973
    %v1976 = vrot.slane %v1783, 2
    %v1978 = vsel %vm178, %v830, %v1976
    %v1979 = vrot.slane %v1595, 6
    %v1981 = vsel %vm178, %v1018, %v1979
    %v1983 = vrot.slane %v1398, 2
    %v1985 = vsel %vm178, %v1206, %v1983
    %v1986 = vsel %vm178, %v1398, %v1224
    %v1987 = vrot.slane %v1018, 2
    %v1989 = vsel %vm178, %v1595, %v1987
    %v1990 = vrot.slane %v830, 6
    %v1992 = vsel %vm178, %v1783, %v1990
    %v1994 = vrot.slane %v633, 2
    %v1996 = vsel %vm178, %v1971, %v1994
    %vm1997 = vcmask 1041408
    %v1998 = vsel %vm1997, %v1975, %v1978
    %vm1999 = vcmask 1043456
    %v2000 = vsel %vm1999, %v1998, %v1981
    %vm2001 = vcmask 1045504
    %v2002 = vsel %vm2001, %v2000, %v1985
    %v2003 = vsel %vm1997, %v1986, %v1989
    %v2004 = vsel %vm1999, %v2003, %v1992
    %v2005 = vsel %vm2001, %v2004, %v1996
    %v2006 = vld [vmem:[#allocation6] sm:$0xff]
    %v2007 = vld [vmem:[#allocation6 + $0x8] sm:$0xff]
    %v2008 = vld [vmem:[#allocation6 + $0x10] sm:$0xff]
    %v2009 = vld [vmem:[#allocation6 + $0x18] sm:$0xff]
    %v2010 = vld [vmem:[#allocation6 + $0x20] sm:$0xff]
    %v2011 = vld [vmem:[#allocation6 + $0x28] sm:$0xff]
    %v2012 = vld [vmem:[#allocation6 + $0x30] sm:$0xff]
    %v2013 = vld [vmem:[#allocation6 + $0x38] sm:$0xff]
    %v2014 = vld [vmem:[#allocation6 + $0x40] sm:$0xff]
    %v2015 = vld [vmem:[#allocation6 + $0x48] sm:$0xff]
    %v2016 = vld [vmem:[#allocation6 + $0x50] sm:$0xff]
    %v2017 = vld [vmem:[#allocation6 + $0x58] sm:$0xff]
    %v2018 = vld [vmem:[#allocation6 + $0x60] sm:$0xff]
    %v2019 = vld [vmem:[#allocation6 + $0x68] sm:$0xff]
    %v2020 = vld [vmem:[#allocation6 + $0x70] sm:$0xff]
    %v2021 = vld [vmem:[#allocation6 + $0x78] sm:$0xff]
    %v2022 = vld [vmem:[#allocation6 + $0x80] sm:$0xff]
    %v2023 = vld [vmem:[#allocation6 + $0x88] sm:$0xff]
    %v2024 = vld [vmem:[#allocation6 + $0x90] sm:$0xff]
    %v2025 = vld [vmem:[#allocation6 + $0x98] sm:$0xff]
    %v2026 = vld [vmem:[#allocation6 + $0xa0] sm:$0xff]
    %v2027 = vld [vmem:[#allocation6 + $0xa8] sm:$0xff]
    %v2028 = vld [vmem:[#allocation6 + $0xb0] sm:$0xff]
    %v2029 = vld [vmem:[#allocation6 + $0xb8] sm:$0xff]
    %v2030 = vld [vmem:[#allocation6 + $0xc0] sm:$0xff]
    %v2031 = vld [vmem:[#allocation6 + $0xc8] sm:$0xff]
    %v2032 = vld [vmem:[#allocation6 + $0xd0] sm:$0xff]
    %v2033 = vld [vmem:[#allocation6 + $0xd8] sm:$0xff]
    %v2034 = vld [vmem:[#allocation6 + $0xe0] sm:$0xff]
    %v2035 = vld [vmem:[#allocation6 + $0xe8] sm:$0xff]
    %v2036 = vld [vmem:[#allocation6 + $0xf0] sm:$0xff]
    %v2037 = vld [vmem:[#allocation6 + $0xf8] sm:$0xff]
    %v2038 = vld [vmem:[#allocation6 + $0x100] sm:$0xff]
    %v2039 = vld [vmem:[#allocation6 + $0x108] sm:$0xff]
    %v2040 = vld [vmem:[#allocation6 + $0x110] sm:$0xff]
    %v2041 = vld [vmem:[#allocation6 + $0x118] sm:$0xff]
    %v2042 = vld [vmem:[#allocation6 + $0x120] sm:$0xff]
    %v2043 = vld [vmem:[#allocation6 + $0x128] sm:$0xff]
    %v2044 = vld [vmem:[#allocation6 + $0x130] sm:$0xff]
    %v2045 = vld [vmem:[#allocation6 + $0x138] sm:$0xff]
    %v2046 = vld [vmem:[#allocation6 + $0x140] sm:$0xff]
    %v2047 = vld [vmem:[#allocation6 + $0x148] sm:$0xff]
    %v2048 = vld [vmem:[#allocation6 + $0x150] sm:$0xff]
    %v2049 = vld [vmem:[#allocation6 + $0x158] sm:$0xff]
    %v2050 = vld [vmem:[#allocation6 + $0x160] sm:$0xff]
    %v2051 = vld [vmem:[#allocation6 + $0x168] sm:$0xff]
    %v2052 = vld [vmem:[#allocation6 + $0x170] sm:$0xff]
    %v2053 = vld [vmem:[#allocation6 + $0x178] sm:$0xff]
    %v2054 = vld [vmem:[#allocation6 + $0x180] sm:$0xff]
    %v2055 = vld [vmem:[#allocation6 + $0x188] sm:$0xff]
    %v2056 = vld [vmem:[#allocation6 + $0x190] sm:$0xff]
    %v2057 = vld [vmem:[#allocation6 + $0x198] sm:$0xff]
    %v2058 = vld [vmem:[#allocation6 + $0x1a0] sm:$0xff]
    %v2059 = vld [vmem:[#allocation6 + $0x1a8] sm:$0xff]
    %v2060 = vld [vmem:[#allocation6 + $0x1b0] sm:$0xff]
    %v2061 = vld [vmem:[#allocation6 + $0x1b8] sm:$0xff]
    %v2062 = vld [vmem:[#allocation6 + $0x1c0] sm:$0xff]
    %v2063 = vld [vmem:[#allocation6 + $0x1c8] sm:$0xff]
    %v2064 = vld [vmem:[#allocation6 + $0x1d0] sm:$0xff]
    %v2065 = vld [vmem:[#allocation6 + $0x1d8] sm:$0xff]
    %v2066 = vld [vmem:[#allocation6 + $0x1e0] sm:$0xff]
    %v2067 = vld [vmem:[#allocation6 + $0x1e8] sm:$0xff]
    %v2068 = vld [vmem:[#allocation6 + $0x1f0] sm:$0xff]
    %v2069 = vld [vmem:[#allocation6 + $0x1f8] sm:$0xff]
    %v2070 = vld [vmem:[%s6] sm:$0xf]
    %v2072 = vlaneseq
    %v2073 = vshrl.u32 %v2072, 7
    %v2074 = vsub.s32 0, %v2073
    %v2075 = vrot.slane %v2070, %v2074
    %v2076 = vlaneseq
    %v2077 = vshrl.u32 %v2076, 7
    %v2078 = vsub.s32 1, %v2077
    %v2079 = vrot.slane %v2070, %v2078
    %v2080 = vlaneseq
    %v2081 = vshrl.u32 %v2080, 7
    %v2082 = vsub.s32 2, %v2081
    %v2083 = vrot.slane %v2070, %v2082
    %v2084 = vlaneseq
    %v2085 = vshrl.u32 %v2084, 7
    %v2086 = vsub.s32 3, %v2085
    %v2087 = vrot.slane %v2070, %v2086
    %2092 = vmatprep.subr.mxu0 %v2007
    %2093 = vmatpush1.msra.mxu0 %v2006
    %2094 = vmatprep.subr.mxu0 %v2011
    %2095 = vmatpush1.msra.mxu0 %v2010
    %2096 = vmatprep.subr.mxu0 %v2015
    %2097 = vmatpush1.msra.mxu0 %v2014
    %2098 = vmatprep.subr.mxu0 %v2019
    %2099 = vmatpush1.msra.mxu0 %v2018
    %2100 = vmatprep.subr.mxu0 %v2023
    %2101 = vmatpush1.msra.mxu0 %v2022
    %2102 = vmatprep.subr.mxu0 %v2027
    %2103 = vmatpush1.msra.mxu0 %v2026
    %2104 = vmatprep.subr.mxu0 %v2031
    %2105 = vmatpush1.msra.mxu0 %v2030
    %2106 = vmatprep.subr.mxu0 %v2035
    %2107 = vmatpush1.msra.mxu0 %v2034
    %2108 = vmatprep.subr.mxu0 %v2039
    %2109 = vmatpush1.msra.mxu0 %v2038
    %2110 = vmatprep.subr.mxu0 %v2043
    %2111 = vmatpush1.msra.mxu0 %v2042
    %2112 = vmatprep.subr.mxu0 %v2047
    %2113 = vmatpush1.msra.mxu0 %v2046
    %2114 = vmatprep.subr.mxu0 %v2051
    %2115 = vmatpush1.msra.mxu0 %v2050
    %2116 = vmatprep.subr.mxu0 %v2055
    %2117 = vmatpush1.msra.mxu0 %v2054
    %2118 = vmatprep.subr.mxu0 %v2059
    %2119 = vmatpush1.msra.mxu0 %v2058
    %2120 = vmatprep.subr.mxu0 %v2063
    %2121 = vmatpush1.msra.mxu0 %v2062
    %2122 = vmatprep.subr.mxu0 %v2067
    %2123 = vmatpush1.msra.mxu0 %v2066
    %2124 = vmatprep.subr.mxu0 0.0
    %2125 = vmatpush1.msra.mxu0 0.0
    %2126 = vmatprep.subr.mxu0 0.0
    %2127 = vmatpush1.msra.mxu0 0.0
    %2128 = vmatprep.subr.mxu0 0.0
    %2129 = vmatpush1.msra.mxu0 0.0
    %2130 = vmatprep.subr.mxu0 0.0
    %2131 = vmatpush1.msra.mxu0 0.0
    %2132 = vmatprep.subr.mxu0 0.0
    %2133 = vmatpush1.msra.mxu0 0.0
    %2134 = vmatprep.subr.mxu0 0.0
    %2135 = vmatpush1.msra.mxu0 0.0
    %2136 = vmatprep.subr.mxu0 0.0
    %2137 = vmatpush1.msra.mxu0 0.0
    %2138 = vmatprep.subr.mxu0 0.0
    %2139 = vmatpush1.msra.mxu0 0.0
    %2140 = vmatprep.subr.mxu0 0.0
    %2141 = vmatpush1.msra.mxu0 0.0
    %2142 = vmatprep.subr.mxu0 0.0
    %2143 = vmatpush1.msra.mxu0 0.0
    %2144 = vmatprep.subr.mxu0 0.0
    %2145 = vmatpush1.msra.mxu0 0.0
    %2146 = vmatprep.subr.mxu0 0.0
    %2147 = vmatpush1.msra.mxu0 0.0
    %2148 = vmatprep.subr.mxu0 0.0
    %2149 = vmatpush1.msra.mxu0 0.0
    %2150 = vmatprep.subr.mxu0 0.0
    %2151 = vmatpush1.msra.mxu0 0.0
    %2152 = vmatprep.subr.mxu0 0.0
    %2153 = vmatpush1.msra.mxu0 0.0
    %2154 = vmatprep.subr.mxu0 0.0
    %2155 = vmatpush1.msra.mxu0 0.0
    %2156 = vmatprep.mubr.f32.mxu0 0.0
    %2157 = vmatmul.mubr.f32.gmra.mrb[0].mxu0 %v2002
    %v2158 = vpop.f32.mrb[0].mxu0
    %v2159 = vadd.f32 %v2075, %v2158
    %v2160 = vpop.f32.mrb[0].mxu0
    %v2161 = vadd.f32 %v2079, %v2160
    %2162 = vmatprep.mubr.f32.mxu0 0.0
    %2163 = vmatmul.mubr.f32.gmra.mrb[0].mxu0 %v2005
    %v2164 = vpop.f32.mrb[0].mxu0
    %v2165 = vadd.f32 %v2075, %v2164
    %v2166 = vpop.f32.mrb[0].mxu0
    %v2167 = vadd.f32 %v2079, %v2166
    %2168 = vdwg.mxu0
    %2169 = vmatprep.subr.mxu0 %v2009
    %2170 = vmatpush1.msra.mxu0 %v2008
    %2171 = vmatprep.subr.mxu0 %v2013
    %2172 = vmatpush1.msra.mxu0 %v2012
    %2173 = vmatprep.subr.mxu0 %v2017
    %2174 = vmatpush1.msra.mxu0 %v2016
    %2175 = vmatprep.subr.mxu0 %v2021
    %2176 = vmatpush1.msra.mxu0 %v2020
    %2177 = vmatprep.subr.mxu0 %v2025
    %2178 = vmatpush1.msra.mxu0 %v2024
    %2179 = vmatprep.subr.mxu0 %v2029
    %2180 = vmatpush1.msra.mxu0 %v2028
    %2181 = vmatprep.subr.mxu0 %v2033
    %2182 = vmatpush1.msra.mxu0 %v2032
    %2183 = vmatprep.subr.mxu0 %v2037
    %2184 = vmatpush1.msra.mxu0 %v2036
    %2185 = vmatprep.subr.mxu0 %v2041
    %2186 = vmatpush1.msra.mxu0 %v2040
    %2187 = vmatprep.subr.mxu0 %v2045
    %2188 = vmatpush1.msra.mxu0 %v2044
    %2189 = vmatprep.subr.mxu0 %v2049
    %2190 = vmatpush1.msra.mxu0 %v2048
    %2191 = vmatprep.subr.mxu0 %v2053
    %2192 = vmatpush1.msra.mxu0 %v2052
    %2193 = vmatprep.subr.mxu0 %v2057
    %2194 = vmatpush1.msra.mxu0 %v2056
    %2195 = vmatprep.subr.mxu0 %v2061
    %2196 = vmatpush1.msra.mxu0 %v2060
    %2197 = vmatprep.subr.mxu0 %v2065
    %2198 = vmatpush1.msra.mxu0 %v2064
    %2199 = vmatprep.subr.mxu0 %v2069
    %2200 = vmatpush1.msra.mxu0 %v2068
    %2201 = vmatprep.subr.mxu0 0.0
    %2202 = vmatpush1.msra.mxu0 0.0
    %2203 = vmatprep.subr.mxu0 0.0
    %2204 = vmatpush1.msra.mxu0 0.0
    %2205 = vmatprep.subr.mxu0 0.0
    %2206 = vmatpush1.msra.mxu0 0.0
    %2207 = vmatprep.subr.mxu0 0.0
    %2208 = vmatpush1.msra.mxu0 0.0
    %2209 = vmatprep.subr.mxu0 0.0
    %2210 = vmatpush1.msra.mxu0 0.0
    %2211 = vmatprep.subr.mxu0 0.0
    %2212 = vmatpush1.msra.mxu0 0.0
    %2213 = vmatprep.subr.mxu0 0.0
    %2214 = vmatpush1.msra.mxu0 0.0
    %2215 = vmatprep.subr.mxu0 0.0
    %2216 = vmatpush1.msra.mxu0 0.0
    %2217 = vmatprep.subr.mxu0 0.0
    %2218 = vmatpush1.msra.mxu0 0.0
    %2219 = vmatprep.subr.mxu0 0.0
    %2220 = vmatpush1.msra.mxu0 0.0
    %2221 = vmatprep.subr.mxu0 0.0
    %2222 = vmatpush1.msra.mxu0 0.0
    %2223 = vmatprep.subr.mxu0 0.0
    %2224 = vmatpush1.msra.mxu0 0.0
    %2225 = vmatprep.subr.mxu0 0.0
    %2226 = vmatpush1.msra.mxu0 0.0
    %2227 = vmatprep.subr.mxu0 0.0
    %2228 = vmatpush1.msra.mxu0 0.0
    %2229 = vmatprep.subr.mxu0 0.0
    %2230 = vmatpush1.msra.mxu0 0.0
    %2231 = vmatprep.subr.mxu0 0.0
    %2232 = vmatpush1.msra.mxu0 0.0
    %2233 = vmatprep.mubr.f32.mxu0 0.0
    %2234 = vmatmul.mubr.f32.gmra.mrb[0].mxu0 %v2002
    %v2235 = vpop.f32.mrb[0].mxu0
    %v2236 = vadd.f32 %v2083, %v2235
    %v2237 = vpop.f32.mrb[0].mxu0
    %v2238 = vadd.f32 %v2087, %v2237
    %2239 = vmatprep.mubr.f32.mxu0 0.0
    %2240 = vmatmul.mubr.f32.gmra.mrb[0].mxu0 %v2005
    %v2241 = vpop.f32.mrb[0].mxu0
    %v2242 = vadd.f32 %v2083, %v2241
    %v2243 = vpop.f32.mrb[0].mxu0
    %v2244 = vadd.f32 %v2087, %v2243
    %2245 = vdwg.mxu0
    %v2246 = vld [vmem:[#allocation8] sm:$0xff]
    %v2247 = vld [vmem:[#allocation8 + $0x8] sm:$0xff]
    %v2248 = vld [vmem:[#allocation8 + $0x10] sm:$0xff]
    %v2249 = vld [vmem:[#allocation8 + $0x18] sm:$0xff]
    %v2250 = vld [vmem:[#allocation8 + $0x20] sm:$0xff]
    %v2251 = vld [vmem:[#allocation8 + $0x28] sm:$0xff]
    %v2252 = vld [vmem:[#allocation8 + $0x30] sm:$0xff]
    %v2253 = vld [vmem:[#allocation8 + $0x38] sm:$0xff]
    %v2254 = vld [vmem:[#allocation8 + $0x40] sm:$0xff]
    %v2255 = vld [vmem:[#allocation8 + $0x48] sm:$0xff]
    %v2256 = vld [vmem:[#allocation8 + $0x50] sm:$0xff]
    %v2257 = vld [vmem:[#allocation8 + $0x58] sm:$0xff]
    %v2258 = vld [vmem:[#allocation8 + $0x60] sm:$0xff]
    %v2259 = vld [vmem:[#allocation8 + $0x68] sm:$0xff]
    %v2260 = vld [vmem:[#allocation8 + $0x70] sm:$0xff]
    %v2261 = vld [vmem:[#allocation8 + $0x78] sm:$0xff]
    %v2262 = vld [vmem:[#allocation8 + $0x80] sm:$0xff]
    %v2263 = vld [vmem:[#allocation8 + $0x88] sm:$0xff]
    %v2264 = vld [vmem:[#allocation8 + $0x90] sm:$0xff]
    %v2265 = vld [vmem:[#allocation8 + $0x98] sm:$0xff]
    %v2266 = vld [vmem:[#allocation8 + $0xa0] sm:$0xff]
    %v2267 = vld [vmem:[#allocation8 + $0xa8] sm:$0xff]
    %v2268 = vld [vmem:[#allocation8 + $0xb0] sm:$0xff]
    %v2269 = vld [vmem:[#allocation8 + $0xb8] sm:$0xff]
    %v2270 = vld [vmem:[#allocation8 + $0xc0] sm:$0xff]
    %v2271 = vld [vmem:[#allocation8 + $0xc8] sm:$0xff]
    %v2272 = vld [vmem:[#allocation8 + $0xd0] sm:$0xff]
    %v2273 = vld [vmem:[#allocation8 + $0xd8] sm:$0xff]
    %v2274 = vld [vmem:[#allocation8 + $0xe0] sm:$0xff]
    %v2275 = vld [vmem:[#allocation8 + $0xe8] sm:$0xff]
    %v2276 = vld [vmem:[#allocation8 + $0xf0] sm:$0xff]
    %v2277 = vld [vmem:[#allocation8 + $0xf8] sm:$0xff]
    %v2278 = vld [vmem:[#allocation8 + $0x100] sm:$0xff]
    %v2279 = vld [vmem:[#allocation8 + $0x108] sm:$0xff]
    %v2280 = vld [vmem:[#allocation8 + $0x110] sm:$0xff]
    %v2281 = vld [vmem:[#allocation8 + $0x118] sm:$0xff]
    %v2282 = vld [vmem:[#allocation8 + $0x120] sm:$0xff]
    %v2283 = vld [vmem:[#allocation8 + $0x128] sm:$0xff]
    %v2284 = vld [vmem:[#allocation8 + $0x130] sm:$0xff]
    %v2285 = vld [vmem:[#allocation8 + $0x138] sm:$0xff]
    %v2286 = vld [vmem:[#allocation8 + $0x140] sm:$0xff]
    %v2287 = vld [vmem:[#allocation8 + $0x148] sm:$0xff]
    %v2288 = vld [vmem:[#allocation8 + $0x150] sm:$0xff]
    %v2289 = vld [vmem:[#allocation8 + $0x158] sm:$0xff]
    %v2290 = vld [vmem:[#allocation8 + $0x160] sm:$0xff]
    %v2291 = vld [vmem:[#allocation8 + $0x168] sm:$0xff]
    %v2292 = vld [vmem:[#allocation8 + $0x170] sm:$0xff]
    %v2293 = vld [vmem:[#allocation8 + $0x178] sm:$0xff]
    %v2294 = vld [vmem:[#allocation8 + $0x180] sm:$0xff]
    %v2295 = vld [vmem:[#allocation8 + $0x188] sm:$0xff]
    %v2296 = vld [vmem:[#allocation8 + $0x190] sm:$0xff]
    %v2297 = vld [vmem:[#allocation8 + $0x198] sm:$0xff]
    %v2298 = vld [vmem:[#allocation8 + $0x1a0] sm:$0xff]
    %v2299 = vld [vmem:[#allocation8 + $0x1a8] sm:$0xff]
    %v2300 = vld [vmem:[#allocation8 + $0x1b0] sm:$0xff]
    %v2301 = vld [vmem:[#allocation8 + $0x1b8] sm:$0xff]
    %v2302 = vld [vmem:[#allocation8 + $0x1c0] sm:$0xff]
    %v2303 = vld [vmem:[#allocation8 + $0x1c8] sm:$0xff]
    %v2304 = vld [vmem:[#allocation8 + $0x1d0] sm:$0xff]
    %v2305 = vld [vmem:[#allocation8 + $0x1d8] sm:$0xff]
    %v2306 = vld [vmem:[#allocation8 + $0x1e0] sm:$0xff]
    %v2307 = vld [vmem:[#allocation8 + $0x1e8] sm:$0xff]
    %v2308 = vld [vmem:[#allocation8 + $0x1f0] sm:$0xff]
    %v2309 = vld [vmem:[#allocation8 + $0x1f8] sm:$0xff]
    %v2314 = vrot.slane %v2165, 6
    %v2315 = vrot.slane %v2167, 6
    %v2316 = vrot.slane %v2242, 6
    %v2317 = vrot.slane %v2244, 6
    %v2322 = vsel %vm174, %v2159, %v2314
    %v2323 = vsel %vm175, %v2161, %v2315
    %v2324 = vsel %vm176, %v2236, %v2316
    %v2325 = vsel %vm177, %v2238, %v2317
    %2326 = vmatprep.subr.mxu0 %v2247
    %2327 = vmatpush1.msra.mxu0 %v2246
    %2328 = vmatprep.subr.mxu0 %v2251
    %2329 = vmatpush1.msra.mxu0 %v2250
    %2330 = vmatprep.subr.mxu0 %v2255
    %2331 = vmatpush1.msra.mxu0 %v2254
    %2332 = vmatprep.subr.mxu0 %v2259
    %2333 = vmatpush1.msra.mxu0 %v2258
    %2334 = vmatprep.subr.mxu0 %v2263
    %2335 = vmatpush1.msra.mxu0 %v2262
    %2336 = vmatprep.subr.mxu0 %v2267
    %2337 = vmatpush1.msra.mxu0 %v2266
    %2338 = vmatprep.subr.mxu0 %v2271
    %2339 = vmatpush1.msra.mxu0 %v2270
    %2340 = vmatprep.subr.mxu0 %v2275
    %2341 = vmatpush1.msra.mxu0 %v2274
    %2342 = vmatprep.subr.mxu0 %v2279
    %2343 = vmatpush1.msra.mxu0 %v2278
    %2344 = vmatprep.subr.mxu0 %v2283
    %2345 = vmatpush1.msra.mxu0 %v2282
    %2346 = vmatprep.subr.mxu0 %v2287
    %2347 = vmatpush1.msra.mxu0 %v2286
    %2348 = vmatprep.subr.mxu0 %v2291
    %2349 = vmatpush1.msra.mxu0 %v2290
    %2350 = vmatprep.subr.mxu0 %v2295
    %2351 = vmatpush1.msra.mxu0 %v2294
    %2352 = vmatprep.subr.mxu0 %v2299
    %2353 = vmatpush1.msra.mxu0 %v2298
    %2354 = vmatprep.subr.mxu0 %v2303
    %2355 = vmatpush1.msra.mxu0 %v2302
    %2356 = vmatprep.subr.mxu0 %v2307
    %2357 = vmatpush1.msra.mxu0 %v2306
    %2358 = vmatprep.subr.mxu0 0.0
    %2359 = vmatpush1.msra.mxu0 0.0
    %2360 = vmatprep.subr.mxu0 0.0
    %2361 = vmatpush1.msra.mxu0 0.0
    %2362 = vmatprep.subr.mxu0 0.0
    %2363 = vmatpush1.msra.mxu0 0.0
    %2364 = vmatprep.subr.mxu0 0.0
    %2365 = vmatpush1.msra.mxu0 0.0
    %2366 = vmatprep.subr.mxu0 0.0
    %2367 = vmatpush1.msra.mxu0 0.0
    %2368 = vmatprep.subr.mxu0 0.0
    %2369 = vmatpush1.msra.mxu0 0.0
    %2370 = vmatprep.subr.mxu0 0.0
    %2371 = vmatpush1.msra.mxu0 0.0
    %2372 = vmatprep.subr.mxu0 0.0
    %2373 = vmatpush1.msra.mxu0 0.0
    %2374 = vmatprep.subr.mxu0 0.0
    %2375 = vmatpush1.msra.mxu0 0.0
    %2376 = vmatprep.subr.mxu0 0.0
    %2377 = vmatpush1.msra.mxu0 0.0
    %2378 = vmatprep.subr.mxu0 0.0
    %2379 = vmatpush1.msra.mxu0 0.0
    %2380 = vmatprep.subr.mxu0 0.0
    %2381 = vmatpush1.msra.mxu0 0.0
    %2382 = vmatprep.subr.mxu0 0.0
    %2383 = vmatpush1.msra.mxu0 0.0
    %2384 = vmatprep.subr.mxu0 0.0
    %2385 = vmatpush1.msra.mxu0 0.0
    %2386 = vmatprep.subr.mxu0 0.0
    %2387 = vmatpush1.msra.mxu0 0.0
    %2388 = vmatprep.subr.mxu0 0.0
    %2389 = vmatpush1.msra.mxu0 0.0
    %2390 = vmatprep.mubr.f32.mxu0 0.0
    %2391 = vmatmul.mubr.f32.gmra.mrb[0].mxu0 0.0
    %v2392 = vpop.f32.mrb[0].mxu0
    %v2393 = vadd.f32 0.0, %v2392
    %v2394 = vpop.f32.mrb[0].mxu0
    %v2395 = vadd.f32 0.0, %v2394
    %2396 = vdwg.mxu0
    %2397 = vmatprep.subr.mxu0 %v2249
    %2398 = vmatpush1.msra.mxu0 %v2248
    %2399 = vmatprep.subr.mxu0 %v2253
    %2400 = vmatpush1.msra.mxu0 %v2252
    %2401 = vmatprep.subr.mxu0 %v2257
    %2402 = vmatpush1.msra.mxu0 %v2256
    %2403 = vmatprep.subr.mxu0 %v2261
    %2404 = vmatpush1.msra.mxu0 %v2260
    %2405 = vmatprep.subr.mxu0 %v2265
    %2406 = vmatpush1.msra.mxu0 %v2264
    %2407 = vmatprep.subr.mxu0 %v2269
    %2408 = vmatpush1.msra.mxu0 %v2268
    %2409 = vmatprep.subr.mxu0 %v2273
    %2410 = vmatpush1.msra.mxu0 %v2272
    %2411 = vmatprep.subr.mxu0 %v2277
    %2412 = vmatpush1.msra.mxu0 %v2276
    %2413 = vmatprep.subr.mxu0 %v2281
    %2414 = vmatpush1.msra.mxu0 %v2280
    %2415 = vmatprep.subr.mxu0 %v2285
    %2416 = vmatpush1.msra.mxu0 %v2284
    %2417 = vmatprep.subr.mxu0 %v2289
    %2418 = vmatpush1.msra.mxu0 %v2288
    %2419 = vmatprep.subr.mxu0 %v2293
    %2420 = vmatpush1.msra.mxu0 %v2292
    %2421 = vmatprep.subr.mxu0 %v2297
    %2422 = vmatpush1.msra.mxu0 %v2296
    %2423 = vmatprep.subr.mxu0 %v2301
    %2424 = vmatpush1.msra.mxu0 %v2300
    %2425 = vmatprep.subr.mxu0 %v2305
    %2426 = vmatpush1.msra.mxu0 %v2304
    %2427 = vmatprep.subr.mxu0 %v2309
    %2428 = vmatpush1.msra.mxu0 %v2308
    %2429 = vmatprep.subr.mxu0 0.0
    %2430 = vmatpush1.msra.mxu0 0.0
    %2431 = vmatprep.subr.mxu0 0.0
    %2432 = vmatpush1.msra.mxu0 0.0
    %2433 = vmatprep.subr.mxu0 0.0
    %2434 = vmatpush1.msra.mxu0 0.0
    %2435 = vmatprep.subr.mxu0 0.0
    %2436 = vmatpush1.msra.mxu0 0.0
    %2437 = vmatprep.subr.mxu0 0.0
    %2438 = vmatpush1.msra.mxu0 0.0
    %2439 = vmatprep.subr.mxu0 0.0
    %2440 = vmatpush1.msra.mxu0 0.0
    %2441 = vmatprep.subr.mxu0 0.0
    %2442 = vmatpush1.msra.mxu0 0.0
    %2443 = vmatprep.subr.mxu0 0.0
    %2444 = vmatpush1.msra.mxu0 0.0
    %2445 = vmatprep.subr.mxu0 0.0
    %2446 = vmatpush1.msra.mxu0 0.0
    %2447 = vmatprep.subr.mxu0 0.0
    %2448 = vmatpush1.msra.mxu0 0.0
    %2449 = vmatprep.subr.mxu0 0.0
    %2450 = vmatpush1.msra.mxu0 0.0
    %2451 = vmatprep.subr.mxu0 0.0
    %2452 = vmatpush1.msra.mxu0 0.0
    %2453 = vmatprep.subr.mxu0 0.0
    %2454 = vmatpush1.msra.mxu0 0.0
    %2455 = vmatprep.subr.mxu0 0.0
    %2456 = vmatpush1.msra.mxu0 0.0
    %2457 = vmatprep.subr.mxu0 0.0
    %2458 = vmatpush1.msra.mxu0 0.0
    %2459 = vmatprep.subr.mxu0 0.0
    %2460 = vmatpush1.msra.mxu0 0.0
    %2461 = vmatprep.mubr.f32.mxu0 0.0
    %2462 = vmatmul.mubr.f32.gmra.mrb[0].mxu0 0.0
    %v2463 = vpop.f32.mrb[0].mxu0
    %v2464 = vadd.f32 0.0, %v2463
    %v2465 = vpop.f32.mrb[0].mxu0
    %v2466 = vadd.f32 0.0, %v2465
    %2467 = vdwg.mxu0
    %v2468 = vadd.f32 %v2322, %v2393
    %v2469 = vadd.f32 %v2323, %v2395
    %v2470 = vadd.f32 %v2324, %v2464
    %v2471 = vadd.f32 %v2325, %v2466
    %v2472 = vxor.u32 %v2468, 2147483648
    %v2473 = vxor.u32 %v2469, 2147483648
    %v2474 = vxor.u32 %v2470, 2147483648
    %v2475 = vmul.f32 %v2472, 1.442695
    %v2476 = vpow.pop %v2475
    %v2477 = vmul.f32 %v2473, 1.442695
    %v2478 = vpow.pop %v2477
    %v2479 = vmul.f32 %v2474, 1.442695
    %v2480 = vpow.pop %v2479
    %v2481 = vadd.f32 %v2476, 1.0
    %v2482 = vadd.f32 %v2478, 1.0
    %v2483 = vadd.f32 %v2480, 1.0
    %v2484 = vrcp.pop %v2481
    %v2485 = vmul.f32 1.0, %v2484
    %v2486 = vrcp.pop %v2482
    %v2487 = vmul.f32 1.0, %v2486
    %v2488 = vrcp.pop %v2483
    %v2489 = vmul.f32 1.0, %v2488
    %v2490 = vtanh.pop %v2471
    %v2491 = vmul.f32 %v2487, 0.0
    %v2492 = vmul.f32 %v2485, %v2490
    %v2493 = vadd.f32 %v2491, %v2492
    %v2494 = vtanh.pop %v2493
    %v2495 = vmul.f32 %v2489, %v2494
    %v2496 = vrot.slane %v2165, 2
    %v2497 = vrot.slane %v2167, 2
    %v2498 = vrot.slane %v2242, 2
    %v2499 = vrot.slane %v2244, 2
    %v2504 = vsel %vm174, %v2159, %v2496
    %v2505 = vsel %vm175, %v2161, %v2497
    %v2506 = vsel %vm176, %v2236, %v2498
    %v2507 = vsel %vm177, %v2238, %v2499
    %2508 = vmatprep.subr.mxu0 %v2247
    %2509 = vmatpush1.msra.mxu0 %v2246
    %2510 = vmatprep.subr.mxu0 %v2251
    %2511 = vmatpush1.msra.mxu0 %v2250
    %2512 = vmatprep.subr.mxu0 %v2255
    %2513 = vmatpush1.msra.mxu0 %v2254
    %2514 = vmatprep.subr.mxu0 %v2259
    %2515 = vmatpush1.msra.mxu0 %v2258
    %2516 = vmatprep.subr.mxu0 %v2263
    %2517 = vmatpush1.msra.mxu0 %v2262
    %2518 = vmatprep.subr.mxu0 %v2267
    %2519 = vmatpush1.msra.mxu0 %v2266
    %2520 = vmatprep.subr.mxu0 %v2271
    %2521 = vmatpush1.msra.mxu0 %v2270
    %2522 = vmatprep.subr.mxu0 %v2275
    %2523 = vmatpush1.msra.mxu0 %v2274
    %2524 = vmatprep.subr.mxu0 %v2279
    %2525 = vmatpush1.msra.mxu0 %v2278
    %2526 = vmatprep.subr.mxu0 %v2283
    %2527 = vmatpush1.msra.mxu0 %v2282
    %2528 = vmatprep.subr.mxu0 %v2287
    %2529 = vmatpush1.msra.mxu0 %v2286
    %2530 = vmatprep.subr.mxu0 %v2291
    %2531 = vmatpush1.msra.mxu0 %v2290
    %2532 = vmatprep.subr.mxu0 %v2295
    %2533 = vmatpush1.msra.mxu0 %v2294
    %2534 = vmatprep.subr.mxu0 %v2299
    %2535 = vmatpush1.msra.mxu0 %v2298
    %2536 = vmatprep.subr.mxu0 %v2303
    %2537 = vmatpush1.msra.mxu0 %v2302
    %2538 = vmatprep.subr.mxu0 %v2307
    %2539 = vmatpush1.msra.mxu0 %v2306
    %2540 = vmatprep.subr.mxu0 0.0
    %2541 = vmatpush1.msra.mxu0 0.0
    %2542 = vmatprep.subr.mxu0 0.0
    %2543 = vmatpush1.msra.mxu0 0.0
    %2544 = vmatprep.subr.mxu0 0.0
    %2545 = vmatpush1.msra.mxu0 0.0
    %2546 = vmatprep.subr.mxu0 0.0
    %2547 = vmatpush1.msra.mxu0 0.0
    %2548 = vmatprep.subr.mxu0 0.0
    %2549 = vmatpush1.msra.mxu0 0.0
    %2550 = vmatprep.subr.mxu0 0.0
    %2551 = vmatpush1.msra.mxu0 0.0
    %2552 = vmatprep.subr.mxu0 0.0
    %2553 = vmatpush1.msra.mxu0 0.0
    %2554 = vmatprep.subr.mxu0 0.0
    %2555 = vmatpush1.msra.mxu0 0.0
    %2556 = vmatprep.subr.mxu0 0.0
    %2557 = vmatpush1.msra.mxu0 0.0
    %2558 = vmatprep.subr.mxu0 0.0
    %2559 = vmatpush1.msra.mxu0 0.0
    %2560 = vmatprep.subr.mxu0 0.0
    %2561 = vmatpush1.msra.mxu0 0.0
    %2562 = vmatprep.subr.mxu0 0.0
    %2563 = vmatpush1.msra.mxu0 0.0
    %2564 = vmatprep.subr.mxu0 0.0
    %2565 = vmatpush1.msra.mxu0 0.0
    %2566 = vmatprep.subr.mxu0 0.0
    %2567 = vmatpush1.msra.mxu0 0.0
    %2568 = vmatprep.subr.mxu0 0.0
    %2569 = vmatpush1.msra.mxu0 0.0
    %2570 = vmatprep.subr.mxu0 0.0
    %2571 = vmatpush1.msra.mxu0 0.0
    %2572 = vmatprep.mubr.f32.mxu0 0.0
    %2573 = vmatmul.mubr.f32.gmra.mrb[0].mxu0 %v2495
    %v2574 = vpop.f32.mrb[0].mxu0
    %v2575 = vadd.f32 0.0, %v2574
    %v2576 = vpop.f32.mrb[0].mxu0
    %v2577 = vadd.f32 0.0, %v2576
    %2578 = vdwg.mxu0
    %2579 = vmatprep.subr.mxu0 %v2249
    %2580 = vmatpush1.msra.mxu0 %v2248
    %2581 = vmatprep.subr.mxu0 %v2253
    %2582 = vmatpush1.msra.mxu0 %v2252
    %2583 = vmatprep.subr.mxu0 %v2257
    %2584 = vmatpush1.msra.mxu0 %v2256
    %2585 = vmatprep.subr.mxu0 %v2261
    %2586 = vmatpush1.msra.mxu0 %v2260
    %2587 = vmatprep.subr.mxu0 %v2265
    %2588 = vmatpush1.msra.mxu0 %v2264
    %2589 = vmatprep.subr.mxu0 %v2269
    %2590 = vmatpush1.msra.mxu0 %v2268
    %2591 = vmatprep.subr.mxu0 %v2273
    %2592 = vmatpush1.msra.mxu0 %v2272
    %2593 = vmatprep.subr.mxu0 %v2277
    %2594 = vmatpush1.msra.mxu0 %v2276
    %2595 = vmatprep.subr.mxu0 %v2281
    %2596 = vmatpush1.msra.mxu0 %v2280
    %2597 = vmatprep.subr.mxu0 %v2285
    %2598 = vmatpush1.msra.mxu0 %v2284
    %2599 = vmatprep.subr.mxu0 %v2289
    %2600 = vmatpush1.msra.mxu0 %v2288
    %2601 = vmatprep.subr.mxu0 %v2293
    %2602 = vmatpush1.msra.mxu0 %v2292
    %2603 = vmatprep.subr.mxu0 %v2297
    %2604 = vmatpush1.msra.mxu0 %v2296
    %2605 = vmatprep.subr.mxu0 %v2301
    %2606 = vmatpush1.msra.mxu0 %v2300
    %2607 = vmatprep.subr.mxu0 %v2305
    %2608 = vmatpush1.msra.mxu0 %v2304
    %2609 = vmatprep.subr.mxu0 %v2309
    %2610 = vmatpush1.msra.mxu0 %v2308
    %2611 = vmatprep.subr.mxu0 0.0
    %2612 = vmatpush1.msra.mxu0 0.0
    %2613 = vmatprep.subr.mxu0 0.0
    %2614 = vmatpush1.msra.mxu0 0.0
    %2615 = vmatprep.subr.mxu0 0.0
    %2616 = vmatpush1.msra.mxu0 0.0
    %2617 = vmatprep.subr.mxu0 0.0
    %2618 = vmatpush1.msra.mxu0 0.0
    %2619 = vmatprep.subr.mxu0 0.0
    %2620 = vmatpush1.msra.mxu0 0.0
    %2621 = vmatprep.subr.mxu0 0.0
    %2622 = vmatpush1.msra.mxu0 0.0
    %2623 = vmatprep.subr.mxu0 0.0
    %2624 = vmatpush1.msra.mxu0 0.0
    %2625 = vmatprep.subr.mxu0 0.0
    %2626 = vmatpush1.msra.mxu0 0.0
    %2627 = vmatprep.subr.mxu0 0.0
    %2628 = vmatpush1.msra.mxu0 0.0
    %2629 = vmatprep.subr.mxu0 0.0
    %2630 = vmatpush1.msra.mxu0 0.0
    %2631 = vmatprep.subr.mxu0 0.0
    %2632 = vmatpush1.msra.mxu0 0.0
    %2633 = vmatprep.subr.mxu0 0.0
    %2634 = vmatpush1.msra.mxu0 0.0
    %2635 = vmatprep.subr.mxu0 0.0
    %2636 = vmatpush1.msra.mxu0 0.0
    %2637 = vmatprep.subr.mxu0 0.0
    %2638 = vmatpush1.msra.mxu0 0.0
    %2639 = vmatprep.subr.mxu0 0.0
    %2640 = vmatpush1.msra.mxu0 0.0
    %2641 = vmatprep.subr.mxu0 0.0
    %2642 = vmatpush1.msra.mxu0 0.0
    %2643 = vmatprep.mubr.f32.mxu0 0.0
    %2644 = vmatmul.mubr.f32.gmra.mrb[0].mxu0 %v2495
    %v2645 = vpop.f32.mrb[0].mxu0
    %v2646 = vadd.f32 0.0, %v2645
    %v2647 = vpop.f32.mrb[0].mxu0
    %v2648 = vadd.f32 0.0, %v2647
    %2649 = vdwg.mxu0
    %v2654 = vrot.slane %v2575, 6
    %v2655 = vrot.slane %v2577, 6
    %v2656 = vrot.slane %v2646, 6
    %v2657 = vrot.slane %v2648, 6
    %v2662 = vadd.f32 %v2504, %v2654
    %v2663 = vadd.f32 %v2505, %v2655
    %v2664 = vadd.f32 %v2506, %v2656
    %v2665 = vadd.f32 %v2507, %v2657
    %v2666 = vxor.u32 %v2662, 2147483648
    %v2667 = vxor.u32 %v2663, 2147483648
    %v2668 = vxor.u32 %v2664, 2147483648
    %v2669 = vmul.f32 %v2666, 1.442695
    %v2670 = vpow.pop %v2669
    %v2671 = vmul.f32 %v2667, 1.442695
    %v2672 = vpow.pop %v2671
    %v2673 = vmul.f32 %v2668, 1.442695
    %v2674 = vpow.pop %v2673
    %v2675 = vadd.f32 %v2670, 1.0
    %v2676 = vadd.f32 %v2672, 1.0
    %v2677 = vadd.f32 %v2674, 1.0
    %v2678 = vrcp.pop %v2675
    %v2679 = vmul.f32 1.0, %v2678
    %v2680 = vrcp.pop %v2676
    %v2681 = vmul.f32 1.0, %v2680
    %v2682 = vrcp.pop %v2677
    %v2683 = vmul.f32 1.0, %v2682
    %v2684 = vtanh.pop %v2665
    %v2686 = vrot.slane %v2493, 6
    %v2688 = vmul.f32 %v2681, %v2686
    %v2689 = vmul.f32 %v2679, %v2684
    %v2690 = vadd.f32 %v2688, %v2689
    %v2691 = vtanh.pop %v2690
    %v2692 = vmul.f32 %v2683, %v2691
    %v2694 = vrot.slane %v2692, 2
    %2696 = vmatprep.subr.mxu0 %v2247
    %2697 = vmatpush1.msra.mxu0 %v2246
    %2698 = vmatprep.subr.mxu0 %v2251
    %2699 = vmatpush1.msra.mxu0 %v2250
    %2700 = vmatprep.subr.mxu0 %v2255
    %2701 = vmatpush1.msra.mxu0 %v2254
    %2702 = vmatprep.subr.mxu0 %v2259
    %2703 = vmatpush1.msra.mxu0 %v2258
    %2704 = vmatprep.subr.mxu0 %v2263
    %2705 = vmatpush1.msra.mxu0 %v2262
    %2706 = vmatprep.subr.mxu0 %v2267
    %2707 = vmatpush1.msra.mxu0 %v2266
    %2708 = vmatprep.subr.mxu0 %v2271
    %2709 = vmatpush1.msra.mxu0 %v2270
    %2710 = vmatprep.subr.mxu0 %v2275
    %2711 = vmatpush1.msra.mxu0 %v2274
    %2712 = vmatprep.subr.mxu0 %v2279
    %2713 = vmatpush1.msra.mxu0 %v2278
    %2714 = vmatprep.subr.mxu0 %v2283
    %2715 = vmatpush1.msra.mxu0 %v2282
    %2716 = vmatprep.subr.mxu0 %v2287
    %2717 = vmatpush1.msra.mxu0 %v2286
    %2718 = vmatprep.subr.mxu0 %v2291
    %2719 = vmatpush1.msra.mxu0 %v2290
    %2720 = vmatprep.subr.mxu0 %v2295
    %2721 = vmatpush1.msra.mxu0 %v2294
    %2722 = vmatprep.subr.mxu0 %v2299
    %2723 = vmatpush1.msra.mxu0 %v2298
    %2724 = vmatprep.subr.mxu0 %v2303
    %2725 = vmatpush1.msra.mxu0 %v2302
    %2726 = vmatprep.subr.mxu0 %v2307
    %2727 = vmatpush1.msra.mxu0 %v2306
    %2728 = vmatprep.subr.mxu0 0.0
    %2729 = vmatpush1.msra.mxu0 0.0
    %2730 = vmatprep.subr.mxu0 0.0
    %2731 = vmatpush1.msra.mxu0 0.0
    %2732 = vmatprep.subr.mxu0 0.0
    %2733 = vmatpush1.msra.mxu0 0.0
    %2734 = vmatprep.subr.mxu0 0.0
    %2735 = vmatpush1.msra.mxu0 0.0
    %2736 = vmatprep.subr.mxu0 0.0
    %2737 = vmatpush1.msra.mxu0 0.0
    %2738 = vmatprep.subr.mxu0 0.0
    %2739 = vmatpush1.msra.mxu0 0.0
    %2740 = vmatprep.subr.mxu0 0.0
    %2741 = vmatpush1.msra.mxu0 0.0
    %2742 = vmatprep.subr.mxu0 0.0
    %2743 = vmatpush1.msra.mxu0 0.0
    %2744 = vmatprep.subr.mxu0 0.0
    %2745 = vmatpush1.msra.mxu0 0.0
    %2746 = vmatprep.subr.mxu0 0.0
    %2747 = vmatpush1.msra.mxu0 0.0
    %2748 = vmatprep.subr.mxu0 0.0
    %2749 = vmatpush1.msra.mxu0 0.0
    %2750 = vmatprep.subr.mxu0 0.0
    %2751 = vmatpush1.msra.mxu0 0.0
    %2752 = vmatprep.subr.mxu0 0.0
    %2753 = vmatpush1.msra.mxu0 0.0
    %2754 = vmatprep.subr.mxu0 0.0
    %2755 = vmatpush1.msra.mxu0 0.0
    %2756 = vmatprep.subr.mxu0 0.0
    %2757 = vmatpush1.msra.mxu0 0.0
    %2758 = vmatprep.subr.mxu0 0.0
    %2759 = vmatpush1.msra.mxu0 0.0
    %2760 = vmatprep.mubr.f32.mxu0 0.0
    %2761 = vmatmul.mubr.f32.gmra.mrb[0].mxu0 %v2694
    %v2762 = vpop.f32.mrb[0].mxu0
    %v2763 = vadd.f32 0.0, %v2762
    %v2764 = vpop.f32.mrb[0].mxu0
    %v2765 = vadd.f32 0.0, %v2764
    %2766 = vdwg.mxu0
    %2767 = vmatprep.subr.mxu0 %v2249
    %2768 = vmatpush1.msra.mxu0 %v2248
    %2769 = vmatprep.subr.mxu0 %v2253
    %2770 = vmatpush1.msra.mxu0 %v2252
    %2771 = vmatprep.subr.mxu0 %v2257
    %2772 = vmatpush1.msra.mxu0 %v2256
    %2773 = vmatprep.subr.mxu0 %v2261
    %2774 = vmatpush1.msra.mxu0 %v2260
    %2775 = vmatprep.subr.mxu0 %v2265
    %2776 = vmatpush1.msra.mxu0 %v2264
    %2777 = vmatprep.subr.mxu0 %v2269
    %2778 = vmatpush1.msra.mxu0 %v2268
    %2779 = vmatprep.subr.mxu0 %v2273
    %2780 = vmatpush1.msra.mxu0 %v2272
    %2781 = vmatprep.subr.mxu0 %v2277
    %2782 = vmatpush1.msra.mxu0 %v2276
    %2783 = vmatprep.subr.mxu0 %v2281
    %2784 = vmatpush1.msra.mxu0 %v2280
    %2785 = vmatprep.subr.mxu0 %v2285
    %2786 = vmatpush1.msra.mxu0 %v2284
    %2787 = vmatprep.subr.mxu0 %v2289
    %2788 = vmatpush1.msra.mxu0 %v2288
    %2789 = vmatprep.subr.mxu0 %v2293
    %2790 = vmatpush1.msra.mxu0 %v2292
    %2791 = vmatprep.subr.mxu0 %v2297
    %2792 = vmatpush1.msra.mxu0 %v2296
    %2793 = vmatprep.subr.mxu0 %v2301
    %2794 = vmatpush1.msra.mxu0 %v2300
    %2795 = vmatprep.subr.mxu0 %v2305
    %2796 = vmatpush1.msra.mxu0 %v2304
    %2797 = vmatprep.subr.mxu0 %v2309
    %2798 = vmatpush1.msra.mxu0 %v2308
    %2799 = vmatprep.subr.mxu0 0.0
    %2800 = vmatpush1.msra.mxu0 0.0
    %2801 = vmatprep.subr.mxu0 0.0
    %2802 = vmatpush1.msra.mxu0 0.0
    %2803 = vmatprep.subr.mxu0 0.0
    %2804 = vmatpush1.msra.mxu0 0.0
    %2805 = vmatprep.subr.mxu0 0.0
    %2806 = vmatpush1.msra.mxu0 0.0
    %2807 = vmatprep.subr.mxu0 0.0
    %2808 = vmatpush1.msra.mxu0 0.0
    %2809 = vmatprep.subr.mxu0 0.0
    %2810 = vmatpush1.msra.mxu0 0.0
    %2811 = vmatprep.subr.mxu0 0.0
    %2812 = vmatpush1.msra.mxu0 0.0
    %2813 = vmatprep.subr.mxu0 0.0
    %2814 = vmatpush1.msra.mxu0 0.0
    %2815 = vmatprep.subr.mxu0 0.0
    %2816 = vmatpush1.msra.mxu0 0.0
    %2817 = vmatprep.subr.mxu0 0.0
    %2818 = vmatpush1.msra.mxu0 0.0
    %2819 = vmatprep.subr.mxu0 0.0
    %2820 = vmatpush1.msra.mxu0 0.0
    %2821 = vmatprep.subr.mxu0 0.0
    %2822 = vmatpush1.msra.mxu0 0.0
    %2823 = vmatprep.subr.mxu0 0.0
    %2824 = vmatpush1.msra.mxu0 0.0
    %2825 = vmatprep.subr.mxu0 0.0
    %2826 = vmatpush1.msra.mxu0 0.0
    %2827 = vmatprep.subr.mxu0 0.0
    %2828 = vmatpush1.msra.mxu0 0.0
    %2829 = vmatprep.subr.mxu0 0.0
    %2830 = vmatpush1.msra.mxu0 0.0
    %2831 = vmatprep.mubr.f32.mxu0 0.0
    %2832 = vmatmul.mubr.f32.gmra.mrb[0].mxu0 %v2694
    %v2833 = vpop.f32.mrb[0].mxu0
    %v2834 = vadd.f32 0.0, %v2833
    %v2835 = vpop.f32.mrb[0].mxu0
    %v2836 = vadd.f32 0.0, %v2835
    %2837 = vdwg.mxu0
    %v2842 = vrot.slane %v2763, 4
    %v2843 = vrot.slane %v2765, 4
    %v2844 = vrot.slane %v2834, 4
    %v2845 = vrot.slane %v2836, 4
    %v2850 = vadd.f32 %v2322, %v2842
    %v2851 = vadd.f32 %v2323, %v2843
    %v2852 = vadd.f32 %v2324, %v2844
    %v2853 = vadd.f32 %v2325, %v2845
    %v2854 = vxor.u32 %v2850, 2147483648
    %v2855 = vxor.u32 %v2851, 2147483648
    %v2856 = vxor.u32 %v2852, 2147483648
    %v2857 = vmul.f32 %v2854, 1.442695
    %v2858 = vpow.pop %v2857
    %v2859 = vmul.f32 %v2855, 1.442695
    %v2860 = vpow.pop %v2859
    %v2861 = vmul.f32 %v2856, 1.442695
    %v2862 = vpow.pop %v2861
    %v2863 = vadd.f32 %v2858, 1.0
    %v2864 = vadd.f32 %v2860, 1.0
    %v2865 = vadd.f32 %v2862, 1.0
    %v2866 = vrcp.pop %v2863
    %v2867 = vmul.f32 1.0, %v2866
    %v2868 = vrcp.pop %v2864
    %v2869 = vmul.f32 1.0, %v2868
    %v2870 = vrcp.pop %v2865
    %v2871 = vmul.f32 1.0, %v2870
    %v2872 = vtanh.pop %v2853
    %v2874 = vrot.slane %v2690, 6
    %v2876 = vmul.f32 %v2869, %v2874
    %v2877 = vmul.f32 %v2867, %v2872
    %v2878 = vadd.f32 %v2876, %v2877
    %v2879 = vtanh.pop %v2878
    %v2880 = vmul.f32 %v2871, %v2879
    %v2882 = vrot.slane %v2880, 4
    %2884 = vmatprep.subr.mxu0 %v2247
    %2885 = vmatpush1.msra.mxu0 %v2246
    %2886 = vmatprep.subr.mxu0 %v2251
    %2887 = vmatpush1.msra.mxu0 %v2250
    %2888 = vmatprep.subr.mxu0 %v2255
    %2889 = vmatpush1.msra.mxu0 %v2254
    %2890 = vmatprep.subr.mxu0 %v2259
    %2891 = vmatpush1.msra.mxu0 %v2258
    %2892 = vmatprep.subr.mxu0 %v2263
    %2893 = vmatpush1.msra.mxu0 %v2262
    %2894 = vmatprep.subr.mxu0 %v2267
    %2895 = vmatpush1.msra.mxu0 %v2266
    %2896 = vmatprep.subr.mxu0 %v2271
    %2897 = vmatpush1.msra.mxu0 %v2270
    %2898 = vmatprep.subr.mxu0 %v2275
    %2899 = vmatpush1.msra.mxu0 %v2274
    %2900 = vmatprep.subr.mxu0 %v2279
    %2901 = vmatpush1.msra.mxu0 %v2278
    %2902 = vmatprep.subr.mxu0 %v2283
    %2903 = vmatpush1.msra.mxu0 %v2282
    %2904 = vmatprep.subr.mxu0 %v2287
    %2905 = vmatpush1.msra.mxu0 %v2286
    %2906 = vmatprep.subr.mxu0 %v2291
    %2907 = vmatpush1.msra.mxu0 %v2290
    %2908 = vmatprep.subr.mxu0 %v2295
    %2909 = vmatpush1.msra.mxu0 %v2294
    %2910 = vmatprep.subr.mxu0 %v2299
    %2911 = vmatpush1.msra.mxu0 %v2298
    %2912 = vmatprep.subr.mxu0 %v2303
    %2913 = vmatpush1.msra.mxu0 %v2302
    %2914 = vmatprep.subr.mxu0 %v2307
    %2915 = vmatpush1.msra.mxu0 %v2306
    %2916 = vmatprep.subr.mxu0 0.0
    %2917 = vmatpush1.msra.mxu0 0.0
    %2918 = vmatprep.subr.mxu0 0.0
    %2919 = vmatpush1.msra.mxu0 0.0
    %2920 = vmatprep.subr.mxu0 0.0
    %2921 = vmatpush1.msra.mxu0 0.0
    %2922 = vmatprep.subr.mxu0 0.0
    %2923 = vmatpush1.msra.mxu0 0.0
    %2924 = vmatprep.subr.mxu0 0.0
    %2925 = vmatpush1.msra.mxu0 0.0
    %2926 = vmatprep.subr.mxu0 0.0
    %2927 = vmatpush1.msra.mxu0 0.0
    %2928 = vmatprep.subr.mxu0 0.0
    %2929 = vmatpush1.msra.mxu0 0.0
    %2930 = vmatprep.subr.mxu0 0.0
    %2931 = vmatpush1.msra.mxu0 0.0
    %2932 = vmatprep.subr.mxu0 0.0
    %2933 = vmatpush1.msra.mxu0 0.0
    %2934 = vmatprep.subr.mxu0 0.0
    %2935 = vmatpush1.msra.mxu0 0.0
    %2936 = vmatprep.subr.mxu0 0.0
    %2937 = vmatpush1.msra.mxu0 0.0
    %2938 = vmatprep.subr.mxu0 0.0
    %2939 = vmatpush1.msra.mxu0 0.0
    %2940 = vmatprep.subr.mxu0 0.0
    %2941 = vmatpush1.msra.mxu0 0.0
    %2942 = vmatprep.subr.mxu0 0.0
    %2943 = vmatpush1.msra.mxu0 0.0
    %2944 = vmatprep.subr.mxu0 0.0
    %2945 = vmatpush1.msra.mxu0 0.0
    %2946 = vmatprep.subr.mxu0 0.0
    %2947 = vmatpush1.msra.mxu0 0.0
    %2948 = vmatprep.mubr.f32.mxu0 0.0
    %2949 = vmatmul.mubr.f32.gmra.mrb[0].mxu0 %v2882
    %v2950 = vpop.f32.mrb[0].mxu0
    %v2951 = vadd.f32 0.0, %v2950
    %v2952 = vpop.f32.mrb[0].mxu0
    %v2953 = vadd.f32 0.0, %v2952
    %2954 = vdwg.mxu0
    %2955 = vmatprep.subr.mxu0 %v2249
    %2956 = vmatpush1.msra.mxu0 %v2248
    %2957 = vmatprep.subr.mxu0 %v2253
    %2958 = vmatpush1.msra.mxu0 %v2252
    %2959 = vmatprep.subr.mxu0 %v2257
    %2960 = vmatpush1.msra.mxu0 %v2256
    %2961 = vmatprep.subr.mxu0 %v2261
    %2962 = vmatpush1.msra.mxu0 %v2260
    %2963 = vmatprep.subr.mxu0 %v2265
    %2964 = vmatpush1.msra.mxu0 %v2264
    %2965 = vmatprep.subr.mxu0 %v2269
    %2966 = vmatpush1.msra.mxu0 %v2268
    %2967 = vmatprep.subr.mxu0 %v2273
    %2968 = vmatpush1.msra.mxu0 %v2272
    %2969 = vmatprep.subr.mxu0 %v2277
    %2970 = vmatpush1.msra.mxu0 %v2276
    %2971 = vmatprep.subr.mxu0 %v2281
    %2972 = vmatpush1.msra.mxu0 %v2280
    %2973 = vmatprep.subr.mxu0 %v2285
    %2974 = vmatpush1.msra.mxu0 %v2284
    %2975 = vmatprep.subr.mxu0 %v2289
    %2976 = vmatpush1.msra.mxu0 %v2288
    %2977 = vmatprep.subr.mxu0 %v2293
    %2978 = vmatpush1.msra.mxu0 %v2292
    %2979 = vmatprep.subr.mxu0 %v2297
    %2980 = vmatpush1.msra.mxu0 %v2296
    %2981 = vmatprep.subr.mxu0 %v2301
    %2982 = vmatpush1.msra.mxu0 %v2300
    %2983 = vmatprep.subr.mxu0 %v2305
    %2984 = vmatpush1.msra.mxu0 %v2304
    %2985 = vmatprep.subr.mxu0 %v2309
    %2986 = vmatpush1.msra.mxu0 %v2308
    %2987 = vmatprep.subr.mxu0 0.0
    %2988 = vmatpush1.msra.mxu0 0.0
    %2989 = vmatprep.subr.mxu0 0.0
    %2990 = vmatpush1.msra.mxu0 0.0
    %2991 = vmatprep.subr.mxu0 0.0
    %2992 = vmatpush1.msra.mxu0 0.0
    %2993 = vmatprep.subr.mxu0 0.0
    %2994 = vmatpush1.msra.mxu0 0.0
    %2995 = vmatprep.subr.mxu0 0.0
    %2996 = vmatpush1.msra.mxu0 0.0
    %2997 = vmatprep.subr.mxu0 0.0
    %2998 = vmatpush1.msra.mxu0 0.0
    %2999 = vmatprep.subr.mxu0 0.0
    %3000 = vmatpush1.msra.mxu0 0.0
    %3001 = vmatprep.subr.mxu0 0.0
    %3002 = vmatpush1.msra.mxu0 0.0
    %3003 = vmatprep.subr.mxu0 0.0
    %3004 = vmatpush1.msra.mxu0 0.0
    %3005 = vmatprep.subr.mxu0 0.0
    %3006 = vmatpush1.msra.mxu0 0.0
    %3007 = vmatprep.subr.mxu0 0.0
    %3008 = vmatpush1.msra.mxu0 0.0
    %3009 = vmatprep.subr.mxu0 0.0
    %3010 = vmatpush1.msra.mxu0 0.0
    %3011 = vmatprep.subr.mxu0 0.0
    %3012 = vmatpush1.msra.mxu0 0.0
    %3013 = vmatprep.subr.mxu0 0.0
    %3014 = vmatpush1.msra.mxu0 0.0
    %3015 = vmatprep.subr.mxu0 0.0
    %3016 = vmatpush1.msra.mxu0 0.0
    %3017 = vmatprep.subr.mxu0 0.0
    %3018 = vmatpush1.msra.mxu0 0.0
    %3019 = vmatprep.mubr.f32.mxu0 0.0
    %3020 = vmatmul.mubr.f32.gmra.mrb[0].mxu0 %v2882
    %v3021 = vpop.f32.mrb[0].mxu0
    %v3022 = vadd.f32 0.0, %v3021
    %v3023 = vpop.f32.mrb[0].mxu0
    %v3024 = vadd.f32 0.0, %v3023
    %3025 = vdwg.mxu0
    %v3030 = vrot.slane %v2951, 2
    %v3031 = vrot.slane %v2953, 2
    %v3032 = vrot.slane %v3022, 2
    %v3033 = vrot.slane %v3024, 2
    %v3038 = vadd.f32 %v2504, %v3030
    %v3039 = vadd.f32 %v2505, %v3031
    %v3040 = vadd.f32 %v2506, %v3032
    %v3041 = vadd.f32 %v2507, %v3033
    %v3042 = vxor.u32 %v3038, 2147483648
    %v3043 = vxor.u32 %v3039, 2147483648
    %v3044 = vxor.u32 %v3040, 2147483648
    %v3045 = vmul.f32 %v3042, 1.442695
    %v3046 = vpow.pop %v3045
    %v3047 = vmul.f32 %v3043, 1.442695
    %v3048 = vpow.pop %v3047
    %v3049 = vmul.f32 %v3044, 1.442695
    %v3050 = vpow.pop %v3049
    %v3051 = vadd.f32 %v3046, 1.0
    %v3052 = vadd.f32 %v3048, 1.0
    %v3053 = vadd.f32 %v3050, 1.0
    %v3054 = vrcp.pop %v3051
    %v3055 = vmul.f32 1.0, %v3054
    %v3056 = vrcp.pop %v3052
    %v3057 = vmul.f32 1.0, %v3056
    %v3058 = vrcp.pop %v3053
    %v3059 = vmul.f32 1.0, %v3058
    %v3060 = vtanh.pop %v3041
    %v3062 = vrot.slane %v2878, 6
    %v3064 = vmul.f32 %v3057, %v3062
    %v3065 = vmul.f32 %v3055, %v3060
    %v3066 = vadd.f32 %v3064, %v3065
    %v3067 = vtanh.pop %v3066
    %v3068 = vmul.f32 %v3059, %v3067
    %v3073 = vrot.slane %v2159, 6
    %v3074 = vrot.slane %v2161, 6
    %v3075 = vrot.slane %v2236, 6
    %v3076 = vrot.slane %v2238, 6
    %v3081 = vsel %vm174, %v2165, %v3073
    %v3082 = vsel %vm175, %v2167, %v3074
    %v3083 = vsel %vm176, %v2242, %v3075
    %v3084 = vsel %vm177, %v2244, %v3076
    %v3086 = vrot.slane %v3068, 6
    %3088 = vmatprep.subr.mxu0 %v2247
    %3089 = vmatpush1.msra.mxu0 %v2246
    %3090 = vmatprep.subr.mxu0 %v2251
    %3091 = vmatpush1.msra.mxu0 %v2250
    %3092 = vmatprep.subr.mxu0 %v2255
    %3093 = vmatpush1.msra.mxu0 %v2254
    %3094 = vmatprep.subr.mxu0 %v2259
    %3095 = vmatpush1.msra.mxu0 %v2258
    %3096 = vmatprep.subr.mxu0 %v2263
    %3097 = vmatpush1.msra.mxu0 %v2262
    %3098 = vmatprep.subr.mxu0 %v2267
    %3099 = vmatpush1.msra.mxu0 %v2266
    %3100 = vmatprep.subr.mxu0 %v2271
    %3101 = vmatpush1.msra.mxu0 %v2270
    %3102 = vmatprep.subr.mxu0 %v2275
    %3103 = vmatpush1.msra.mxu0 %v2274
    %3104 = vmatprep.subr.mxu0 %v2279
    %3105 = vmatpush1.msra.mxu0 %v2278
    %3106 = vmatprep.subr.mxu0 %v2283
    %3107 = vmatpush1.msra.mxu0 %v2282
    %3108 = vmatprep.subr.mxu0 %v2287
    %3109 = vmatpush1.msra.mxu0 %v2286
    %3110 = vmatprep.subr.mxu0 %v2291
    %3111 = vmatpush1.msra.mxu0 %v2290
    %3112 = vmatprep.subr.mxu0 %v2295
    %3113 = vmatpush1.msra.mxu0 %v2294
    %3114 = vmatprep.subr.mxu0 %v2299
    %3115 = vmatpush1.msra.mxu0 %v2298
    %3116 = vmatprep.subr.mxu0 %v2303
    %3117 = vmatpush1.msra.mxu0 %v2302
    %3118 = vmatprep.subr.mxu0 %v2307
    %3119 = vmatpush1.msra.mxu0 %v2306
    %3120 = vmatprep.subr.mxu0 0.0
    %3121 = vmatpush1.msra.mxu0 0.0
    %3122 = vmatprep.subr.mxu0 0.0
    %3123 = vmatpush1.msra.mxu0 0.0
    %3124 = vmatprep.subr.mxu0 0.0
    %3125 = vmatpush1.msra.mxu0 0.0
    %3126 = vmatprep.subr.mxu0 0.0
    %3127 = vmatpush1.msra.mxu0 0.0
    %3128 = vmatprep.subr.mxu0 0.0
    %3129 = vmatpush1.msra.mxu0 0.0
    %3130 = vmatprep.subr.mxu0 0.0
    %3131 = vmatpush1.msra.mxu0 0.0
    %3132 = vmatprep.subr.mxu0 0.0
    %3133 = vmatpush1.msra.mxu0 0.0
    %3134 = vmatprep.subr.mxu0 0.0
    %3135 = vmatpush1.msra.mxu0 0.0
    %3136 = vmatprep.subr.mxu0 0.0
    %3137 = vmatpush1.msra.mxu0 0.0
    %3138 = vmatprep.subr.mxu0 0.0
    %3139 = vmatpush1.msra.mxu0 0.0
    %3140 = vmatprep.subr.mxu0 0.0
    %3141 = vmatpush1.msra.mxu0 0.0
    %3142 = vmatprep.subr.mxu0 0.0
    %3143 = vmatpush1.msra.mxu0 0.0
    %3144 = vmatprep.subr.mxu0 0.0
    %3145 = vmatpush1.msra.mxu0 0.0
    %3146 = vmatprep.subr.mxu0 0.0
    %3147 = vmatpush1.msra.mxu0 0.0
    %3148 = vmatprep.subr.mxu0 0.0
    %3149 = vmatpush1.msra.mxu0 0.0
    %3150 = vmatprep.subr.mxu0 0.0
    %3151 = vmatpush1.msra.mxu0 0.0
    %3152 = vmatprep.mubr.f32.mxu0 0.0
    %3153 = vmatmul.mubr.f32.gmra.mrb[0].mxu0 %v3086
    %v3154 = vpop.f32.mrb[0].mxu0
    %v3155 = vadd.f32 0.0, %v3154
    %v3156 = vpop.f32.mrb[0].mxu0
    %v3157 = vadd.f32 0.0, %v3156
    %3158 = vdwg.mxu0
    %3159 = vmatprep.subr.mxu0 %v2249
    %3160 = vmatpush1.msra.mxu0 %v2248
    %3161 = vmatprep.subr.mxu0 %v2253
    %3162 = vmatpush1.msra.mxu0 %v2252
    %3163 = vmatprep.subr.mxu0 %v2257
    %3164 = vmatpush1.msra.mxu0 %v2256
    %3165 = vmatprep.subr.mxu0 %v2261
    %3166 = vmatpush1.msra.mxu0 %v2260
    %3167 = vmatprep.subr.mxu0 %v2265
    %3168 = vmatpush1.msra.mxu0 %v2264
    %3169 = vmatprep.subr.mxu0 %v2269
    %3170 = vmatpush1.msra.mxu0 %v2268
    %3171 = vmatprep.subr.mxu0 %v2273
    %3172 = vmatpush1.msra.mxu0 %v2272
    %3173 = vmatprep.subr.mxu0 %v2277
    %3174 = vmatpush1.msra.mxu0 %v2276
    %3175 = vmatprep.subr.mxu0 %v2281
    %3176 = vmatpush1.msra.mxu0 %v2280
    %3177 = vmatprep.subr.mxu0 %v2285
    %3178 = vmatpush1.msra.mxu0 %v2284
    %3179 = vmatprep.subr.mxu0 %v2289
    %3180 = vmatpush1.msra.mxu0 %v2288
    %3181 = vmatprep.subr.mxu0 %v2293
    %3182 = vmatpush1.msra.mxu0 %v2292
    %3183 = vmatprep.subr.mxu0 %v2297
    %3184 = vmatpush1.msra.mxu0 %v2296
    %3185 = vmatprep.subr.mxu0 %v2301
    %3186 = vmatpush1.msra.mxu0 %v2300
    %3187 = vmatprep.subr.mxu0 %v2305
    %3188 = vmatpush1.msra.mxu0 %v2304
    %3189 = vmatprep.subr.mxu0 %v2309
    %3190 = vmatpush1.msra.mxu0 %v2308
    %3191 = vmatprep.subr.mxu0 0.0
    %3192 = vmatpush1.msra.mxu0 0.0
    %3193 = vmatprep.subr.mxu0 0.0
    %3194 = vmatpush1.msra.mxu0 0.0
    %3195 = vmatprep.subr.mxu0 0.0
    %3196 = vmatpush1.msra.mxu0 0.0
    %3197 = vmatprep.subr.mxu0 0.0
    %3198 = vmatpush1.msra.mxu0 0.0
    %3199 = vmatprep.subr.mxu0 0.0
    %3200 = vmatpush1.msra.mxu0 0.0
    %3201 = vmatprep.subr.mxu0 0.0
    %3202 = vmatpush1.msra.mxu0 0.0
    %3203 = vmatprep.subr.mxu0 0.0
    %3204 = vmatpush1.msra.mxu0 0.0
    %3205 = vmatprep.subr.mxu0 0.0
    %3206 = vmatpush1.msra.mxu0 0.0
    %3207 = vmatprep.subr.mxu0 0.0
    %3208 = vmatpush1.msra.mxu0 0.0
    %3209 = vmatprep.subr.mxu0 0.0
    %3210 = vmatpush1.msra.mxu0 0.0
    %3211 = vmatprep.subr.mxu0 0.0
    %3212 = vmatpush1.msra.mxu0 0.0
    %3213 = vmatprep.subr.mxu0 0.0
    %3214 = vmatpush1.msra.mxu0 0.0
    %3215 = vmatprep.subr.mxu0 0.0
    %3216 = vmatpush1.msra.mxu0 0.0
    %3217 = vmatprep.subr.mxu0 0.0
    %3218 = vmatpush1.msra.mxu0 0.0
    %3219 = vmatprep.subr.mxu0 0.0
    %3220 = vmatpush1.msra.mxu0 0.0
    %3221 = vmatprep.subr.mxu0 0.0
    %3222 = vmatpush1.msra.mxu0 0.0
    %3223 = vmatprep.mubr.f32.mxu0 0.0
    %3224 = vmatmul.mubr.f32.gmra.mrb[0].mxu0 %v3086
    %v3225 = vpop.f32.mrb[0].mxu0
    %v3226 = vadd.f32 0.0, %v3225
    %v3227 = vpop.f32.mrb[0].mxu0
    %v3228 = vadd.f32 0.0, %v3227
    %3229 = vdwg.mxu0
    %v3230 = vadd.f32 %v3081, %v3155
    %v3231 = vadd.f32 %v3082, %v3157
    %v3232 = vadd.f32 %v3083, %v3226
    %v3233 = vadd.f32 %v3084, %v3228
    %v3234 = vxor.u32 %v3230, 2147483648
    %v3235 = vxor.u32 %v3231, 2147483648
    %v3236 = vxor.u32 %v3232, 2147483648
    %v3237 = vmul.f32 %v3234, 1.442695
    %v3238 = vpow.pop %v3237
    %v3239 = vmul.f32 %v3235, 1.442695
    %v3240 = vpow.pop %v3239
    %v3241 = vmul.f32 %v3236, 1.442695
    %v3242 = vpow.pop %v3241
    %v3243 = vadd.f32 %v3238, 1.0
    %v3244 = vadd.f32 %v3240, 1.0
    %v3245 = vadd.f32 %v3242, 1.0
    %v3246 = vrcp.pop %v3243
    %v3247 = vmul.f32 1.0, %v3246
    %v3248 = vrcp.pop %v3244
    %v3249 = vmul.f32 1.0, %v3248
    %v3250 = vrcp.pop %v3245
    %v3251 = vmul.f32 1.0, %v3250
    %v3252 = vtanh.pop %v3233
    %v3254 = vrot.slane %v3066, 6
    %v3256 = vmul.f32 %v3249, %v3254
    %v3257 = vmul.f32 %v3247, %v3252
    %v3258 = vadd.f32 %v3256, %v3257
    %v3259 = vtanh.pop %v3258
    %v3260 = vmul.f32 %v3251, %v3259
    %v3261 = vrot.slane %v2159, 2
    %v3262 = vrot.slane %v2161, 2
    %v3263 = vrot.slane %v2236, 2
    %v3264 = vrot.slane %v2238, 2
    %v3269 = vsel %vm174, %v2165, %v3261
    %v3270 = vsel %vm175, %v2167, %v3262
    %v3271 = vsel %vm176, %v2242, %v3263
    %v3272 = vsel %vm177, %v2244, %v3264
    %3273 = vmatprep.subr.mxu0 %v2247
    %3274 = vmatpush1.msra.mxu0 %v2246
    %3275 = vmatprep.subr.mxu0 %v2251
    %3276 = vmatpush1.msra.mxu0 %v2250
    %3277 = vmatprep.subr.mxu0 %v2255
    %3278 = vmatpush1.msra.mxu0 %v2254
    %3279 = vmatprep.subr.mxu0 %v2259
    %3280 = vmatpush1.msra.mxu0 %v2258
    %3281 = vmatprep.subr.mxu0 %v2263
    %3282 = vmatpush1.msra.mxu0 %v2262
    %3283 = vmatprep.subr.mxu0 %v2267
    %3284 = vmatpush1.msra.mxu0 %v2266
    %3285 = vmatprep.subr.mxu0 %v2271
    %3286 = vmatpush1.msra.mxu0 %v2270
    %3287 = vmatprep.subr.mxu0 %v2275
    %3288 = vmatpush1.msra.mxu0 %v2274
    %3289 = vmatprep.subr.mxu0 %v2279
    %3290 = vmatpush1.msra.mxu0 %v2278
    %3291 = vmatprep.subr.mxu0 %v2283
    %3292 = vmatpush1.msra.mxu0 %v2282
    %3293 = vmatprep.subr.mxu0 %v2287
    %3294 = vmatpush1.msra.mxu0 %v2286
    %3295 = vmatprep.subr.mxu0 %v2291
    %3296 = vmatpush1.msra.mxu0 %v2290
    %3297 = vmatprep.subr.mxu0 %v2295
    %3298 = vmatpush1.msra.mxu0 %v2294
    %3299 = vmatprep.subr.mxu0 %v2299
    %3300 = vmatpush1.msra.mxu0 %v2298
    %3301 = vmatprep.subr.mxu0 %v2303
    %3302 = vmatpush1.msra.mxu0 %v2302
    %3303 = vmatprep.subr.mxu0 %v2307
    %3304 = vmatpush1.msra.mxu0 %v2306
    %3305 = vmatprep.subr.mxu0 0.0
    %3306 = vmatpush1.msra.mxu0 0.0
    %3307 = vmatprep.subr.mxu0 0.0
    %3308 = vmatpush1.msra.mxu0 0.0
    %3309 = vmatprep.subr.mxu0 0.0
    %3310 = vmatpush1.msra.mxu0 0.0
    %3311 = vmatprep.subr.mxu0 0.0
    %3312 = vmatpush1.msra.mxu0 0.0
    %3313 = vmatprep.subr.mxu0 0.0
    %3314 = vmatpush1.msra.mxu0 0.0
    %3315 = vmatprep.subr.mxu0 0.0
    %3316 = vmatpush1.msra.mxu0 0.0
    %3317 = vmatprep.subr.mxu0 0.0
    %3318 = vmatpush1.msra.mxu0 0.0
    %3319 = vmatprep.subr.mxu0 0.0
    %3320 = vmatpush1.msra.mxu0 0.0
    %3321 = vmatprep.subr.mxu0 0.0
    %3322 = vmatpush1.msra.mxu0 0.0
    %3323 = vmatprep.subr.mxu0 0.0
    %3324 = vmatpush1.msra.mxu0 0.0
    %3325 = vmatprep.subr.mxu0 0.0
    %3326 = vmatpush1.msra.mxu0 0.0
    %3327 = vmatprep.subr.mxu0 0.0
    %3328 = vmatpush1.msra.mxu0 0.0
    %3329 = vmatprep.subr.mxu0 0.0
    %3330 = vmatpush1.msra.mxu0 0.0
    %3331 = vmatprep.subr.mxu0 0.0
    %3332 = vmatpush1.msra.mxu0 0.0
    %3333 = vmatprep.subr.mxu0 0.0
    %3334 = vmatpush1.msra.mxu0 0.0
    %3335 = vmatprep.subr.mxu0 0.0
    %3336 = vmatpush1.msra.mxu0 0.0
    %3337 = vmatprep.mubr.f32.mxu0 0.0
    %3338 = vmatmul.mubr.f32.gmra.mrb[0].mxu0 %v3260
    %v3339 = vpop.f32.mrb[0].mxu0
    %v3340 = vadd.f32 0.0, %v3339
    %v3341 = vpop.f32.mrb[0].mxu0
    %v3342 = vadd.f32 0.0, %v3341
    %3343 = vdwg.mxu0
    %3344 = vmatprep.subr.mxu0 %v2249
    %3345 = vmatpush1.msra.mxu0 %v2248
    %3346 = vmatprep.subr.mxu0 %v2253
    %3347 = vmatpush1.msra.mxu0 %v2252
    %3348 = vmatprep.subr.mxu0 %v2257
    %3349 = vmatpush1.msra.mxu0 %v2256
    %3350 = vmatprep.subr.mxu0 %v2261
    %3351 = vmatpush1.msra.mxu0 %v2260
    %3352 = vmatprep.subr.mxu0 %v2265
    %3353 = vmatpush1.msra.mxu0 %v2264
    %3354 = vmatprep.subr.mxu0 %v2269
    %3355 = vmatpush1.msra.mxu0 %v2268
    %3356 = vmatprep.subr.mxu0 %v2273
    %3357 = vmatpush1.msra.mxu0 %v2272
    %3358 = vmatprep.subr.mxu0 %v2277
    %3359 = vmatpush1.msra.mxu0 %v2276
    %3360 = vmatprep.subr.mxu0 %v2281
    %3361 = vmatpush1.msra.mxu0 %v2280
    %3362 = vmatprep.subr.mxu0 %v2285
    %3363 = vmatpush1.msra.mxu0 %v2284
    %3364 = vmatprep.subr.mxu0 %v2289
    %3365 = vmatpush1.msra.mxu0 %v2288
    %3366 = vmatprep.subr.mxu0 %v2293
    %3367 = vmatpush1.msra.mxu0 %v2292
    %3368 = vmatprep.subr.mxu0 %v2297
    %3369 = vmatpush1.msra.mxu0 %v2296
    %3370 = vmatprep.subr.mxu0 %v2301
    %3371 = vmatpush1.msra.mxu0 %v2300
    %3372 = vmatprep.subr.mxu0 %v2305
    %3373 = vmatpush1.msra.mxu0 %v2304
    %3374 = vmatprep.subr.mxu0 %v2309
    %3375 = vmatpush1.msra.mxu0 %v2308
    %3376 = vmatprep.subr.mxu0 0.0
    %3377 = vmatpush1.msra.mxu0 0.0
    %3378 = vmatprep.subr.mxu0 0.0
    %3379 = vmatpush1.msra.mxu0 0.0
    %3380 = vmatprep.subr.mxu0 0.0
    %3381 = vmatpush1.msra.mxu0 0.0
    %3382 = vmatprep.subr.mxu0 0.0
    %3383 = vmatpush1.msra.mxu0 0.0
    %3384 = vmatprep.subr.mxu0 0.0
    %3385 = vmatpush1.msra.mxu0 0.0
    %3386 = vmatprep.subr.mxu0 0.0
    %3387 = vmatpush1.msra.mxu0 0.0
    %3388 = vmatprep.subr.mxu0 0.0
    %3389 = vmatpush1.msra.mxu0 0.0
    %3390 = vmatprep.subr.mxu0 0.0
    %3391 = vmatpush1.msra.mxu0 0.0
    %3392 = vmatprep.subr.mxu0 0.0
    %3393 = vmatpush1.msra.mxu0 0.0
    %3394 = vmatprep.subr.mxu0 0.0
    %3395 = vmatpush1.msra.mxu0 0.0
    %3396 = vmatprep.subr.mxu0 0.0
    %3397 = vmatpush1.msra.mxu0 0.0
    %3398 = vmatprep.subr.mxu0 0.0
    %3399 = vmatpush1.msra.mxu0 0.0
    %3400 = vmatprep.subr.mxu0 0.0
    %3401 = vmatpush1.msra.mxu0 0.0
    %3402 = vmatprep.subr.mxu0 0.0
    %3403 = vmatpush1.msra.mxu0 0.0
    %3404 = vmatprep.subr.mxu0 0.0
    %3405 = vmatpush1.msra.mxu0 0.0
    %3406 = vmatprep.subr.mxu0 0.0
    %3407 = vmatpush1.msra.mxu0 0.0
    %3408 = vmatprep.mubr.f32.mxu0 0.0
    %3409 = vmatmul.mubr.f32.gmra.mrb[0].mxu0 %v3260
    %v3410 = vpop.f32.mrb[0].mxu0
    %v3411 = vadd.f32 0.0, %v3410
    %v3412 = vpop.f32.mrb[0].mxu0
    %v3413 = vadd.f32 0.0, %v3412
    %3414 = vdwg.mxu0
    %v3419 = vrot.slane %v3340, 6
    %v3420 = vrot.slane %v3342, 6
    %v3421 = vrot.slane %v3411, 6
    %v3422 = vrot.slane %v3413, 6
    %v3427 = vadd.f32 %v3269, %v3419
    %v3428 = vadd.f32 %v3270, %v3420
    %v3429 = vadd.f32 %v3271, %v3421
    %v3430 = vadd.f32 %v3272, %v3422
    %v3431 = vxor.u32 %v3427, 2147483648
    %v3432 = vxor.u32 %v3428, 2147483648
    %v3433 = vxor.u32 %v3429, 2147483648
    %v3434 = vmul.f32 %v3431, 1.442695
    %v3435 = vpow.pop %v3434
    %v3436 = vmul.f32 %v3432, 1.442695
    %v3437 = vpow.pop %v3436
    %v3438 = vmul.f32 %v3433, 1.442695
    %v3439 = vpow.pop %v3438
    %v3440 = vadd.f32 %v3435, 1.0
    %v3441 = vadd.f32 %v3437, 1.0
    %v3442 = vadd.f32 %v3439, 1.0
    %v3443 = vrcp.pop %v3440
    %v3444 = vmul.f32 1.0, %v3443
    %v3445 = vrcp.pop %v3441
    %v3446 = vmul.f32 1.0, %v3445
    %v3447 = vrcp.pop %v3442
    %v3448 = vmul.f32 1.0, %v3447
    %v3449 = vtanh.pop %v3430
    %v3451 = vrot.slane %v3258, 6
    %v3453 = vmul.f32 %v3446, %v3451
    %v3454 = vmul.f32 %v3444, %v3449
    %v3455 = vadd.f32 %v3453, %v3454
    %v3456 = vtanh.pop %v3455
    %v3457 = vmul.f32 %v3448, %v3456
    %v3459 = vrot.slane %v3457, 2
    %3461 = vmatprep.subr.mxu0 %v2247
    %3462 = vmatpush1.msra.mxu0 %v2246
    %3463 = vmatprep.subr.mxu0 %v2251
    %3464 = vmatpush1.msra.mxu0 %v2250
    %3465 = vmatprep.subr.mxu0 %v2255
    %3466 = vmatpush1.msra.mxu0 %v2254
    %3467 = vmatprep.subr.mxu0 %v2259
    %3468 = vmatpush1.msra.mxu0 %v2258
    %3469 = vmatprep.subr.mxu0 %v2263
    %3470 = vmatpush1.msra.mxu0 %v2262
    %3471 = vmatprep.subr.mxu0 %v2267
    %3472 = vmatpush1.msra.mxu0 %v2266
    %3473 = vmatprep.subr.mxu0 %v2271
    %3474 = vmatpush1.msra.mxu0 %v2270
    %3475 = vmatprep.subr.mxu0 %v2275
    %3476 = vmatpush1.msra.mxu0 %v2274
    %3477 = vmatprep.subr.mxu0 %v2279
    %3478 = vmatpush1.msra.mxu0 %v2278
    %3479 = vmatprep.subr.mxu0 %v2283
    %3480 = vmatpush1.msra.mxu0 %v2282
    %3481 = vmatprep.subr.mxu0 %v2287
    %3482 = vmatpush1.msra.mxu0 %v2286
    %3483 = vmatprep.subr.mxu0 %v2291
    %3484 = vmatpush1.msra.mxu0 %v2290
    %3485 = vmatprep.subr.mxu0 %v2295
    %3486 = vmatpush1.msra.mxu0 %v2294
    %3487 = vmatprep.subr.mxu0 %v2299
    %3488 = vmatpush1.msra.mxu0 %v2298
    %3489 = vmatprep.subr.mxu0 %v2303
    %3490 = vmatpush1.msra.mxu0 %v2302
    %3491 = vmatprep.subr.mxu0 %v2307
    %3492 = vmatpush1.msra.mxu0 %v2306
    %3493 = vmatprep.subr.mxu0 0.0
    %3494 = vmatpush1.msra.mxu0 0.0
    %3495 = vmatprep.subr.mxu0 0.0
    %3496 = vmatpush1.msra.mxu0 0.0
    %3497 = vmatprep.subr.mxu0 0.0
    %3498 = vmatpush1.msra.mxu0 0.0
    %3499 = vmatprep.subr.mxu0 0.0
    %3500 = vmatpush1.msra.mxu0 0.0
    %3501 = vmatprep.subr.mxu0 0.0
    %3502 = vmatpush1.msra.mxu0 0.0
    %3503 = vmatprep.subr.mxu0 0.0
    %3504 = vmatpush1.msra.mxu0 0.0
    %3505 = vmatprep.subr.mxu0 0.0
    %3506 = vmatpush1.msra.mxu0 0.0
    %3507 = vmatprep.subr.mxu0 0.0
    %3508 = vmatpush1.msra.mxu0 0.0
    %3509 = vmatprep.subr.mxu0 0.0
    %3510 = vmatpush1.msra.mxu0 0.0
    %3511 = vmatprep.subr.mxu0 0.0
    %3512 = vmatpush1.msra.mxu0 0.0
    %3513 = vmatprep.subr.mxu0 0.0
    %3514 = vmatpush1.msra.mxu0 0.0
    %3515 = vmatprep.subr.mxu0 0.0
    %3516 = vmatpush1.msra.mxu0 0.0
    %3517 = vmatprep.subr.mxu0 0.0
    %3518 = vmatpush1.msra.mxu0 0.0
    %3519 = vmatprep.subr.mxu0 0.0
    %3520 = vmatpush1.msra.mxu0 0.0
    %3521 = vmatprep.subr.mxu0 0.0
    %3522 = vmatpush1.msra.mxu0 0.0
    %3523 = vmatprep.subr.mxu0 0.0
    %3524 = vmatpush1.msra.mxu0 0.0
    %3525 = vmatprep.mubr.f32.mxu0 0.0
    %3526 = vmatmul.mubr.f32.gmra.mrb[0].mxu0 %v3459
    %v3527 = vpop.f32.mrb[0].mxu0
    %v3528 = vadd.f32 0.0, %v3527
    %v3529 = vpop.f32.mrb[0].mxu0
    %v3530 = vadd.f32 0.0, %v3529
    %3531 = vdwg.mxu0
    %3532 = vmatprep.subr.mxu0 %v2249
    %3533 = vmatpush1.msra.mxu0 %v2248
    %3534 = vmatprep.subr.mxu0 %v2253
    %3535 = vmatpush1.msra.mxu0 %v2252
    %3536 = vmatprep.subr.mxu0 %v2257
    %3537 = vmatpush1.msra.mxu0 %v2256
    %3538 = vmatprep.subr.mxu0 %v2261
    %3539 = vmatpush1.msra.mxu0 %v2260
    %3540 = vmatprep.subr.mxu0 %v2265
    %3541 = vmatpush1.msra.mxu0 %v2264
    %3542 = vmatprep.subr.mxu0 %v2269
    %3543 = vmatpush1.msra.mxu0 %v2268
    %3544 = vmatprep.subr.mxu0 %v2273
    %3545 = vmatpush1.msra.mxu0 %v2272
    %3546 = vmatprep.subr.mxu0 %v2277
    %3547 = vmatpush1.msra.mxu0 %v2276
    %3548 = vmatprep.subr.mxu0 %v2281
    %3549 = vmatpush1.msra.mxu0 %v2280
    %3550 = vmatprep.subr.mxu0 %v2285
    %3551 = vmatpush1.msra.mxu0 %v2284
    %3552 = vmatprep.subr.mxu0 %v2289
    %3553 = vmatpush1.msra.mxu0 %v2288
    %3554 = vmatprep.subr.mxu0 %v2293
    %3555 = vmatpush1.msra.mxu0 %v2292
    %3556 = vmatprep.subr.mxu0 %v2297
    %3557 = vmatpush1.msra.mxu0 %v2296
    %3558 = vmatprep.subr.mxu0 %v2301
    %3559 = vmatpush1.msra.mxu0 %v2300
    %3560 = vmatprep.subr.mxu0 %v2305
    %3561 = vmatpush1.msra.mxu0 %v2304
    %3562 = vmatprep.subr.mxu0 %v2309
    %3563 = vmatpush1.msra.mxu0 %v2308
    %3564 = vmatprep.subr.mxu0 0.0
    %3565 = vmatpush1.msra.mxu0 0.0
    %3566 = vmatprep.subr.mxu0 0.0
    %3567 = vmatpush1.msra.mxu0 0.0
    %3568 = vmatprep.subr.mxu0 0.0
    %3569 = vmatpush1.msra.mxu0 0.0
    %3570 = vmatprep.subr.mxu0 0.0
    %3571 = vmatpush1.msra.mxu0 0.0
    %3572 = vmatprep.subr.mxu0 0.0
    %3573 = vmatpush1.msra.mxu0 0.0
    %3574 = vmatprep.subr.mxu0 0.0
    %3575 = vmatpush1.msra.mxu0 0.0
    %3576 = vmatprep.subr.mxu0 0.0
    %3577 = vmatpush1.msra.mxu0 0.0
    %3578 = vmatprep.subr.mxu0 0.0
    %3579 = vmatpush1.msra.mxu0 0.0
    %3580 = vmatprep.subr.mxu0 0.0
    %3581 = vmatpush1.msra.mxu0 0.0
    %3582 = vmatprep.subr.mxu0 0.0
    %3583 = vmatpush1.msra.mxu0 0.0
    %3584 = vmatprep.subr.mxu0 0.0
    %3585 = vmatpush1.msra.mxu0 0.0
    %3586 = vmatprep.subr.mxu0 0.0
    %3587 = vmatpush1.msra.mxu0 0.0
    %3588 = vmatprep.subr.mxu0 0.0
    %3589 = vmatpush1.msra.mxu0 0.0
    %3590 = vmatprep.subr.mxu0 0.0
    %3591 = vmatpush1.msra.mxu0 0.0
    %3592 = vmatprep.subr.mxu0 0.0
    %3593 = vmatpush1.msra.mxu0 0.0
    %3594 = vmatprep.subr.mxu0 0.0
    %3595 = vmatpush1.msra.mxu0 0.0
    %3596 = vmatprep.mubr.f32.mxu0 0.0
    %3597 = vmatmul.mubr.f32.gmra.mrb[0].mxu0 %v3459
    %v3598 = vpop.f32.mrb[0].mxu0
    %v3599 = vadd.f32 0.0, %v3598
    %v3600 = vpop.f32.mrb[0].mxu0
    %v3601 = vadd.f32 0.0, %v3600
    %3602 = vdwg.mxu0
    %v3607 = vrot.slane %v3528, 4
    %v3608 = vrot.slane %v3530, 4
    %v3609 = vrot.slane %v3599, 4
    %v3610 = vrot.slane %v3601, 4
    %v3615 = vadd.f32 %v3081, %v3607
    %v3616 = vadd.f32 %v3082, %v3608
    %v3617 = vadd.f32 %v3083, %v3609
    %v3618 = vadd.f32 %v3084, %v3610
    %v3619 = vxor.u32 %v3615, 2147483648
    %v3620 = vxor.u32 %v3616, 2147483648
    %v3621 = vxor.u32 %v3617, 2147483648
    %v3622 = vmul.f32 %v3619, 1.442695
    %v3623 = vpow.pop %v3622
    %v3624 = vmul.f32 %v3620, 1.442695
    %v3625 = vpow.pop %v3624
    %v3626 = vmul.f32 %v3621, 1.442695
    %v3627 = vpow.pop %v3626
    %v3628 = vadd.f32 %v3623, 1.0
    %v3629 = vadd.f32 %v3625, 1.0
    %v3630 = vadd.f32 %v3627, 1.0
    %v3631 = vrcp.pop %v3628
    %v3632 = vmul.f32 1.0, %v3631
    %v3633 = vrcp.pop %v3629
    %v3634 = vmul.f32 1.0, %v3633
    %v3635 = vrcp.pop %v3630
    %v3636 = vmul.f32 1.0, %v3635
    %v3637 = vtanh.pop %v3618
    %v3639 = vrot.slane %v3455, 6
    %v3641 = vmul.f32 %v3634, %v3639
    %v3642 = vmul.f32 %v3632, %v3637
    %v3643 = vadd.f32 %v3641, %v3642
    %v3644 = vtanh.pop %v3643
    %v3645 = vmul.f32 %v3636, %v3644
    %v3647 = vrot.slane %v3645, 4
    %3649 = vmatprep.subr.mxu0 %v2247
    %3650 = vmatpush1.msra.mxu0 %v2246
    %3651 = vmatprep.subr.mxu0 %v2251
    %3652 = vmatpush1.msra.mxu0 %v2250
    %3653 = vmatprep.subr.mxu0 %v2255
    %3654 = vmatpush1.msra.mxu0 %v2254
    %3655 = vmatprep.subr.mxu0 %v2259
    %3656 = vmatpush1.msra.mxu0 %v2258
    %3657 = vmatprep.subr.mxu0 %v2263
    %3658 = vmatpush1.msra.mxu0 %v2262
    %3659 = vmatprep.subr.mxu0 %v2267
    %3660 = vmatpush1.msra.mxu0 %v2266
    %3661 = vmatprep.subr.mxu0 %v2271
    %3662 = vmatpush1.msra.mxu0 %v2270
    %3663 = vmatprep.subr.mxu0 %v2275
    %3664 = vmatpush1.msra.mxu0 %v2274
    %3665 = vmatprep.subr.mxu0 %v2279
    %3666 = vmatpush1.msra.mxu0 %v2278
    %3667 = vmatprep.subr.mxu0 %v2283
    %3668 = vmatpush1.msra.mxu0 %v2282
    %3669 = vmatprep.subr.mxu0 %v2287
    %3670 = vmatpush1.msra.mxu0 %v2286
    %3671 = vmatprep.subr.mxu0 %v2291
    %3672 = vmatpush1.msra.mxu0 %v2290
    %3673 = vmatprep.subr.mxu0 %v2295
    %3674 = vmatpush1.msra.mxu0 %v2294
    %3675 = vmatprep.subr.mxu0 %v2299
    %3676 = vmatpush1.msra.mxu0 %v2298
    %3677 = vmatprep.subr.mxu0 %v2303
    %3678 = vmatpush1.msra.mxu0 %v2302
    %3679 = vmatprep.subr.mxu0 %v2307
    %3680 = vmatpush1.msra.mxu0 %v2306
    %3681 = vmatprep.subr.mxu0 0.0
    %3682 = vmatpush1.msra.mxu0 0.0
    %3683 = vmatprep.subr.mxu0 0.0
    %3684 = vmatpush1.msra.mxu0 0.0
    %3685 = vmatprep.subr.mxu0 0.0
    %3686 = vmatpush1.msra.mxu0 0.0
    %3687 = vmatprep.subr.mxu0 0.0
    %3688 = vmatpush1.msra.mxu0 0.0
    %3689 = vmatprep.subr.mxu0 0.0
    %3690 = vmatpush1.msra.mxu0 0.0
    %3691 = vmatprep.subr.mxu0 0.0
    %3692 = vmatpush1.msra.mxu0 0.0
    %3693 = vmatprep.subr.mxu0 0.0
    %3694 = vmatpush1.msra.mxu0 0.0
    %3695 = vmatprep.subr.mxu0 0.0
    %3696 = vmatpush1.msra.mxu0 0.0
    %3697 = vmatprep.subr.mxu0 0.0
    %3698 = vmatpush1.msra.mxu0 0.0
    %3699 = vmatprep.subr.mxu0 0.0
    %3700 = vmatpush1.msra.mxu0 0.0
    %3701 = vmatprep.subr.mxu0 0.0
    %3702 = vmatpush1.msra.mxu0 0.0
    %3703 = vmatprep.subr.mxu0 0.0
    %3704 = vmatpush1.msra.mxu0 0.0
    %3705 = vmatprep.subr.mxu0 0.0
    %3706 = vmatpush1.msra.mxu0 0.0
    %3707 = vmatprep.subr.mxu0 0.0
    %3708 = vmatpush1.msra.mxu0 0.0
    %3709 = vmatprep.subr.mxu0 0.0
    %3710 = vmatpush1.msra.mxu0 0.0
    %3711 = vmatprep.subr.mxu0 0.0
    %3712 = vmatpush1.msra.mxu0 0.0
    %3713 = vmatprep.mubr.f32.mxu0 0.0
    %3714 = vmatmul.mubr.f32.gmra.mrb[0].mxu0 %v3647
    %v3715 = vpop.f32.mrb[0].mxu0
    %v3716 = vadd.f32 0.0, %v3715
    %v3717 = vpop.f32.mrb[0].mxu0
    %v3718 = vadd.f32 0.0, %v3717
    %3719 = vdwg.mxu0
    %3720 = vmatprep.subr.mxu0 %v2249
    %3721 = vmatpush1.msra.mxu0 %v2248
    %3722 = vmatprep.subr.mxu0 %v2253
    %3723 = vmatpush1.msra.mxu0 %v2252
    %3724 = vmatprep.subr.mxu0 %v2257
    %3725 = vmatpush1.msra.mxu0 %v2256
    %3726 = vmatprep.subr.mxu0 %v2261
    %3727 = vmatpush1.msra.mxu0 %v2260
    %3728 = vmatprep.subr.mxu0 %v2265
    %3729 = vmatpush1.msra.mxu0 %v2264
    %3730 = vmatprep.subr.mxu0 %v2269
    %3731 = vmatpush1.msra.mxu0 %v2268
    %3732 = vmatprep.subr.mxu0 %v2273
    %3733 = vmatpush1.msra.mxu0 %v2272
    %3734 = vmatprep.subr.mxu0 %v2277
    %3735 = vmatpush1.msra.mxu0 %v2276
    %3736 = vmatprep.subr.mxu0 %v2281
    %3737 = vmatpush1.msra.mxu0 %v2280
    %3738 = vmatprep.subr.mxu0 %v2285
    %3739 = vmatpush1.msra.mxu0 %v2284
    %3740 = vmatprep.subr.mxu0 %v2289
    %3741 = vmatpush1.msra.mxu0 %v2288
    %3742 = vmatprep.subr.mxu0 %v2293
    %3743 = vmatpush1.msra.mxu0 %v2292
    %3744 = vmatprep.subr.mxu0 %v2297
    %3745 = vmatpush1.msra.mxu0 %v2296
    %3746 = vmatprep.subr.mxu0 %v2301
    %3747 = vmatpush1.msra.mxu0 %v2300
    %3748 = vmatprep.subr.mxu0 %v2305
    %3749 = vmatpush1.msra.mxu0 %v2304
    %3750 = vmatprep.subr.mxu0 %v2309
    %3751 = vmatpush1.msra.mxu0 %v2308
    %3752 = vmatprep.subr.mxu0 0.0
    %3753 = vmatpush1.msra.mxu0 0.0
    %3754 = vmatprep.subr.mxu0 0.0
    %3755 = vmatpush1.msra.mxu0 0.0
    %3756 = vmatprep.subr.mxu0 0.0
    %3757 = vmatpush1.msra.mxu0 0.0
    %3758 = vmatprep.subr.mxu0 0.0
    %3759 = vmatpush1.msra.mxu0 0.0
    %3760 = vmatprep.subr.mxu0 0.0
    %3761 = vmatpush1.msra.mxu0 0.0
    %3762 = vmatprep.subr.mxu0 0.0
    %3763 = vmatpush1.msra.mxu0 0.0
    %3764 = vmatprep.subr.mxu0 0.0
    %3765 = vmatpush1.msra.mxu0 0.0
    %3766 = vmatprep.subr.mxu0 0.0
    %3767 = vmatpush1.msra.mxu0 0.0
    %3768 = vmatprep.subr.mxu0 0.0
    %3769 = vmatpush1.msra.mxu0 0.0
    %3770 = vmatprep.subr.mxu0 0.0
    %3771 = vmatpush1.msra.mxu0 0.0
    %3772 = vmatprep.subr.mxu0 0.0
    %3773 = vmatpush1.msra.mxu0 0.0
    %3774 = vmatprep.subr.mxu0 0.0
    %3775 = vmatpush1.msra.mxu0 0.0
    %3776 = vmatprep.subr.mxu0 0.0
    %3777 = vmatpush1.msra.mxu0 0.0
    %3778 = vmatprep.subr.mxu0 0.0
    %3779 = vmatpush1.msra.mxu0 0.0
    %3780 = vmatprep.subr.mxu0 0.0
    %3781 = vmatpush1.msra.mxu0 0.0
    %3782 = vmatprep.subr.mxu0 0.0
    %3783 = vmatpush1.msra.mxu0 0.0
    %3784 = vmatprep.mubr.f32.mxu0 0.0
    %3785 = vmatmul.mubr.f32.gmra.mrb[0].mxu0 %v3647
    %v3786 = vpop.f32.mrb[0].mxu0
    %v3787 = vadd.f32 0.0, %v3786
    %v3788 = vpop.f32.mrb[0].mxu0
    %v3789 = vadd.f32 0.0, %v3788
    %3790 = vdwg.mxu0
    %v3795 = vrot.slane %v3716, 2
    %v3796 = vrot.slane %v3718, 2
    %v3797 = vrot.slane %v3787, 2
    %v3798 = vrot.slane %v3789, 2
    %v3803 = vadd.f32 %v3269, %v3795
    %v3804 = vadd.f32 %v3270, %v3796
    %v3805 = vadd.f32 %v3271, %v3797
    %v3806 = vadd.f32 %v3272, %v3798
    %v3807 = vxor.u32 %v3803, 2147483648
    %v3808 = vxor.u32 %v3804, 2147483648
    %v3809 = vxor.u32 %v3805, 2147483648
    %v3810 = vmul.f32 %v3807, 1.442695
    %v3811 = vpow.pop %v3810
    %v3812 = vmul.f32 %v3808, 1.442695
    %v3813 = vpow.pop %v3812
    %v3814 = vmul.f32 %v3809, 1.442695
    %v3815 = vpow.pop %v3814
    %v3816 = vadd.f32 %v3811, 1.0
    %v3817 = vadd.f32 %v3813, 1.0
    %v3818 = vadd.f32 %v3815, 1.0
    %v3819 = vrcp.pop %v3816
    %v3820 = vmul.f32 1.0, %v3819
    %v3821 = vrcp.pop %v3817
    %v3822 = vmul.f32 1.0, %v3821
    %v3823 = vrcp.pop %v3818
    %v3824 = vmul.f32 1.0, %v3823
    %v3825 = vtanh.pop %v3806
    %v3827 = vrot.slane %v3643, 6
    %v3829 = vmul.f32 %v3822, %v3827
    %v3830 = vmul.f32 %v3820, %v3825
    %v3831 = vadd.f32 %v3829, %v3830
    %v3832 = vtanh.pop %v3831
    %v3833 = vmul.f32 %v3824, %v3832
    %v3835 = vrot.slane %v3833, 6
    %v3837 = vsel %vm178, %v2495, %v3835
    %v3838 = vrot.slane %v3645, 2
    %v3840 = vsel %vm178, %v2692, %v3838
    %v3841 = vrot.slane %v3457, 6
    %v3843 = vsel %vm178, %v2880, %v3841
    %v3845 = vrot.slane %v3260, 2
    %v3847 = vsel %vm178, %v3068, %v3845
    %v3848 = vsel %vm178, %v3260, %v3086
    %v3849 = vrot.slane %v2880, 2
    %v3851 = vsel %vm178, %v3457, %v3849
    %v3852 = vrot.slane %v2692, 6
    %v3854 = vsel %vm178, %v3645, %v3852
    %v3856 = vrot.slane %v2495, 2
    %v3858 = vsel %vm178, %v3833, %v3856
    %v3859 = vld [vmem:[%s7] sm:$0x1]
    %v3860 = vld [vmem:[#allocation2] sm:$0x1]
    %v3862 = vlaneseq
    %v3863 = vshrl.u32 %v3862, 7
    %v3864 = vsub.s32 0, %v3863
    %v3865 = vrot.slane %v3859, %v3864
    %v3867 = vmul.f32 %v3837, %v3865
    %v3868 = vsel %vm1997, %v3867, 0.0
    %3869 = vadd.xlane.f32.xlu0 %v3868
    %v3870 = vpop.xlane.xlu0 %3869
    %v3872 = vlaneseq
    %v3873 = vshrl.u32 %v3872, 7
    %v3874 = vsub.s32 0, %v3873
    %v3875 = vrot.slane %v3860, %v3874
    %v3877 = vadd.f32 %v3870, %v3875
    %v3878 = vmul.f32 %v3840, %v3865
    %vm3879 = vcmask 1043458
    %v3880 = vsel %vm3879, %v3878, 0.0
    %3881 = vadd.xlane.f32.xlu0 %v3880
    %v3882 = vpop.xlane.xlu0 %3881
    %v3883 = vadd.f32 %v3882, %v3875
    %v3884 = vmul.f32 %v3843, %v3865
    %vm3885 = vcmask 1045508
    %v3886 = vsel %vm3885, %v3884, 0.0
    %3887 = vadd.xlane.f32.xlu0 %v3886
    %v3888 = vpop.xlane.xlu0 %3887
    %v3889 = vadd.f32 %v3888, %v3875
    %v3890 = vmul.f32 %v3847, %v3865
    %vm3891 = vcmask 1047558
    %v3892 = vsel %vm3891, %v3890, 0.0
    %3893 = vadd.xlane.f32.xlu0 %v3892
    %v3894 = vpop.xlane.xlu0 %3893
    %v3895 = vadd.f32 %v3894, %v3875
    %v3896 = vmul.f32 %v3848, %v3865
    %v3897 = vsel %vm1997, %v3896, 0.0
    %3898 = vadd.xlane.f32.xlu0 %v3897
    %v3899 = vpop.xlane.xlu0 %3898
    %v3900 = vadd.f32 %v3899, %v3875
    %v3901 = vmul.f32 %v3851, %v3865
    %v3902 = vsel %vm3879, %v3901, 0.0
    %3903 = vadd.xlane.f32.xlu0 %v3902
    %v3904 = vpop.xlane.xlu0 %3903
    %v3905 = vadd.f32 %v3904, %v3875
    %v3906 = vmul.f32 %v3854, %v3865
    %v3907 = vsel %vm3885, %v3906, 0.0
    %3908 = vadd.xlane.f32.xlu0 %v3907
    %v3909 = vpop.xlane.xlu0 %3908
    %v3910 = vadd.f32 %v3909, %v3875
    %v3911 = vmul.f32 %v3858, %v3865
    %v3912 = vsel %vm3891, %v3911, 0.0
    %3913 = vadd.xlane.f32.xlu0 %v3912
    %v3914 = vpop.xlane.xlu0 %3913
    %v3915 = vadd.f32 %v3914, %v3875
    %v3917 = vrot.slane %v3883, 2
    %v3919 = vmax.f32 %v3877, %v3917
    %v3921 = vrot.slane %v3889, 4
    %v3923 = vmax.f32 %v3919, %v3921
    %v3925 = vrot.slane %v3895, 6
    %v3927 = vmax.f32 %v3923, %v3925
    %v3928 = vmax.f32 %v3927, %v3900
    %v3930 = vrot.slane %v3905, 2
    %v3932 = vmax.f32 %v3928, %v3930
    %v3934 = vrot.slane %v3910, 4
    %v3936 = vmax.f32 %v3932, %v3934
    %v3938 = vrot.slane %v3915, 6
    %v3940 = vmax.f32 %v3936, %v3938
    %v3941 = vsub.f32 %v3877, %v3940
    %v3942 = vmul.f32 %v3941, 1.442695
    %v3943 = vpow.pop %v3942
    %v3945 = vrot.slane %v3940, 6
    %v3947 = vsub.f32 %v3883, %v3945
    %v3948 = vmul.f32 %v3947, 1.442695
    %v3949 = vpow.pop %v3948
    %v3950 = vrot.slane %v3940, 4
    %v3952 = vsub.f32 %v3889, %v3950
    %v3953 = vmul.f32 %v3952, 1.442695
    %v3954 = vpow.pop %v3953
    %v3955 = vrot.slane %v3940, 2
    %v3957 = vsub.f32 %v3895, %v3955
    %v3958 = vmul.f32 %v3957, 1.442695
    %v3959 = vpow.pop %v3958
    %v3960 = vsub.f32 %v3900, %v3940
    %v3961 = vmul.f32 %v3960, 1.442695
    %v3962 = vpow.pop %v3961
    %v3963 = vsub.f32 %v3905, %v3945
    %v3964 = vmul.f32 %v3963, 1.442695
    %v3965 = vpow.pop %v3964
    %v3966 = vsub.f32 %v3910, %v3950
    %v3967 = vmul.f32 %v3966, 1.442695
    %v3968 = vpow.pop %v3967
    %v3969 = vsub.f32 %v3915, %v3955
    %v3970 = vmul.f32 %v3969, 1.442695
    %v3971 = vpow.pop %v3970
    %v3973 = vrot.slane %v3949, 2
    %v3975 = vadd.f32 %v3943, %v3973
    %v3977 = vrot.slane %v3954, 4
    %v3979 = vadd.f32 %v3975, %v3977
    %v3981 = vrot.slane %v3959, 6
    %v3983 = vadd.f32 %v3979, %v3981
    %v3984 = vadd.f32 %v3983, %v3962
    %v3986 = vrot.slane %v3965, 2
    %v3988 = vadd.f32 %v3984, %v3986
    %v3990 = vrot.slane %v3968, 4
    %v3992 = vadd.f32 %v3988, %v3990
    %v3994 = vrot.slane %v3971, 6
    %v3996 = vadd.f32 %v3992, %v3994
    %v3997 = vrcp.pop %v3996
    %v3998 = vmul.f32 %v3943, %v3997
    %4000 = vset.pattern.permute.xlu0 0
    %4001 = vperm.xlu0 %4000, %v3998
    %v4002 = vpop.permute.xlu0 %4001
    %v4004 = vmul.f32 %v4002, %v3837
    %v4006 = vrot.slane %v3997, 6
    %v4008 = vmul.f32 %v3949, %v4006
    %4010 = vset.pattern.permute.xlu0 0
    %4011 = vperm.xlu0 %4010, %v4008
    %v4012 = vpop.permute.xlu0 %4011
    %v4014 = vmul.f32 %v4012, %v3840
    %v4016 = vrot.slane %v4014, 2
    %v4018 = vadd.f32 %v4004, %v4016
    %v4019 = vrot.slane %v3997, 4
    %v4021 = vmul.f32 %v3954, %v4019
    %4023 = vset.pattern.permute.xlu0 0
    %4024 = vperm.xlu0 %4023, %v4021
    %v4025 = vpop.permute.xlu0 %4024
    %v4027 = vmul.f32 %v4025, %v3843
    %v4029 = vrot.slane %v4027, 4
    %v4031 = vadd.f32 %v4018, %v4029
    %v4032 = vrot.slane %v3997, 2
    %v4034 = vmul.f32 %v3959, %v4032
    %4036 = vset.pattern.permute.xlu0 0
    %4037 = vperm.xlu0 %4036, %v4034
    %v4038 = vpop.permute.xlu0 %4037
    %v4040 = vmul.f32 %v4038, %v3847
    %v4042 = vrot.slane %v4040, 6
    %v4044 = vadd.f32 %v4031, %v4042
    %v4045 = vmul.f32 %v3962, %v3997
    %4047 = vset.pattern.permute.xlu0 0
    %4048 = vperm.xlu0 %4047, %v4045
    %v4049 = vpop.permute.xlu0 %4048
    %v4051 = vmul.f32 %v4049, %v3848
    %v4052 = vadd.f32 %v4044, %v4051
    %v4053 = vmul.f32 %v3965, %v4006
    %4055 = vset.pattern.permute.xlu0 0
    %4056 = vperm.xlu0 %4055, %v4053
    %v4057 = vpop.permute.xlu0 %4056
    %v4059 = vmul.f32 %v4057, %v3851
    %v4061 = vrot.slane %v4059, 2
    %v4063 = vadd.f32 %v4052, %v4061
    %v4064 = vmul.f32 %v3968, %v4019
    %4066 = vset.pattern.permute.xlu0 0
    %4067 = vperm.xlu0 %4066, %v4064
    %v4068 = vpop.permute.xlu0 %4067
    %v4070 = vmul.f32 %v4068, %v3854
    %v4072 = vrot.slane %v4070, 4
    %v4074 = vadd.f32 %v4063, %v4072
    %v4075 = vmul.f32 %v3971, %v4032
    %4077 = vset.pattern.permute.xlu0 0
    %4078 = vperm.xlu0 %4077, %v4075
    %v4079 = vpop.permute.xlu0 %4078
    %v4081 = vmul.f32 %v4079, %v3858
    %v4083 = vrot.slane %v4081, 6
    %v4085 = vadd.f32 %v4074, %v4083
    %v4086 = vld [vmem:[#allocation9] sm:$0xff]
    %v4087 = vld [vmem:[#allocation9 + $0x8] sm:$0xff]
    %v4088 = vld [vmem:[#allocation9 + $0x10] sm:$0xff]
    %v4089 = vld [vmem:[#allocation9 + $0x18] sm:$0xff]
    %v4090 = vld [vmem:[#allocation9 + $0x20] sm:$0xff]
    %v4091 = vld [vmem:[#allocation9 + $0x28] sm:$0xff]
    %v4092 = vld [vmem:[#allocation9 + $0x30] sm:$0xff]
    %v4093 = vld [vmem:[#allocation9 + $0x38] sm:$0xff]
    %v4094 = vld [vmem:[#allocation9 + $0x40] sm:$0xff]
    %v4095 = vld [vmem:[#allocation9 + $0x48] sm:$0xff]
    %v4096 = vld [vmem:[#allocation9 + $0x50] sm:$0xff]
    %v4097 = vld [vmem:[#allocation9 + $0x58] sm:$0xff]
    %v4098 = vld [vmem:[#allocation9 + $0x60] sm:$0xff]
    %v4099 = vld [vmem:[#allocation9 + $0x68] sm:$0xff]
    %v4100 = vld [vmem:[#allocation9 + $0x70] sm:$0xff]
    %v4101 = vld [vmem:[#allocation9 + $0x78] sm:$0xff]
    %v4102 = vld [vmem:[%s10] sm:$0x1]
    %v4104 = vlaneseq
    %v4105 = vshrl.u32 %v4104, 7
    %v4106 = vsub.s32 0, %v4105
    %v4107 = vrot.slane %v4102, %v4106
    %4109 = vmatprep.subr.mxu0 0.0
    %4110 = vmatpush1.msra.mxu0 %v4086
    %4111 = vmatprep.subr.mxu0 0.0
    %4112 = vmatpush1.msra.mxu0 %v4087
    %4113 = vmatprep.subr.mxu0 0.0
    %4114 = vmatpush1.msra.mxu0 %v4088
    %4115 = vmatprep.subr.mxu0 0.0
    %4116 = vmatpush1.msra.mxu0 %v4089
    %4117 = vmatprep.subr.mxu0 0.0
    %4118 = vmatpush1.msra.mxu0 %v4090
    %4119 = vmatprep.subr.mxu0 0.0
    %4120 = vmatpush1.msra.mxu0 %v4091
    %4121 = vmatprep.subr.mxu0 0.0
    %4122 = vmatpush1.msra.mxu0 %v4092
    %4123 = vmatprep.subr.mxu0 0.0
    %4124 = vmatpush1.msra.mxu0 %v4093
    %4125 = vmatprep.subr.mxu0 0.0
    %4126 = vmatpush1.msra.mxu0 %v4094
    %4127 = vmatprep.subr.mxu0 0.0
    %4128 = vmatpush1.msra.mxu0 %v4095
    %4129 = vmatprep.subr.mxu0 0.0
    %4130 = vmatpush1.msra.mxu0 %v4096
    %4131 = vmatprep.subr.mxu0 0.0
    %4132 = vmatpush1.msra.mxu0 %v4097
    %4133 = vmatprep.subr.mxu0 0.0
    %4134 = vmatpush1.msra.mxu0 %v4098
    %4135 = vmatprep.subr.mxu0 0.0
    %4136 = vmatpush1.msra.mxu0 %v4099
    %4137 = vmatprep.subr.mxu0 0.0
    %4138 = vmatpush1.msra.mxu0 %v4100
    %4139 = vmatprep.subr.mxu0 0.0
    %4140 = vmatpush1.msra.mxu0 %v4101
    %4141 = vmatprep.subr.mxu0 0.0
    %4142 = vmatpush1.msra.mxu0 0.0
    %4143 = vmatprep.subr.mxu0 0.0
    %4144 = vmatpush1.msra.mxu0 0.0
    %4145 = vmatprep.subr.mxu0 0.0
    %4146 = vmatpush1.msra.mxu0 0.0
    %4147 = vmatprep.subr.mxu0 0.0
    %4148 = vmatpush1.msra.mxu0 0.0
    %4149 = vmatprep.subr.mxu0 0.0
    %4150 = vmatpush1.msra.mxu0 0.0
    %4151 = vmatprep.subr.mxu0 0.0
    %4152 = vmatpush1.msra.mxu0 0.0
    %4153 = vmatprep.subr.mxu0 0.0
    %4154 = vmatpush1.msra.mxu0 0.0
    %4155 = vmatprep.subr.mxu0 0.0
    %4156 = vmatpush1.msra.mxu0 0.0
    %4157 = vmatprep.subr.mxu0 0.0
    %4158 = vmatpush1.msra.mxu0 0.0
    %4159 = vmatprep.subr.mxu0 0.0
    %4160 = vmatpush1.msra.mxu0 0.0
    %4161 = vmatprep.subr.mxu0 0.0
    %4162 = vmatpush1.msra.mxu0 0.0
    %4163 = vmatprep.subr.mxu0 0.0
    %4164 = vmatpush1.msra.mxu0 0.0
    %4165 = vmatprep.subr.mxu0 0.0
    %4166 = vmatpush1.msra.mxu0 0.0
    %4167 = vmatprep.subr.mxu0 0.0
    %4168 = vmatpush1.msra.mxu0 0.0
    %4169 = vmatprep.subr.mxu0 0.0
    %4170 = vmatpush1.msra.mxu0 0.0
    %4171 = vmatprep.subr.mxu0 0.0
    %4172 = vmatpush1.msra.mxu0 0.0
    %4173 = vmatprep.mubr.f32.mxu0 0.0
    %4174 = vmatmul.mubr.f32.gmra.mrb[0].mxu0 %v4085
    %v4175 = vpop.f32.mrb[0].mxu0
    %v4176 = vadd.f32 %v4107, %v4175
    %v4177 = vpop.f32.mrb[0].mxu0
    %4178 = vdwg.mxu0
    %vm4179 = vcmp.gt.f32.partialorder %v4176, 0.0
    %v4180 = vmul.f32 %v4176, 0.01
    %v4181 = vsel %vm4179, %v4176, %v4180
    %v4182 = vld [vmem:[#allocation11] sm:$0xff]
    %v4183 = vld [vmem:[#allocation11 + $0x8] sm:$0xff]
    %v4184 = vld [vmem:[#allocation11 + $0x10] sm:$0xff]
    %v4185 = vld [vmem:[#allocation11 + $0x18] sm:$0xff]
    %v4186 = vld [vmem:[#allocation11 + $0x20] sm:$0xff]
    %v4187 = vld [vmem:[#allocation11 + $0x28] sm:$0xff]
    %v4188 = vld [vmem:[#allocation11 + $0x30] sm:$0xff]
    %v4189 = vld [vmem:[#allocation11 + $0x38] sm:$0xff]
    %v4190 = vld [vmem:[#allocation11 + $0x40] sm:$0xff]
    %v4191 = vld [vmem:[#allocation11 + $0x48] sm:$0xff]
    %v4192 = vld [vmem:[#allocation11 + $0x50] sm:$0xff]
    %v4193 = vld [vmem:[#allocation11 + $0x58] sm:$0xff]
    %v4194 = vld [vmem:[#allocation11 + $0x60] sm:$0xff]
    %v4195 = vld [vmem:[#allocation11 + $0x68] sm:$0xff]
    %v4196 = vld [vmem:[#allocation11 + $0x70] sm:$0xff]
    %v4197 = vld [vmem:[#allocation11 + $0x78] sm:$0xff]
    %v4198 = vld [vmem:[%s12] sm:$0x1]
    %v4200 = vlaneseq
    %v4201 = vshrl.u32 %v4200, 7
    %v4202 = vsub.s32 0, %v4201
    %v4203 = vrot.slane %v4198, %v4202
    %4205 = vmatprep.subr.mxu0 0.0
    %4206 = vmatpush1.msra.mxu0 %v4182
    %4207 = vmatprep.subr.mxu0 0.0
    %4208 = vmatpush1.msra.mxu0 %v4183
    %4209 = vmatprep.subr.mxu0 0.0
    %4210 = vmatpush1.msra.mxu0 %v4184
    %4211 = vmatprep.subr.mxu0 0.0
    %4212 = vmatpush1.msra.mxu0 %v4185
    %4213 = vmatprep.subr.mxu0 0.0
    %4214 = vmatpush1.msra.mxu0 %v4186
    %4215 = vmatprep.subr.mxu0 0.0
    %4216 = vmatpush1.msra.mxu0 %v4187
    %4217 = vmatprep.subr.mxu0 0.0
    %4218 = vmatpush1.msra.mxu0 %v4188
    %4219 = vmatprep.subr.mxu0 0.0
    %4220 = vmatpush1.msra.mxu0 %v4189
    %4221 = vmatprep.subr.mxu0 0.0
    %4222 = vmatpush1.msra.mxu0 %v4190
    %4223 = vmatprep.subr.mxu0 0.0
    %4224 = vmatpush1.msra.mxu0 %v4191
    %4225 = vmatprep.subr.mxu0 0.0
    %4226 = vmatpush1.msra.mxu0 %v4192
    %4227 = vmatprep.subr.mxu0 0.0
    %4228 = vmatpush1.msra.mxu0 %v4193
    %4229 = vmatprep.subr.mxu0 0.0
    %4230 = vmatpush1.msra.mxu0 %v4194
    %4231 = vmatprep.subr.mxu0 0.0
    %4232 = vmatpush1.msra.mxu0 %v4195
    %4233 = vmatprep.subr.mxu0 0.0
    %4234 = vmatpush1.msra.mxu0 %v4196
    %4235 = vmatprep.subr.mxu0 0.0
    %4236 = vmatpush1.msra.mxu0 %v4197
    %4237 = vmatprep.subr.mxu0 0.0
    %4238 = vmatpush1.msra.mxu0 0.0
    %4239 = vmatprep.subr.mxu0 0.0
    %4240 = vmatpush1.msra.mxu0 0.0
    %4241 = vmatprep.subr.mxu0 0.0
    %4242 = vmatpush1.msra.mxu0 0.0
    %4243 = vmatprep.subr.mxu0 0.0
    %4244 = vmatpush1.msra.mxu0 0.0
    %4245 = vmatprep.subr.mxu0 0.0
    %4246 = vmatpush1.msra.mxu0 0.0
    %4247 = vmatprep.subr.mxu0 0.0
    %4248 = vmatpush1.msra.mxu0 0.0
    %4249 = vmatprep.subr.mxu0 0.0
    %4250 = vmatpush1.msra.mxu0 0.0
    %4251 = vmatprep.subr.mxu0 0.0
    %4252 = vmatpush1.msra.mxu0 0.0
    %4253 = vmatprep.subr.mxu0 0.0
    %4254 = vmatpush1.msra.mxu0 0.0
    %4255 = vmatprep.subr.mxu0 0.0
    %4256 = vmatpush1.msra.mxu0 0.0
    %4257 = vmatprep.subr.mxu0 0.0
    %4258 = vmatpush1.msra.mxu0 0.0
    %4259 = vmatprep.subr.mxu0 0.0
    %4260 = vmatpush1.msra.mxu0 0.0
    %4261 = vmatprep.subr.mxu0 0.0
    %4262 = vmatpush1.msra.mxu0 0.0
    %4263 = vmatprep.subr.mxu0 0.0
    %4264 = vmatpush1.msra.mxu0 0.0
    %4265 = vmatprep.subr.mxu0 0.0
    %4266 = vmatpush1.msra.mxu0 0.0
    %4267 = vmatprep.subr.mxu0 0.0
    %4268 = vmatpush1.msra.mxu0 0.0
    %4269 = vmatprep.mubr.f32.mxu0 0.0
    %4270 = vmatmul.mubr.f32.gmra.mrb[0].mxu0 %v4181
    %v4271 = vpop.f32.mrb[0].mxu0
    %v4272 = vadd.f32 %v4203, %v4271
    %v4273 = vpop.f32.mrb[0].mxu0
    %4274 = vdwg.mxu0
    %vm4275 = vcmp.gt.f32.partialorder %v4272, 0.0
    %v4276 = vmul.f32 %v4272, 0.01
    %v4277 = vsel %vm4275, %v4272, %v4276
    %v4278 = vld [vmem:[%s13] sm:$0xff]
    %v4279 = vld [vmem:[%s13 + $0x8] sm:$0xff]
    %v4280 = vld [vmem:[%s13 + $0x10] sm:$0xff]
    %v4281 = vld [vmem:[%s13 + $0x18] sm:$0xff]
    %v4282 = vld [vmem:[%s13 + $0x20] sm:$0xff]
    %v4283 = vld [vmem:[%s13 + $0x28] sm:$0xff]
    %v4284 = vld [vmem:[%s13 + $0x30] sm:$0xff]
    %v4285 = vld [vmem:[%s13 + $0x38] sm:$0xff]
    %v4286 = vld [vmem:[%s13 + $0x40] sm:$0xff]
    %v4287 = vld [vmem:[%s13 + $0x48] sm:$0xff]
    %v4288 = vld [vmem:[%s13 + $0x50] sm:$0xff]
    %v4289 = vld [vmem:[%s13 + $0x58] sm:$0xff]
    %v4290 = vld [vmem:[%s13 + $0x60] sm:$0xff]
    %v4291 = vld [vmem:[%s13 + $0x68] sm:$0xff]
    %v4292 = vld [vmem:[%s13 + $0x70] sm:$0xff]
    %v4293 = vld [vmem:[%s13 + $0x78] sm:$0xff]
    %v4294 = vld [vmem:[%s14] sm:$0x1]
    %v4296 = vlaneseq
    %v4297 = vshrl.u32 %v4296, 7
    %v4298 = vsub.s32 0, %v4297
    %v4299 = vrot.slane %v4294, %v4298
    %4301 = vmatprep.subr.mxu0 0.0
    %4302 = vmatpush1.msra.mxu0 %v4278
    %4303 = vmatprep.subr.mxu0 0.0
    %4304 = vmatpush1.msra.mxu0 %v4279
    %4305 = vmatprep.subr.mxu0 0.0
    %4306 = vmatpush1.msra.mxu0 %v4280
    %4307 = vmatprep.subr.mxu0 0.0
    %4308 = vmatpush1.msra.mxu0 %v4281
    %4309 = vmatprep.subr.mxu0 0.0
    %4310 = vmatpush1.msra.mxu0 %v4282
    %4311 = vmatprep.subr.mxu0 0.0
    %4312 = vmatpush1.msra.mxu0 %v4283
    %4313 = vmatprep.subr.mxu0 0.0
    %4314 = vmatpush1.msra.mxu0 %v4284
    %4315 = vmatprep.subr.mxu0 0.0
    %4316 = vmatpush1.msra.mxu0 %v4285
    %4317 = vmatprep.subr.mxu0 0.0
    %4318 = vmatpush1.msra.mxu0 %v4286
    %4319 = vmatprep.subr.mxu0 0.0
    %4320 = vmatpush1.msra.mxu0 %v4287
    %4321 = vmatprep.subr.mxu0 0.0
    %4322 = vmatpush1.msra.mxu0 %v4288
    %4323 = vmatprep.subr.mxu0 0.0
    %4324 = vmatpush1.msra.mxu0 %v4289
    %4325 = vmatprep.subr.mxu0 0.0
    %4326 = vmatpush1.msra.mxu0 %v4290
    %4327 = vmatprep.subr.mxu0 0.0
    %4328 = vmatpush1.msra.mxu0 %v4291
    %4329 = vmatprep.subr.mxu0 0.0
    %4330 = vmatpush1.msra.mxu0 %v4292
    %4331 = vmatprep.subr.mxu0 0.0
    %4332 = vmatpush1.msra.mxu0 %v4293
    %4333 = vmatprep.subr.mxu0 0.0
    %4334 = vmatpush1.msra.mxu0 0.0
    %4335 = vmatprep.subr.mxu0 0.0
    %4336 = vmatpush1.msra.mxu0 0.0
    %4337 = vmatprep.subr.mxu0 0.0
    %4338 = vmatpush1.msra.mxu0 0.0
    %4339 = vmatprep.subr.mxu0 0.0
    %4340 = vmatpush1.msra.mxu0 0.0
    %4341 = vmatprep.subr.mxu0 0.0
    %4342 = vmatpush1.msra.mxu0 0.0
    %4343 = vmatprep.subr.mxu0 0.0
    %4344 = vmatpush1.msra.mxu0 0.0
    %4345 = vmatprep.subr.mxu0 0.0
    %4346 = vmatpush1.msra.mxu0 0.0
    %4347 = vmatprep.subr.mxu0 0.0
    %4348 = vmatpush1.msra.mxu0 0.0
    %4349 = vmatprep.subr.mxu0 0.0
    %4350 = vmatpush1.msra.mxu0 0.0
    %4351 = vmatprep.subr.mxu0 0.0
    %4352 = vmatpush1.msra.mxu0 0.0
    %4353 = vmatprep.subr.mxu0 0.0
    %4354 = vmatpush1.msra.mxu0 0.0
    %4355 = vmatprep.subr.mxu0 0.0
    %4356 = vmatpush1.msra.mxu0 0.0
    %4357 = vmatprep.subr.mxu0 0.0
    %4358 = vmatpush1.msra.mxu0 0.0
    %4359 = vmatprep.subr.mxu0 0.0
    %4360 = vmatpush1.msra.mxu0 0.0
    %4361 = vmatprep.subr.mxu0 0.0
    %4362 = vmatpush1.msra.mxu0 0.0
    %4363 = vmatprep.subr.mxu0 0.0
    %4364 = vmatpush1.msra.mxu0 0.0
    %4365 = vmatprep.mubr.f32.mxu0 0.0
    %4366 = vmatmul.mubr.f32.gmra.mrb[0].mxu0 %v4277
    %v4367 = vpop.f32.mrb[0].mxu0
    %v4368 = vadd.f32 %v4299, %v4367
    %v4369 = vpop.f32.mrb[0].mxu0
    %4370 = vdwg.mxu0
    %vm4371 = vcmask 17408
    %v4372 = vsel %vm4371, %v4368, -inf
    %4373 = vmax.xlane.f32.xlu0 %v4372
    %v4374 = vpop.xlane.xlu0 %4373
    %v4375 = vsub.f32 %v4368, %v4374
    %v4376 = vmul.f32 %v4375, 1.442695
    %v4377 = vpow.pop %v4376
    %v4378 = vsel %vm4371, %v4377, 0.0
    %4379 = vadd.xlane.f32.xlu0 %v4378
    %v4380 = vpop.xlane.xlu0 %4379
    %v4381 = vrcp.pop %v4380
    %v4382 = vmul.f32 %v4377, %v4381
    %4383 = vst.msk [vmem:[#allocation12] sm:$0x3] %vm4371, %v4382
    // Predicated region
    $region82: #{forward.1} parent=1 // pred_check
      _
    $region83: #{forward.1} parent=1 // pred_check_branch
      %4385 = sbr.rel (0) target = $region85
    $region84: #{forward.1} parent=1 // pred_region
      %s4387 = ssub.s32 32, 32
      %4388 = vsyncadd [#allocation5], %s4387
      %s4390 = sshll.u32 [#allocation12], 4
      %s4391 = int_to_ptr.vmem [resolvable:$true] %s4390
      %4393 = dma.vmem_to_hbm [thread:$0]  %s4391, 32, %s15, [#allocation5]
    $region85: #{forward.1} parent=1 // pred_fallthru
      _
    // Predicated region
    $region86: #{forward.1} parent=1 // pred_check
      _
    $region87: #{forward.1} parent=1 // pred_check_branch
      %4395 = sbr.rel (0) target = $region89
    $region88: #{forward.1} parent=1 // pred_region
      %4396 = dma.done [#allocation5], 32
    $region89: #{forward.1} parent=1 // pred_fallthru
      _
    %4397 = vsyncpa [#allocation4], 1
    %4398 = vsyncpa [#allocation7], 1
    %4399 = vsyncpa [#allocation10], 1
    %4400 = vsyncpa [#allocation5], 1

</llo_original>
